<compile_context>
chip_gen: v5e
topology: v5e:2x2
jax: 0.10.0
libtpu: 0.0.40
codegen_flags: <defaults>
</compile_context>

<pallas_src>
import math
import jax
import jax.numpy as jnp
from jax import lax
from jax.experimental import pallas as pl
from jax.experimental.pallas import tpu as pltpu

GIBBS_STEPS = 20


def _dot(a, b):
    # (m,k) @ (k,n) -> (m,n)
    return lax.dot_general(a, b, (((1,), (0,)), ((), ())),
                           preferred_element_type=jnp.float32)


def _dotT(a, b):
    # (m,k) @ (n,k).T -> (m,n)
    return lax.dot_general(a, b, (((1,), (1,)), ((), ())),
                           preferred_element_type=jnp.float32)


def _dotA(a, b):
    # (k,m).T @ (k,n) -> (m,n)   (contract leading axis; also outer product for k==1)
    return lax.dot_general(a, b, (((0,), (0,)), ((), ())),
                           preferred_element_type=jnp.float32)


def _sigmoid(x):
    return 1.0 / (1.0 + jnp.exp(-x))


def _softplus(x):
    # stable log(exp(x) + 1)
    return jnp.maximum(x, 0.0) + jnp.log(1.0 + jnp.exp(-jnp.abs(x)))


def rnnrbm_kernel(visible_ref, w_ref, wuu_ref, wuv_ref, wuh_ref, wvu_ref,
                  bv_ref, bh_ref, bu_ref, u0_ref, rand_h_ref, rand_v_ref,
                  mse_ref, dw_ref, dbv_ref, dbh_ref, dwuv_ref, dwuh_ref,
                  dbu_ref, dwvu_ref, dwuu_ref,
                  all_ut_ref):
    T, V = visible_ref.shape
    H = w_ref.shape[0]
    R = wuu_ref.shape[0]
    Tm1 = T - 1

    w = w_ref[...]                     # (H, V)
    wT = jnp.transpose(w)              # (V, H) -- hoisted, loop invariant
    wuu = wuu_ref[...]
    wuv = wuv_ref[...]
    wuh = wuh_ref[...]
    wvu = wvu_ref[...]
    bv = bv_ref[...]                   # (1, V)
    bh = bh_ref[...]                   # (1, H)
    bu = bu_ref[...]                   # (1, R)
    u0 = u0_ref[...]                   # (1, R)
    visible = visible_ref[...]         # (T, V)

    # ---------- 1. sequential (cheap) RNN recurrence -------------------------
    # U[t] is the u_tm1 used at forward step t.  U[1] = u0,
    # U[t] = tanh(v_{t-1} @ wvu.T + U[t-1] @ wuu.T + bu) for t >= 2.
    # all_ut[0] = u0, all_ut[t] = U[t]  (exactly as the reference stores them).
    all_ut_ref[pl.ds(0, 1), :] = u0
    all_ut_ref[pl.ds(1, 1), :] = u0
    u_prev = u0
    for t in range(2, T):              # static unroll: T-2 tiny steps
        v_tm1 = visible[t - 1:t, :]                            # (1, V)
        u_prev = jnp.tanh(_dotT(v_tm1, wvu) + _dotT(u_prev, wuu) + bu)
        all_ut_ref[pl.ds(t, 1), :] = u_prev

    all_ut = all_ut_ref[...]           # (T, R)
    u_all = all_ut[1:T, :]             # (T-1, R)  U[1..T-1]
    u_last = all_ut[T - 1:T, :]        # (1, R)    U[T-1] (last step's u_tm1)

    # ---------- 2. batched per-timestep RBM biases ----------------------------
    BH = _dotT(u_all, wuh) + bh        # (T-1, H)  bh_t
    BV = _dotT(u_all, wuv) + bv        # (T-1, V)  bv_t

    VT = visible[1:T, :]               # (T-1, V)  v_t
    V0 = visible[0:Tm1, :]             # (T-1, V)  v_{t-1}  (Gibbs start)

    # ---------- 3. batched 20-step Gibbs sampling (fully unrolled) -------------
    v_ = V0
    for k in range(GIBBS_STEPS):
        p_h = _sigmoid(_dot(v_, wT) + BH)                       # v_to_h
        h_ = (p_h - rand_h_ref[k] > 0.0).astype(jnp.float32)    # sample_from_p
        p_v = _sigmoid(_dot(h_, w) + BV)                        # h_to_v
        v_ = (p_v - rand_v_ref[k] > 0.0).astype(jnp.float32)
    NV = v_                            # (T-1, V)  n_v for every timestep

    # ---------- 4. batched free energies & RBM gradients -----------------------
    WX_N = _dot(NV, wT)                # (T-1, H) reused for FE and tempA
    WX_V = _dot(VT, wT)                # (T-1, H) reused for FE and tempB

    fe_n = (-jnp.sum(_softplus(WX_N + bh), axis=1, keepdims=True)
            - jnp.sum(NV * bv, axis=1, keepdims=True))          # (T-1, 1)
    fe_v = (-jnp.sum(_softplus(WX_V + bh), axis=1, keepdims=True)
            - jnp.sum(VT * bv, axis=1, keepdims=True))          # (T-1, 1)
    dbv_col = fe_n - fe_v              # (T-1, 1)  dbv_t per step (scalar each)

    tempA = _sigmoid(WX_N - BH)        # (T-1, H)
    tempB = _sigmoid(WX_V - BH)        # (T-1, H)
    dbh_mat = tempA - tempB            # (T-1, H)  dbh_t rows (== all_dbht)

    dw_ref[...] = _dotA(tempA, NV) - _dotA(tempB, VT)           # (H, V)
    dbh = jnp.sum(dbh_mat, axis=0, keepdims=True)               # (1, H)
    dbh_ref[...] = dbh

    dbv_sum = jnp.sum(dbv_col, axis=0, keepdims=True)           # (1, 1)
    dbv_row = dbv_sum * jnp.ones((1, V), jnp.float32)           # scalar broadcast
    dbv_ref[...] = dbv_row

    # dwuh/dwuv are overwritten every step in the reference -> only the final
    # write (cumulative dbh/dbv outer the last u_tm1) survives.
    dwuh_ref[...] = _dotA(dbh, u_last)                          # (H, R)
    dwuv_ref[...] = _dotA(dbv_row, u_last)                      # (V, R)

    # per-step mean(|v_t - n_v|)  (name "mse" kept from the reference)
    mse_ref[...] = jnp.mean(jnp.abs(VT - NV), axis=1, keepdims=True)  # (T-1, 1)

    # ---------- 5. batched "BPTT" tail -----------------------------------------
    # Reference loop: t = T-2 .. 1.  du_tp1 is never updated (stays zero), so
    # du_t = wuh.T @ all_dbht[t] + wuv.T @ all_dbvt[t]   independently per t.
    if T > 2:
        DBH_bt = dbh_mat[1:Tm1, :]          # rows t = 1..T-2      (T-2, H)
        dbv_bt = dbv_col[1:Tm1, :]          # (T-2, 1)
        UT = all_ut[1:Tm1, :]               # all_ut[t]            (T-2, R)
        UTm1 = all_ut[0:T - 2, :]           # all_ut[t-1]          (T-2, R)
        VIS_bt = visible[1:Tm1, :]          # visible[t]           (T-2, V)

        # all_dbvt[t] is a constant (V,) row -> wuv.T @ row == scalar * colsum(wuv)
        DU = _dot(DBH_bt, wuh) + dbv_bt * jnp.sum(wuv, axis=0, keepdims=True)
        TEMP = DU * UT * (1.0 - UT)                              # (T-2, R)
        dbu_ref[...] = jnp.sum(TEMP, axis=0, keepdims=True)      # (1, R)
        dwuu_ref[...] = _dotA(TEMP, UTm1)                        # (R, R)
        dwvu_ref[...] = _dotA(TEMP, VIS_bt)                      # (R, V)
    else:
        dbu_ref[...] = jnp.zeros_like(dbu_ref)
        dwuu_ref[...] = jnp.zeros_like(dwuu_ref)
        dwvu_ref[...] = jnp.zeros_like(dwvu_ref)


def rnnrbm_forward(visible, params, key=None):
    T, V = visible.shape
    H = params["w"].shape[0]
    R = params["wuu"].shape[0]
    Tm1 = T - 1
    f32 = jnp.float32

    # Bulk-generate every uniform random the Gibbs chain will need (replaces
    # the per-call torch.rand / in-kernel TPU PRNG).
    if key is None:
        key = jax.random.PRNGKey(123)
    kh, kv = jax.random.split(key)
    rand_h = jax.random.uniform(kh, (GIBBS_STEPS, Tm1, H), dtype=f32)
    rand_v = jax.random.uniform(kv, (GIBBS_STEPS, Tm1, V), dtype=f32)

    out_shapes = (
        jax.ShapeDtypeStruct((Tm1, 1), f32),   # mse (mean-abs-error per step)
        jax.ShapeDtypeStruct((H, V), f32),     # dw
        jax.ShapeDtypeStruct((1, V), f32),     # dbv
        jax.ShapeDtypeStruct((1, H), f32),     # dbh
        jax.ShapeDtypeStruct((V, R), f32),     # dwuv
        jax.ShapeDtypeStruct((H, R), f32),     # dwuh
        jax.ShapeDtypeStruct((1, R), f32),     # dbu
        jax.ShapeDtypeStruct((R, V), f32),     # dwvu
        jax.ShapeDtypeStruct((R, R), f32),     # dwuu
    )

    vmem = pl.BlockSpec(memory_space=pltpu.MemorySpace.VMEM)

    fn = pl.pallas_call(
        rnnrbm_kernel,
        out_shape=out_shapes,
        in_specs=[vmem] * 12,
        out_specs=tuple([vmem] * 9),
        scratch_shapes=[pltpu.VMEM((T, R), f32)],   # all_ut history
    )
    outs = fn(visible,
              params["w"], params["wuu"], params["wuv"], params["wuh"],
              params["wvu"], params["bv"], params["bh"], params["bu"],
              params["u0"], rand_h, rand_v)

    mse = outs[0][:, 0]                      # per-step MAEs, like the Python list
    grad_names = ["dw", "dbv", "dbh", "dwuv", "dwuh", "dbu", "dwvu", "dwuu"]
    grads = dict(zip(grad_names, outs[1:]))
    return mse, grads


def init_params(key, visible_dim, hidden_dim, rnn_hidden_dim):
    scale = 1.0 / math.sqrt(hidden_dim)
    ks = jax.random.split(key, 5)
    f32 = jnp.float32
    return dict(
        w=(jax.random.normal(ks[0], (hidden_dim, visible_dim)) * scale).astype(f32),
        wuu=(jax.random.normal(ks[1], (rnn_hidden_dim, rnn_hidden_dim)) * scale).astype(f32),
        wuv=(jax.random.normal(ks[2], (visible_dim, rnn_hidden_dim)) * scale).astype(f32),
        wuh=(jax.random.normal(ks[3], (hidden_dim, rnn_hidden_dim)) * scale).astype(f32),
        wvu=(jax.random.normal(ks[4], (rnn_hidden_dim, visible_dim)) * scale).astype(f32),
        bv=jnp.zeros((1, visible_dim), f32),
        bh=jnp.zeros((1, hidden_dim), f32),
        bu=jnp.zeros((1, rnn_hidden_dim), f32),
        u0=jnp.zeros((1, rnn_hidden_dim), f32),
    )


if __name__ == "__main__":
    key = jax.random.PRNGKey(0)
    kp, kv, kr = jax.random.split(key, 3)

    VIS, HID, RNN, T = 8, 32, 32, 8
    params = init_params(kp, VIS, HID, RNN)
    # binary visible sequence (time_steps, visible_dim)
    visible = jax.random.bernoulli(kv, 0.5, (T, VIS)).astype(jnp.float32)

    mse, grads = rnnrbm_forward(visible, params, key=kr)
    jax.block_until_ready((mse, grads))

    assert mse.shape == (T - 1,)
    assert bool(jnp.all(jnp.isfinite(mse)))
    expected_shapes = {
        "dw": (HID, VIS), "dbv": (1, VIS), "dbh": (1, HID),
        "dwuv": (VIS, RNN), "dwuh": (HID, RNN), "dbu": (1, RNN),
        "dwvu": (RNN, VIS), "dwuu": (RNN, RNN),
    }
    for k, v in grads.items():
        assert v.shape == expected_shapes[k], (k, v.shape)
        assert bool(jnp.all(jnp.isfinite(v))), k
    print("KERNEL_OK")
</pallas_src>

<mosaic_0001>
module attributes {stable_mosaic.version = 11 : i64} {
  func.func @rnnrbm_kernel(%arg0: memref<8x8xf32, #tpu.memory_space<vmem>>, %arg1: memref<32x8xf32, #tpu.memory_space<vmem>>, %arg2: memref<32x32xf32, #tpu.memory_space<vmem>>, %arg3: memref<8x32xf32, #tpu.memory_space<vmem>>, %arg4: memref<32x32xf32, #tpu.memory_space<vmem>>, %arg5: memref<32x8xf32, #tpu.memory_space<vmem>>, %arg6: memref<1x8xf32, #tpu.memory_space<vmem>>, %arg7: memref<1x32xf32, #tpu.memory_space<vmem>>, %arg8: memref<1x32xf32, #tpu.memory_space<vmem>>, %arg9: memref<1x32xf32, #tpu.memory_space<vmem>>, %arg10: memref<20x7x32xf32, #tpu.memory_space<vmem>>, %arg11: memref<20x7x8xf32, #tpu.memory_space<vmem>>, %arg12: memref<7x1xf32, #tpu.memory_space<vmem>>, %arg13: memref<32x8xf32, #tpu.memory_space<vmem>>, %arg14: memref<1x8xf32, #tpu.memory_space<vmem>>, %arg15: memref<1x32xf32, #tpu.memory_space<vmem>>, %arg16: memref<8x32xf32, #tpu.memory_space<vmem>>, %arg17: memref<32x32xf32, #tpu.memory_space<vmem>>, %arg18: memref<1x32xf32, #tpu.memory_space<vmem>>, %arg19: memref<32x8xf32, #tpu.memory_space<vmem>>, %arg20: memref<32x32xf32, #tpu.memory_space<vmem>>, %arg21: memref<8x32xf32, #tpu.memory_space<vmem>>) attributes {dimension_semantics = [], scalar_prefetch = 0 : i64, scratch_operands = 1 : i64, tpu.core_type = #tpu.core_type<tc>} {
    %c0 = arith.constant 0 : index
    %c0_0 = arith.constant 0 : index
    %0 = vector.load %arg1[%c0, %c0_0] : memref<32x8xf32, #tpu.memory_space<vmem>>, vector<32x8xf32>
    %1 = tpu.transpose %0, [1, 0] : vector<32x8xf32> -> vector<8x32xf32>
    %c0_1 = arith.constant 0 : index
    %c0_2 = arith.constant 0 : index
    %2 = vector.load %arg2[%c0_1, %c0_2] : memref<32x32xf32, #tpu.memory_space<vmem>>, vector<32x32xf32>
    %c0_3 = arith.constant 0 : index
    %c0_4 = arith.constant 0 : index
    %3 = vector.load %arg3[%c0_3, %c0_4] : memref<8x32xf32, #tpu.memory_space<vmem>>, vector<8x32xf32>
    %c0_5 = arith.constant 0 : index
    %c0_6 = arith.constant 0 : index
    %4 = vector.load %arg4[%c0_5, %c0_6] : memref<32x32xf32, #tpu.memory_space<vmem>>, vector<32x32xf32>
    %c0_7 = arith.constant 0 : index
    %c0_8 = arith.constant 0 : index
    %5 = vector.load %arg5[%c0_7, %c0_8] : memref<32x8xf32, #tpu.memory_space<vmem>>, vector<32x8xf32>
    %c0_9 = arith.constant 0 : index
    %c0_10 = arith.constant 0 : index
    %6 = vector.load %arg6[%c0_9, %c0_10] : memref<1x8xf32, #tpu.memory_space<vmem>>, vector<1x8xf32>
    %c0_11 = arith.constant 0 : index
    %c0_12 = arith.constant 0 : index
    %7 = vector.load %arg7[%c0_11, %c0_12] : memref<1x32xf32, #tpu.memory_space<vmem>>, vector<1x32xf32>
    %c0_13 = arith.constant 0 : index
    %c0_14 = arith.constant 0 : index
    %8 = vector.load %arg8[%c0_13, %c0_14] : memref<1x32xf32, #tpu.memory_space<vmem>>, vector<1x32xf32>
    %c0_15 = arith.constant 0 : index
    %c0_16 = arith.constant 0 : index
    %9 = vector.load %arg9[%c0_15, %c0_16] : memref<1x32xf32, #tpu.memory_space<vmem>>, vector<1x32xf32>
    %c0_17 = arith.constant 0 : index
    %c0_18 = arith.constant 0 : index
    %10 = vector.load %arg0[%c0_17, %c0_18] : memref<8x8xf32, #tpu.memory_space<vmem>>, vector<8x8xf32>
    %c0_19 = arith.constant 0 : index
    %c0_20 = arith.constant 0 : index
    %11 = vector.load %arg21[%c0_19, %c0_20] : memref<8x32xf32, #tpu.memory_space<vmem>>, vector<1x32xf32>
    tpu.vector_store %arg21[%c0_19, %c0_20], %9 {strides = array<i32>} : memref<8x32xf32, #tpu.memory_space<vmem>>, vector<1x32xf32>,
    %c1 = arith.constant 1 : index
    %c0_21 = arith.constant 0 : index
    %12 = vector.load %arg21[%c1, %c0_21] : memref<8x32xf32, #tpu.memory_space<vmem>>, vector<1x32xf32>
    tpu.vector_store %arg21[%c1, %c0_21], %9 {strides = array<i32>} : memref<8x32xf32, #tpu.memory_space<vmem>>, vector<1x32xf32>,
    %13 = vector.extract_strided_slice %10 {offsets = [1, 0], sizes = [1, 8], strides = [1, 1]} : vector<8x8xf32> to vector<1x8xf32>
    %cst = arith.constant dense<0.000000e+00> : vector<1x32xf32>
    %14 = tpu.matmul %13, %5, %cst {dimension_numbers = #tpu.dot_dimension_numbers<[1], [1], [0], [0], [0, 0, 1, 0], [], []>} : vector<1x8xf32>, vector<32x8xf32>, vector<1x32xf32> -> vector<1x32xf32>
    %cst_22 = arith.constant dense<0.000000e+00> : vector<1x32xf32>
    %15 = tpu.matmul %9, %2, %cst_22 {dimension_numbers = #tpu.dot_dimension_numbers<[1], [1], [0], [0], [0, 0, 1, 0], [], []>} : vector<1x32xf32>, vector<32x32xf32>, vector<1x32xf32> -> vector<1x32xf32>
    %16 = arith.addf %14, %15 : vector<1x32xf32>
    %17 = arith.addf %16, %8 : vector<1x32xf32>
    %18 = math.tanh %17 : vector<1x32xf32>
    %c2 = arith.constant 2 : index
    %c0_23 = arith.constant 0 : index
    %19 = vector.load %arg21[%c2, %c0_23] : memref<8x32xf32, #tpu.memory_space<vmem>>, vector<1x32xf32>
    tpu.vector_store %arg21[%c2, %c0_23], %18 {strides = array<i32>} : memref<8x32xf32, #tpu.memory_space<vmem>>, vector<1x32xf32>,
    %20 = vector.extract_strided_slice %10 {offsets = [2, 0], sizes = [1, 8], strides = [1, 1]} : vector<8x8xf32> to vector<1x8xf32>
    %cst_24 = arith.constant dense<0.000000e+00> : vector<1x32xf32>
    %21 = tpu.matmul %20, %5, %cst_24 {dimension_numbers = #tpu.dot_dimension_numbers<[1], [1], [0], [0], [0, 0, 1, 0], [], []>} : vector<1x8xf32>, vector<32x8xf32>, vector<1x32xf32> -> vector<1x32xf32>
    %cst_25 = arith.constant dense<0.000000e+00> : vector<1x32xf32>
    %22 = tpu.matmul %18, %2, %cst_25 {dimension_numbers = #tpu.dot_dimension_numbers<[1], [1], [0], [0], [0, 0, 1, 0], [], []>} : vector<1x32xf32>, vector<32x32xf32>, vector<1x32xf32> -> vector<1x32xf32>
    %23 = arith.addf %21, %22 : vector<1x32xf32>
    %24 = arith.addf %23, %8 : vector<1x32xf32>
    %25 = math.tanh %24 : vector<1x32xf32>
    %c3 = arith.constant 3 : index
    %c0_26 = arith.constant 0 : index
    %26 = vector.load %arg21[%c3, %c0_26] : memref<8x32xf32, #tpu.memory_space<vmem>>, vector<1x32xf32>
    tpu.vector_store %arg21[%c3, %c0_26], %25 {strides = array<i32>} : memref<8x32xf32, #tpu.memory_space<vmem>>, vector<1x32xf32>,
    %27 = vector.extract_strided_slice %10 {offsets = [3, 0], sizes = [1, 8], strides = [1, 1]} : vector<8x8xf32> to vector<1x8xf32>
    %cst_27 = arith.constant dense<0.000000e+00> : vector<1x32xf32>
    %28 = tpu.matmul %27, %5, %cst_27 {dimension_numbers = #tpu.dot_dimension_numbers<[1], [1], [0], [0], [0, 0, 1, 0], [], []>} : vector<1x8xf32>, vector<32x8xf32>, vector<1x32xf32> -> vector<1x32xf32>
    %cst_28 = arith.constant dense<0.000000e+00> : vector<1x32xf32>
    %29 = tpu.matmul %25, %2, %cst_28 {dimension_numbers = #tpu.dot_dimension_numbers<[1], [1], [0], [0], [0, 0, 1, 0], [], []>} : vector<1x32xf32>, vector<32x32xf32>, vector<1x32xf32> -> vector<1x32xf32>
    %30 = arith.addf %28, %29 : vector<1x32xf32>
    %31 = arith.addf %30, %8 : vector<1x32xf32>
    %32 = math.tanh %31 : vector<1x32xf32>
    %c4 = arith.constant 4 : index
    %c0_29 = arith.constant 0 : index
    %33 = vector.load %arg21[%c4, %c0_29] : memref<8x32xf32, #tpu.memory_space<vmem>>, vector<1x32xf32>
    tpu.vector_store %arg21[%c4, %c0_29], %32 {strides = array<i32>} : memref<8x32xf32, #tpu.memory_space<vmem>>, vector<1x32xf32>,
    %34 = vector.extract_strided_slice %10 {offsets = [4, 0], sizes = [1, 8], strides = [1, 1]} : vector<8x8xf32> to vector<1x8xf32>
    %cst_30 = arith.constant dense<0.000000e+00> : vector<1x32xf32>
    %35 = tpu.matmul %34, %5, %cst_30 {dimension_numbers = #tpu.dot_dimension_numbers<[1], [1], [0], [0], [0, 0, 1, 0], [], []>} : vector<1x8xf32>, vector<32x8xf32>, vector<1x32xf32> -> vector<1x32xf32>
    %cst_31 = arith.constant dense<0.000000e+00> : vector<1x32xf32>
    %36 = tpu.matmul %32, %2, %cst_31 {dimension_numbers = #tpu.dot_dimension_numbers<[1], [1], [0], [0], [0, 0, 1, 0], [], []>} : vector<1x32xf32>, vector<32x32xf32>, vector<1x32xf32> -> vector<1x32xf32>
    %37 = arith.addf %35, %36 : vector<1x32xf32>
    %38 = arith.addf %37, %8 : vector<1x32xf32>
    %39 = math.tanh %38 : vector<1x32xf32>
    %c5 = arith.constant 5 : index
    %c0_32 = arith.constant 0 : index
    %40 = vector.load %arg21[%c5, %c0_32] : memref<8x32xf32, #tpu.memory_space<vmem>>, vector<1x32xf32>
    tpu.vector_store %arg21[%c5, %c0_32], %39 {strides = array<i32>} : memref<8x32xf32, #tpu.memory_space<vmem>>, vector<1x32xf32>,
    %41 = vector.extract_strided_slice %10 {offsets = [5, 0], sizes = [1, 8], strides = [1, 1]} : vector<8x8xf32> to vector<1x8xf32>
    %cst_33 = arith.constant dense<0.000000e+00> : vector<1x32xf32>
    %42 = tpu.matmul %41, %5, %cst_33 {dimension_numbers = #tpu.dot_dimension_numbers<[1], [1], [0], [0], [0, 0, 1, 0], [], []>} : vector<1x8xf32>, vector<32x8xf32>, vector<1x32xf32> -> vector<1x32xf32>
    %cst_34 = arith.constant dense<0.000000e+00> : vector<1x32xf32>
    %43 = tpu.matmul %39, %2, %cst_34 {dimension_numbers = #tpu.dot_dimension_numbers<[1], [1], [0], [0], [0, 0, 1, 0], [], []>} : vector<1x32xf32>, vector<32x32xf32>, vector<1x32xf32> -> vector<1x32xf32>
    %44 = arith.addf %42, %43 : vector<1x32xf32>
    %45 = arith.addf %44, %8 : vector<1x32xf32>
    %46 = math.tanh %45 : vector<1x32xf32>
    %c6 = arith.constant 6 : index
    %c0_35 = arith.constant 0 : index
    %47 = vector.load %arg21[%c6, %c0_35] : memref<8x32xf32, #tpu.memory_space<vmem>>, vector<1x32xf32>
    tpu.vector_store %arg21[%c6, %c0_35], %46 {strides = array<i32>} : memref<8x32xf32, #tpu.memory_space<vmem>>, vector<1x32xf32>,
    %48 = vector.extract_strided_slice %10 {offsets = [6, 0], sizes = [1, 8], strides = [1, 1]} : vector<8x8xf32> to vector<1x8xf32>
    %cst_36 = arith.constant dense<0.000000e+00> : vector<1x32xf32>
    %49 = tpu.matmul %48, %5, %cst_36 {dimension_numbers = #tpu.dot_dimension_numbers<[1], [1], [0], [0], [0, 0, 1, 0], [], []>} : vector<1x8xf32>, vector<32x8xf32>, vector<1x32xf32> -> vector<1x32xf32>
    %cst_37 = arith.constant dense<0.000000e+00> : vector<1x32xf32>
    %50 = tpu.matmul %46, %2, %cst_37 {dimension_numbers = #tpu.dot_dimension_numbers<[1], [1], [0], [0], [0, 0, 1, 0], [], []>} : vector<1x32xf32>, vector<32x32xf32>, vector<1x32xf32> -> vector<1x32xf32>
    %51 = arith.addf %49, %50 : vector<1x32xf32>
    %52 = arith.addf %51, %8 : vector<1x32xf32>
    %53 = math.tanh %52 : vector<1x32xf32>
    %c7 = arith.constant 7 : index
    %c0_38 = arith.constant 0 : index
    %54 = vector.load %arg21[%c7, %c0_38] : memref<8x32xf32, #tpu.memory_space<vmem>>, vector<1x32xf32>
    tpu.vector_store %arg21[%c7, %c0_38], %53 {strides = array<i32>} : memref<8x32xf32, #tpu.memory_space<vmem>>, vector<1x32xf32>,
    %c0_39 = arith.constant 0 : index
    %c0_40 = arith.constant 0 : index
    %55 = vector.load %arg21[%c0_39, %c0_40] : memref<8x32xf32, #tpu.memory_space<vmem>>, vector<8x32xf32>
    %56 = vector.extract_strided_slice %55 {offsets = [1, 0], sizes = [7, 32], strides = [1, 1]} : vector<8x32xf32> to vector<7x32xf32>
    %57 = vector.extract_strided_slice %55 {offsets = [7, 0], sizes = [1, 32], strides = [1, 1]} : vector<8x32xf32> to vector<1x32xf32>
    %cst_41 = arith.constant dense<0.000000e+00> : vector<7x32xf32>
    %58 = tpu.matmul %56, %4, %cst_41 {dimension_numbers = #tpu.dot_dimension_numbers<[1], [1], [0], [0], [0, 0, 1, 0], [], []>} : vector<7x32xf32>, vector<32x32xf32>, vector<7x32xf32> -> vector<7x32xf32>
    %59 = vector.broadcast %7 : vector<1x32xf32> to vector<7x32xf32>
    %60 = arith.addf %58, %59 : vector<7x32xf32>
    %cst_42 = arith.constant dense<0.000000e+00> : vector<7x8xf32>
    %61 = tpu.matmul %56, %3, %cst_42 {dimension_numbers = #tpu.dot_dimension_numbers<[1], [1], [0], [0], [0, 0, 1, 0], [], []>} : vector<7x32xf32>, vector<8x32xf32>, vector<7x8xf32> -> vector<7x8xf32>
    %62 = vector.broadcast %6 : vector<1x8xf32> to vector<7x8xf32>
    %63 = arith.addf %61, %62 : vector<7x8xf32>
    %64 = vector.extract_strided_slice %10 {offsets = [1, 0], sizes = [7, 8], strides = [1, 1]} : vector<8x8xf32> to vector<7x8xf32>
    %65 = vector.extract_strided_slice %10 {offsets = [0, 0], sizes = [7, 8], strides = [1, 1]} : vector<8x8xf32> to vector<7x8xf32>
    %cst_43 = arith.constant dense<0.000000e+00> : vector<7x32xf32>
    %66 = tpu.matmul %65, %1, %cst_43 {dimension_numbers = #tpu.dot_dimension_numbers<[1], [0], [0], [1], [0, 0, 1, 1], [], []>} : vector<7x8xf32>, vector<8x32xf32>, vector<7x32xf32> -> vector<7x32xf32>
    %67 = arith.addf %66, %60 : vector<7x32xf32>
    %cst_44 = arith.constant 0.000000e+00 : f32
    %68 = vector.broadcast %cst_44 : f32 to vector<7x32xf32>
    %69 = arith.subf %68, %67 : vector<7x32xf32>
    %70 = math.exp %69 : vector<7x32xf32>
    %cst_45 = arith.constant 1.000000e+00 : f32
    %71 = vector.broadcast %cst_45 : f32 to vector<7x32xf32>
    %72 = arith.addf %71, %70 : vector<7x32xf32>
    %cst_46 = arith.constant 1.000000e+00 : f32
    %73 = vector.broadcast %cst_46 : f32 to vector<7x32xf32>
    %74 = arith.divf %73, %72 : vector<7x32xf32>
    %c0_47 = arith.constant 0 : index
    %c0_48 = arith.constant 0 : index
    %c0_49 = arith.constant 0 : index
    %75 = vector.load %arg10[%c0_47, %c0_48, %c0_49] : memref<20x7x32xf32, #tpu.memory_space<vmem>>, vector<1x7x32xf32>
    %76 = vector.shape_cast %75 : vector<1x7x32xf32> to vector<7x32xf32>
    %77 = arith.subf %74, %76 : vector<7x32xf32>
    %cst_50 = arith.constant 0.000000e+00 : f32
    %78 = vector.broadcast %cst_50 : f32 to vector<7x32xf32>
    %79 = arith.cmpf ogt, %77, %78 : vector<7x32xf32>
    %80 = arith.extui %79 : vector<7x32xi1> to vector<7x32xi32>
    %81 = arith.sitofp %80 : vector<7x32xi32> to vector<7x32xf32>
    %cst_51 = arith.constant dense<0.000000e+00> : vector<7x8xf32>
    %82 = tpu.matmul %81, %0, %cst_51 {dimension_numbers = #tpu.dot_dimension_numbers<[1], [0], [0], [1], [0, 0, 1, 1], [], []>} : vector<7x32xf32>, vector<32x8xf32>, vector<7x8xf32> -> vector<7x8xf32>
    %83 = arith.addf %82, %63 : vector<7x8xf32>
    %cst_52 = arith.constant 0.000000e+00 : f32
    %84 = vector.broadcast %cst_52 : f32 to vector<7x8xf32>
    %85 = arith.subf %84, %83 : vector<7x8xf32>
    %86 = math.exp %85 : vector<7x8xf32>
    %cst_53 = arith.constant 1.000000e+00 : f32
    %87 = vector.broadcast %cst_53 : f32 to vector<7x8xf32>
    %88 = arith.addf %87, %86 : vector<7x8xf32>
    %cst_54 = arith.constant 1.000000e+00 : f32
    %89 = vector.broadcast %cst_54 : f32 to vector<7x8xf32>
    %90 = arith.divf %89, %88 : vector<7x8xf32>
    %c0_55 = arith.constant 0 : index
    %c0_56 = arith.constant 0 : index
    %c0_57 = arith.constant 0 : index
    %91 = vector.load %arg11[%c0_55, %c0_56, %c0_57] : memref<20x7x8xf32, #tpu.memory_space<vmem>>, vector<1x7x8xf32>
    %92 = vector.shape_cast %91 : vector<1x7x8xf32> to vector<7x8xf32>
    %93 = arith.subf %90, %92 : vector<7x8xf32>
    %cst_58 = arith.constant 0.000000e+00 : f32
    %94 = vector.broadcast %cst_58 : f32 to vector<7x8xf32>
    %95 = arith.cmpf ogt, %93, %94 : vector<7x8xf32>
    %96 = arith.extui %95 : vector<7x8xi1> to vector<7x8xi32>
    %97 = arith.sitofp %96 : vector<7x8xi32> to vector<7x8xf32>
    %cst_59 = arith.constant dense<0.000000e+00> : vector<7x32xf32>
    %98 = tpu.matmul %97, %1, %cst_59 {dimension_numbers = #tpu.dot_dimension_numbers<[1], [0], [0], [1], [0, 0, 1, 1], [], []>} : vector<7x8xf32>, vector<8x32xf32>, vector<7x32xf32> -> vector<7x32xf32>
    %99 = arith.addf %98, %60 : vector<7x32xf32>
    %cst_60 = arith.constant 0.000000e+00 : f32
    %100 = vector.broadcast %cst_60 : f32 to vector<7x32xf32>
    %101 = arith.subf %100, %99 : vector<7x32xf32>
    %102 = math.exp %101 : vector<7x32xf32>
    %cst_61 = arith.constant 1.000000e+00 : f32
    %103 = vector.broadcast %cst_61 : f32 to vector<7x32xf32>
    %104 = arith.addf %103, %102 : vector<7x32xf32>
    %cst_62 = arith.constant 1.000000e+00 : f32
    %105 = vector.broadcast %cst_62 : f32 to vector<7x32xf32>
    %106 = arith.divf %105, %104 : vector<7x32xf32>
    %c1_63 = arith.constant 1 : index
    %c0_64 = arith.constant 0 : index
    %c0_65 = arith.constant 0 : index
    %107 = vector.load %arg10[%c1_63, %c0_64, %c0_65] : memref<20x7x32xf32, #tpu.memory_space<vmem>>, vector<1x7x32xf32>
    %108 = vector.shape_cast %107 : vector<1x7x32xf32> to vector<7x32xf32>
    %109 = arith.subf %106, %108 : vector<7x32xf32>
    %cst_66 = arith.constant 0.000000e+00 : f32
    %110 = vector.broadcast %cst_66 : f32 to vector<7x32xf32>
    %111 = arith.cmpf ogt, %109, %110 : vector<7x32xf32>
    %112 = arith.extui %111 : vector<7x32xi1> to vector<7x32xi32>
    %113 = arith.sitofp %112 : vector<7x32xi32> to vector<7x32xf32>
    %cst_67 = arith.constant dense<0.000000e+00> : vector<7x8xf32>
    %114 = tpu.matmul %113, %0, %cst_67 {dimension_numbers = #tpu.dot_dimension_numbers<[1], [0], [0], [1], [0, 0, 1, 1], [], []>} : vector<7x32xf32>, vector<32x8xf32>, vector<7x8xf32> -> vector<7x8xf32>
    %115 = arith.addf %114, %63 : vector<7x8xf32>
    %cst_68 = arith.constant 0.000000e+00 : f32
    %116 = vector.broadcast %cst_68 : f32 to vector<7x8xf32>
    %117 = arith.subf %116, %115 : vector<7x8xf32>
    %118 = math.exp %117 : vector<7x8xf32>
    %cst_69 = arith.constant 1.000000e+00 : f32
    %119 = vector.broadcast %cst_69 : f32 to vector<7x8xf32>
    %120 = arith.addf %119, %118 : vector<7x8xf32>
    %cst_70 = arith.constant 1.000000e+00 : f32
    %121 = vector.broadcast %cst_70 : f32 to vector<7x8xf32>
    %122 = arith.divf %121, %120 : vector<7x8xf32>
    %c1_71 = arith.constant 1 : index
    %c0_72 = arith.constant 0 : index
    %c0_73 = arith.constant 0 : index
    %123 = vector.load %arg11[%c1_71, %c0_72, %c0_73] : memref<20x7x8xf32, #tpu.memory_space<vmem>>, vector<1x7x8xf32>
    %124 = vector.shape_cast %123 : vector<1x7x8xf32> to vector<7x8xf32>
    %125 = arith.subf %122, %124 : vector<7x8xf32>
    %cst_74 = arith.constant 0.000000e+00 : f32
    %126 = vector.broadcast %cst_74 : f32 to vector<7x8xf32>
    %127 = arith.cmpf ogt, %125, %126 : vector<7x8xf32>
    %128 = arith.extui %127 : vector<7x8xi1> to vector<7x8xi32>
    %129 = arith.sitofp %128 : vector<7x8xi32> to vector<7x8xf32>
    %cst_75 = arith.constant dense<0.000000e+00> : vector<7x32xf32>
    %130 = tpu.matmul %129, %1, %cst_75 {dimension_numbers = #tpu.dot_dimension_numbers<[1], [0], [0], [1], [0, 0, 1, 1], [], []>} : vector<7x8xf32>, vector<8x32xf32>, vector<7x32xf32> -> vector<7x32xf32>
    %131 = arith.addf %130, %60 : vector<7x32xf32>
    %cst_76 = arith.constant 0.000000e+00 : f32
    %132 = vector.broadcast %cst_76 : f32 to vector<7x32xf32>
    %133 = arith.subf %132, %131 : vector<7x32xf32>
    %134 = math.exp %133 : vector<7x32xf32>
    %cst_77 = arith.constant 1.000000e+00 : f32
    %135 = vector.broadcast %cst_77 : f32 to vector<7x32xf32>
    %136 = arith.addf %135, %134 : vector<7x32xf32>
    %cst_78 = arith.constant 1.000000e+00 : f32
    %137 = vector.broadcast %cst_78 : f32 to vector<7x32xf32>
    %138 = arith.divf %137, %136 : vector<7x32xf32>
    %c2_79 = arith.constant 2 : index
    %c0_80 = arith.constant 0 : index
    %c0_81 = arith.constant 0 : index
    %139 = vector.load %arg10[%c2_79, %c0_80, %c0_81] : memref<20x7x32xf32, #tpu.memory_space<vmem>>, vector<1x7x32xf32>
    %140 = vector.shape_cast %139 : vector<1x7x32xf32> to vector<7x32xf32>
    %141 = arith.subf %138, %140 : vector<7x32xf32>
    %cst_82 = arith.constant 0.000000e+00 : f32
    %142 = vector.broadcast %cst_82 : f32 to vector<7x32xf32>
    %143 = arith.cmpf ogt, %141, %142 : vector<7x32xf32>
    %144 = arith.extui %143 : vector<7x32xi1> to vector<7x32xi32>
    %145 = arith.sitofp %144 : vector<7x32xi32> to vector<7x32xf32>
    %cst_83 = arith.constant dense<0.000000e+00> : vector<7x8xf32>
    %146 = tpu.matmul %145, %0, %cst_83 {dimension_numbers = #tpu.dot_dimension_numbers<[1], [0], [0], [1], [0, 0, 1, 1], [], []>} : vector<7x32xf32>, vector<32x8xf32>, vector<7x8xf32> -> vector<7x8xf32>
    %147 = arith.addf %146, %63 : vector<7x8xf32>
    %cst_84 = arith.constant 0.000000e+00 : f32
    %148 = vector.broadcast %cst_84 : f32 to vector<7x8xf32>
    %149 = arith.subf %148, %147 : vector<7x8xf32>
    %150 = math.exp %149 : vector<7x8xf32>
    %cst_85 = arith.constant 1.000000e+00 : f32
    %151 = vector.broadcast %cst_85 : f32 to vector<7x8xf32>
    %152 = arith.addf %151, %150 : vector<7x8xf32>
    %cst_86 = arith.constant 1.000000e+00 : f32
    %153 = vector.broadcast %cst_86 : f32 to vector<7x8xf32>
    %154 = arith.divf %153, %152 : vector<7x8xf32>
    %c2_87 = arith.constant 2 : index
    %c0_88 = arith.constant 0 : index
    %c0_89 = arith.constant 0 : index
    %155 = vector.load %arg11[%c2_87, %c0_88, %c0_89] : memref<20x7x8xf32, #tpu.memory_space<vmem>>, vector<1x7x8xf32>
    %156 = vector.shape_cast %155 : vector<1x7x8xf32> to vector<7x8xf32>
    %157 = arith.subf %154, %156 : vector<7x8xf32>
    %cst_90 = arith.constant 0.000000e+00 : f32
    %158 = vector.broadcast %cst_90 : f32 to vector<7x8xf32>
    %159 = arith.cmpf ogt, %157, %158 : vector<7x8xf32>
    %160 = arith.extui %159 : vector<7x8xi1> to vector<7x8xi32>
    %161 = arith.sitofp %160 : vector<7x8xi32> to vector<7x8xf32>
    %cst_91 = arith.constant dense<0.000000e+00> : vector<7x32xf32>
    %162 = tpu.matmul %161, %1, %cst_91 {dimension_numbers = #tpu.dot_dimension_numbers<[1], [0], [0], [1], [0, 0, 1, 1], [], []>} : vector<7x8xf32>, vector<8x32xf32>, vector<7x32xf32> -> vector<7x32xf32>
    %163 = arith.addf %162, %60 : vector<7x32xf32>
    %cst_92 = arith.constant 0.000000e+00 : f32
    %164 = vector.broadcast %cst_92 : f32 to vector<7x32xf32>
    %165 = arith.subf %164, %163 : vector<7x32xf32>
    %166 = math.exp %165 : vector<7x32xf32>
    %cst_93 = arith.constant 1.000000e+00 : f32
    %167 = vector.broadcast %cst_93 : f32 to vector<7x32xf32>
    %168 = arith.addf %167, %166 : vector<7x32xf32>
    %cst_94 = arith.constant 1.000000e+00 : f32
    %169 = vector.broadcast %cst_94 : f32 to vector<7x32xf32>
    %170 = arith.divf %169, %168 : vector<7x32xf32>
    %c3_95 = arith.constant 3 : index
    %c0_96 = arith.constant 0 : index
    %c0_97 = arith.constant 0 : index
    %171 = vector.load %arg10[%c3_95, %c0_96, %c0_97] : memref<20x7x32xf32, #tpu.memory_space<vmem>>, vector<1x7x32xf32>
    %172 = vector.shape_cast %171 : vector<1x7x32xf32> to vector<7x32xf32>
    %173 = arith.subf %170, %172 : vector<7x32xf32>
    %cst_98 = arith.constant 0.000000e+00 : f32
    %174 = vector.broadcast %cst_98 : f32 to vector<7x32xf32>
    %175 = arith.cmpf ogt, %173, %174 : vector<7x32xf32>
    %176 = arith.extui %175 : vector<7x32xi1> to vector<7x32xi32>
    %177 = arith.sitofp %176 : vector<7x32xi32> to vector<7x32xf32>
    %cst_99 = arith.constant dense<0.000000e+00> : vector<7x8xf32>
    %178 = tpu.matmul %177, %0, %cst_99 {dimension_numbers = #tpu.dot_dimension_numbers<[1], [0], [0], [1], [0, 0, 1, 1], [], []>} : vector<7x32xf32>, vector<32x8xf32>, vector<7x8xf32> -> vector<7x8xf32>
    %179 = arith.addf %178, %63 : vector<7x8xf32>
    %cst_100 = arith.constant 0.000000e+00 : f32
    %180 = vector.broadcast %cst_100 : f32 to vector<7x8xf32>
    %181 = arith.subf %180, %179 : vector<7x8xf32>
    %182 = math.exp %181 : vector<7x8xf32>
    %cst_101 = arith.constant 1.000000e+00 : f32
    %183 = vector.broadcast %cst_101 : f32 to vector<7x8xf32>
    %184 = arith.addf %183, %182 : vector<7x8xf32>
    %cst_102 = arith.constant 1.000000e+00 : f32
    %185 = vector.broadcast %cst_102 : f32 to vector<7x8xf32>
    %186 = arith.divf %185, %184 : vector<7x8xf32>
    %c3_103 = arith.constant 3 : index
    %c0_104 = arith.constant 0 : index
    %c0_105 = arith.constant 0 : index
    %187 = vector.load %arg11[%c3_103, %c0_104, %c0_105] : memref<20x7x8xf32, #tpu.memory_space<vmem>>, vector<1x7x8xf32>
    %188 = vector.shape_cast %187 : vector<1x7x8xf32> to vector<7x8xf32>
    %189 = arith.subf %186, %188 : vector<7x8xf32>
    %cst_106 = arith.constant 0.000000e+00 : f32
    %190 = vector.broadcast %cst_106 : f32 to vector<7x8xf32>
    %191 = arith.cmpf ogt, %189, %190 : vector<7x8xf32>
    %192 = arith.extui %191 : vector<7x8xi1> to vector<7x8xi32>
    %193 = arith.sitofp %192 : vector<7x8xi32> to vector<7x8xf32>
    %cst_107 = arith.constant dense<0.000000e+00> : vector<7x32xf32>
    %194 = tpu.matmul %193, %1, %cst_107 {dimension_numbers = #tpu.dot_dimension_numbers<[1], [0], [0], [1], [0, 0, 1, 1], [], []>} : vector<7x8xf32>, vector<8x32xf32>, vector<7x32xf32> -> vector<7x32xf32>
    %195 = arith.addf %194, %60 : vector<7x32xf32>
    %cst_108 = arith.constant 0.000000e+00 : f32
    %196 = vector.broadcast %cst_108 : f32 to vector<7x32xf32>
    %197 = arith.subf %196, %195 : vector<7x32xf32>
    %198 = math.exp %197 : vector<7x32xf32>
    %cst_109 = arith.constant 1.000000e+00 : f32
    %199 = vector.broadcast %cst_109 : f32 to vector<7x32xf32>
    %200 = arith.addf %199, %198 : vector<7x32xf32>
    %cst_110 = arith.constant 1.000000e+00 : f32
    %201 = vector.broadcast %cst_110 : f32 to vector<7x32xf32>
    %202 = arith.divf %201, %200 : vector<7x32xf32>
    %c4_111 = arith.constant 4 : index
    %c0_112 = arith.constant 0 : index
    %c0_113 = arith.constant 0 : index
    %203 = vector.load %arg10[%c4_111, %c0_112, %c0_113] : memref<20x7x32xf32, #tpu.memory_space<vmem>>, vector<1x7x32xf32>
    %204 = vector.shape_cast %203 : vector<1x7x32xf32> to vector<7x32xf32>
    %205 = arith.subf %202, %204 : vector<7x32xf32>
    %cst_114 = arith.constant 0.000000e+00 : f32
    %206 = vector.broadcast %cst_114 : f32 to vector<7x32xf32>
    %207 = arith.cmpf ogt, %205, %206 : vector<7x32xf32>
    %208 = arith.extui %207 : vector<7x32xi1> to vector<7x32xi32>
    %209 = arith.sitofp %208 : vector<7x32xi32> to vector<7x32xf32>
    %cst_115 = arith.constant dense<0.000000e+00> : vector<7x8xf32>
    %210 = tpu.matmul %209, %0, %cst_115 {dimension_numbers = #tpu.dot_dimension_numbers<[1], [0], [0], [1], [0, 0, 1, 1], [], []>} : vector<7x32xf32>, vector<32x8xf32>, vector<7x8xf32> -> vector<7x8xf32>
    %211 = arith.addf %210, %63 : vector<7x8xf32>
    %cst_116 = arith.constant 0.000000e+00 : f32
    %212 = vector.broadcast %cst_116 : f32 to vector<7x8xf32>
    %213 = arith.subf %212, %211 : vector<7x8xf32>
    %214 = math.exp %213 : vector<7x8xf32>
    %cst_117 = arith.constant 1.000000e+00 : f32
    %215 = vector.broadcast %cst_117 : f32 to vector<7x8xf32>
    %216 = arith.addf %215, %214 : vector<7x8xf32>
    %cst_118 = arith.constant 1.000000e+00 : f32
    %217 = vector.broadcast %cst_118 : f32 to vector<7x8xf32>
    %218 = arith.divf %217, %216 : vector<7x8xf32>
    %c4_119 = arith.constant 4 : index
    %c0_120 = arith.constant 0 : index
    %c0_121 = arith.constant 0 : index
    %219 = vector.load %arg11[%c4_119, %c0_120, %c0_121] : memref<20x7x8xf32, #tpu.memory_space<vmem>>, vector<1x7x8xf32>
    %220 = vector.shape_cast %219 : vector<1x7x8xf32> to vector<7x8xf32>
    %221 = arith.subf %218, %220 : vector<7x8xf32>
    %cst_122 = arith.constant 0.000000e+00 : f32
    %222 = vector.broadcast %cst_122 : f32 to vector<7x8xf32>
    %223 = arith.cmpf ogt, %221, %222 : vector<7x8xf32>
    %224 = arith.extui %223 : vector<7x8xi1> to vector<7x8xi32>
    %225 = arith.sitofp %224 : vector<7x8xi32> to vector<7x8xf32>
    %cst_123 = arith.constant dense<0.000000e+00> : vector<7x32xf32>
    %226 = tpu.matmul %225, %1, %cst_123 {dimension_numbers = #tpu.dot_dimension_numbers<[1], [0], [0], [1], [0, 0, 1, 1], [], []>} : vector<7x8xf32>, vector<8x32xf32>, vector<7x32xf32> -> vector<7x32xf32>
    %227 = arith.addf %226, %60 : vector<7x32xf32>
    %cst_124 = arith.constant 0.000000e+00 : f32
    %228 = vector.broadcast %cst_124 : f32 to vector<7x32xf32>
    %229 = arith.subf %228, %227 : vector<7x32xf32>
    %230 = math.exp %229 : vector<7x32xf32>
    %cst_125 = arith.constant 1.000000e+00 : f32
    %231 = vector.broadcast %cst_125 : f32 to vector<7x32xf32>
    %232 = arith.addf %231, %230 : vector<7x32xf32>
    %cst_126 = arith.constant 1.000000e+00 : f32
    %233 = vector.broadcast %cst_126 : f32 to vector<7x32xf32>
    %234 = arith.divf %233, %232 : vector<7x32xf32>
    %c5_127 = arith.constant 5 : index
    %c0_128 = arith.constant 0 : index
    %c0_129 = arith.constant 0 : index
    %235 = vector.load %arg10[%c5_127, %c0_128, %c0_129] : memref<20x7x32xf32, #tpu.memory_space<vmem>>, vector<1x7x32xf32>
    %236 = vector.shape_cast %235 : vector<1x7x32xf32> to vector<7x32xf32>
    %237 = arith.subf %234, %236 : vector<7x32xf32>
    %cst_130 = arith.constant 0.000000e+00 : f32
    %238 = vector.broadcast %cst_130 : f32 to vector<7x32xf32>
    %239 = arith.cmpf ogt, %237, %238 : vector<7x32xf32>
    %240 = arith.extui %239 : vector<7x32xi1> to vector<7x32xi32>
    %241 = arith.sitofp %240 : vector<7x32xi32> to vector<7x32xf32>
    %cst_131 = arith.constant dense<0.000000e+00> : vector<7x8xf32>
    %242 = tpu.matmul %241, %0, %cst_131 {dimension_numbers = #tpu.dot_dimension_numbers<[1], [0], [0], [1], [0, 0, 1, 1], [], []>} : vector<7x32xf32>, vector<32x8xf32>, vector<7x8xf32> -> vector<7x8xf32>
    %243 = arith.addf %242, %63 : vector<7x8xf32>
    %cst_132 = arith.constant 0.000000e+00 : f32
    %244 = vector.broadcast %cst_132 : f32 to vector<7x8xf32>
    %245 = arith.subf %244, %243 : vector<7x8xf32>
    %246 = math.exp %245 : vector<7x8xf32>
    %cst_133 = arith.constant 1.000000e+00 : f32
    %247 = vector.broadcast %cst_133 : f32 to vector<7x8xf32>
    %248 = arith.addf %247, %246 : vector<7x8xf32>
    %cst_134 = arith.constant 1.000000e+00 : f32
    %249 = vector.broadcast %cst_134 : f32 to vector<7x8xf32>
    %250 = arith.divf %249, %248 : vector<7x8xf32>
    %c5_135 = arith.constant 5 : index
    %c0_136 = arith.constant 0 : index
    %c0_137 = arith.constant 0 : index
    %251 = vector.load %arg11[%c5_135, %c0_136, %c0_137] : memref<20x7x8xf32, #tpu.memory_space<vmem>>, vector<1x7x8xf32>
    %252 = vector.shape_cast %251 : vector<1x7x8xf32> to vector<7x8xf32>
    %253 = arith.subf %250, %252 : vector<7x8xf32>
    %cst_138 = arith.constant 0.000000e+00 : f32
    %254 = vector.broadcast %cst_138 : f32 to vector<7x8xf32>
    %255 = arith.cmpf ogt, %253, %254 : vector<7x8xf32>
    %256 = arith.extui %255 : vector<7x8xi1> to vector<7x8xi32>
    %257 = arith.sitofp %256 : vector<7x8xi32> to vector<7x8xf32>
    %cst_139 = arith.constant dense<0.000000e+00> : vector<7x32xf32>
    %258 = tpu.matmul %257, %1, %cst_139 {dimension_numbers = #tpu.dot_dimension_numbers<[1], [0], [0], [1], [0, 0, 1, 1], [], []>} : vector<7x8xf32>, vector<8x32xf32>, vector<7x32xf32> -> vector<7x32xf32>
    %259 = arith.addf %258, %60 : vector<7x32xf32>
    %cst_140 = arith.constant 0.000000e+00 : f32
    %260 = vector.broadcast %cst_140 : f32 to vector<7x32xf32>
    %261 = arith.subf %260, %259 : vector<7x32xf32>
    %262 = math.exp %261 : vector<7x32xf32>
    %cst_141 = arith.constant 1.000000e+00 : f32
    %263 = vector.broadcast %cst_141 : f32 to vector<7x32xf32>
    %264 = arith.addf %263, %262 : vector<7x32xf32>
    %cst_142 = arith.constant 1.000000e+00 : f32
    %265 = vector.broadcast %cst_142 : f32 to vector<7x32xf32>
    %266 = arith.divf %265, %264 : vector<7x32xf32>
    %c6_143 = arith.constant 6 : index
    %c0_144 = arith.constant 0 : index
    %c0_145 = arith.constant 0 : index
    %267 = vector.load %arg10[%c6_143, %c0_144, %c0_145] : memref<20x7x32xf32, #tpu.memory_space<vmem>>, vector<1x7x32xf32>
    %268 = vector.shape_cast %267 : vector<1x7x32xf32> to vector<7x32xf32>
    %269 = arith.subf %266, %268 : vector<7x32xf32>
    %cst_146 = arith.constant 0.000000e+00 : f32
    %270 = vector.broadcast %cst_146 : f32 to vector<7x32xf32>
    %271 = arith.cmpf ogt, %269, %270 : vector<7x32xf32>
    %272 = arith.extui %271 : vector<7x32xi1> to vector<7x32xi32>
    %273 = arith.sitofp %272 : vector<7x32xi32> to vector<7x32xf32>
    %cst_147 = arith.constant dense<0.000000e+00> : vector<7x8xf32>
    %274 = tpu.matmul %273, %0, %cst_147 {dimension_numbers = #tpu.dot_dimension_numbers<[1], [0], [0], [1], [0, 0, 1, 1], [], []>} : vector<7x32xf32>, vector<32x8xf32>, vector<7x8xf32> -> vector<7x8xf32>
    %275 = arith.addf %274, %63 : vector<7x8xf32>
    %cst_148 = arith.constant 0.000000e+00 : f32
    %276 = vector.broadcast %cst_148 : f32 to vector<7x8xf32>
    %277 = arith.subf %276, %275 : vector<7x8xf32>
    %278 = math.exp %277 : vector<7x8xf32>
    %cst_149 = arith.constant 1.000000e+00 : f32
    %279 = vector.broadcast %cst_149 : f32 to vector<7x8xf32>
    %280 = arith.addf %279, %278 : vector<7x8xf32>
    %cst_150 = arith.constant 1.000000e+00 : f32
    %281 = vector.broadcast %cst_150 : f32 to vector<7x8xf32>
    %282 = arith.divf %281, %280 : vector<7x8xf32>
    %c6_151 = arith.constant 6 : index
    %c0_152 = arith.constant 0 : index
    %c0_153 = arith.constant 0 : index
    %283 = vector.load %arg11[%c6_151, %c0_152, %c0_153] : memref<20x7x8xf32, #tpu.memory_space<vmem>>, vector<1x7x8xf32>
    %284 = vector.shape_cast %283 : vector<1x7x8xf32> to vector<7x8xf32>
    %285 = arith.subf %282, %284 : vector<7x8xf32>
    %cst_154 = arith.constant 0.000000e+00 : f32
    %286 = vector.broadcast %cst_154 : f32 to vector<7x8xf32>
    %287 = arith.cmpf ogt, %285, %286 : vector<7x8xf32>
    %288 = arith.extui %287 : vector<7x8xi1> to vector<7x8xi32>
    %289 = arith.sitofp %288 : vector<7x8xi32> to vector<7x8xf32>
    %cst_155 = arith.constant dense<0.000000e+00> : vector<7x32xf32>
    %290 = tpu.matmul %289, %1, %cst_155 {dimension_numbers = #tpu.dot_dimension_numbers<[1], [0], [0], [1], [0, 0, 1, 1], [], []>} : vector<7x8xf32>, vector<8x32xf32>, vector<7x32xf32> -> vector<7x32xf32>
    %291 = arith.addf %290, %60 : vector<7x32xf32>
    %cst_156 = arith.constant 0.000000e+00 : f32
    %292 = vector.broadcast %cst_156 : f32 to vector<7x32xf32>
    %293 = arith.subf %292, %291 : vector<7x32xf32>
    %294 = math.exp %293 : vector<7x32xf32>
    %cst_157 = arith.constant 1.000000e+00 : f32
    %295 = vector.broadcast %cst_157 : f32 to vector<7x32xf32>
    %296 = arith.addf %295, %294 : vector<7x32xf32>
    %cst_158 = arith.constant 1.000000e+00 : f32
    %297 = vector.broadcast %cst_158 : f32 to vector<7x32xf32>
    %298 = arith.divf %297, %296 : vector<7x32xf32>
    %c7_159 = arith.constant 7 : index
    %c0_160 = arith.constant 0 : index
    %c0_161 = arith.constant 0 : index
    %299 = vector.load %arg10[%c7_159, %c0_160, %c0_161] : memref<20x7x32xf32, #tpu.memory_space<vmem>>, vector<1x7x32xf32>
    %300 = vector.shape_cast %299 : vector<1x7x32xf32> to vector<7x32xf32>
    %301 = arith.subf %298, %300 : vector<7x32xf32>
    %cst_162 = arith.constant 0.000000e+00 : f32
    %302 = vector.broadcast %cst_162 : f32 to vector<7x32xf32>
    %303 = arith.cmpf ogt, %301, %302 : vector<7x32xf32>
    %304 = arith.extui %303 : vector<7x32xi1> to vector<7x32xi32>
    %305 = arith.sitofp %304 : vector<7x32xi32> to vector<7x32xf32>
    %cst_163 = arith.constant dense<0.000000e+00> : vector<7x8xf32>
    %306 = tpu.matmul %305, %0, %cst_163 {dimension_numbers = #tpu.dot_dimension_numbers<[1], [0], [0], [1], [0, 0, 1, 1], [], []>} : vector<7x32xf32>, vector<32x8xf32>, vector<7x8xf32> -> vector<7x8xf32>
    %307 = arith.addf %306, %63 : vector<7x8xf32>
    %cst_164 = arith.constant 0.000000e+00 : f32
    %308 = vector.broadcast %cst_164 : f32 to vector<7x8xf32>
    %309 = arith.subf %308, %307 : vector<7x8xf32>
    %310 = math.exp %309 : vector<7x8xf32>
    %cst_165 = arith.constant 1.000000e+00 : f32
    %311 = vector.broadcast %cst_165 : f32 to vector<7x8xf32>
    %312 = arith.addf %311, %310 : vector<7x8xf32>
    %cst_166 = arith.constant 1.000000e+00 : f32
    %313 = vector.broadcast %cst_166 : f32 to vector<7x8xf32>
    %314 = arith.divf %313, %312 : vector<7x8xf32>
    %c7_167 = arith.constant 7 : index
    %c0_168 = arith.constant 0 : index
    %c0_169 = arith.constant 0 : index
    %315 = vector.load %arg11[%c7_167, %c0_168, %c0_169] : memref<20x7x8xf32, #tpu.memory_space<vmem>>, vector<1x7x8xf32>
    %316 = vector.shape_cast %315 : vector<1x7x8xf32> to vector<7x8xf32>
    %317 = arith.subf %314, %316 : vector<7x8xf32>
    %cst_170 = arith.constant 0.000000e+00 : f32
    %318 = vector.broadcast %cst_170 : f32 to vector<7x8xf32>
    %319 = arith.cmpf ogt, %317, %318 : vector<7x8xf32>
    %320 = arith.extui %319 : vector<7x8xi1> to vector<7x8xi32>
    %321 = arith.sitofp %320 : vector<7x8xi32> to vector<7x8xf32>
    %cst_171 = arith.constant dense<0.000000e+00> : vector<7x32xf32>
    %322 = tpu.matmul %321, %1, %cst_171 {dimension_numbers = #tpu.dot_dimension_numbers<[1], [0], [0], [1], [0, 0, 1, 1], [], []>} : vector<7x8xf32>, vector<8x32xf32>, vector<7x32xf32> -> vector<7x32xf32>
    %323 = arith.addf %322, %60 : vector<7x32xf32>
    %cst_172 = arith.constant 0.000000e+00 : f32
    %324 = vector.broadcast %cst_172 : f32 to vector<7x32xf32>
    %325 = arith.subf %324, %323 : vector<7x32xf32>
    %326 = math.exp %325 : vector<7x32xf32>
    %cst_173 = arith.constant 1.000000e+00 : f32
    %327 = vector.broadcast %cst_173 : f32 to vector<7x32xf32>
    %328 = arith.addf %327, %326 : vector<7x32xf32>
    %cst_174 = arith.constant 1.000000e+00 : f32
    %329 = vector.broadcast %cst_174 : f32 to vector<7x32xf32>
    %330 = arith.divf %329, %328 : vector<7x32xf32>
    %c8 = arith.constant 8 : index
    %c0_175 = arith.constant 0 : index
    %c0_176 = arith.constant 0 : index
    %331 = vector.load %arg10[%c8, %c0_175, %c0_176] : memref<20x7x32xf32, #tpu.memory_space<vmem>>, vector<1x7x32xf32>
    %332 = vector.shape_cast %331 : vector<1x7x32xf32> to vector<7x32xf32>
    %333 = arith.subf %330, %332 : vector<7x32xf32>
    %cst_177 = arith.constant 0.000000e+00 : f32
    %334 = vector.broadcast %cst_177 : f32 to vector<7x32xf32>
    %335 = arith.cmpf ogt, %333, %334 : vector<7x32xf32>
    %336 = arith.extui %335 : vector<7x32xi1> to vector<7x32xi32>
    %337 = arith.sitofp %336 : vector<7x32xi32> to vector<7x32xf32>
    %cst_178 = arith.constant dense<0.000000e+00> : vector<7x8xf32>
    %338 = tpu.matmul %337, %0, %cst_178 {dimension_numbers = #tpu.dot_dimension_numbers<[1], [0], [0], [1], [0, 0, 1, 1], [], []>} : vector<7x32xf32>, vector<32x8xf32>, vector<7x8xf32> -> vector<7x8xf32>
    %339 = arith.addf %338, %63 : vector<7x8xf32>
    %cst_179 = arith.constant 0.000000e+00 : f32
    %340 = vector.broadcast %cst_179 : f32 to vector<7x8xf32>
    %341 = arith.subf %340, %339 : vector<7x8xf32>
    %342 = math.exp %341 : vector<7x8xf32>
    %cst_180 = arith.constant 1.000000e+00 : f32
    %343 = vector.broadcast %cst_180 : f32 to vector<7x8xf32>
    %344 = arith.addf %343, %342 : vector<7x8xf32>
    %cst_181 = arith.constant 1.000000e+00 : f32
    %345 = vector.broadcast %cst_181 : f32 to vector<7x8xf32>
    %346 = arith.divf %345, %344 : vector<7x8xf32>
    %c8_182 = arith.constant 8 : index
    %c0_183 = arith.constant 0 : index
    %c0_184 = arith.constant 0 : index
    %347 = vector.load %arg11[%c8_182, %c0_183, %c0_184] : memref<20x7x8xf32, #tpu.memory_space<vmem>>, vector<1x7x8xf32>
    %348 = vector.shape_cast %347 : vector<1x7x8xf32> to vector<7x8xf32>
    %349 = arith.subf %346, %348 : vector<7x8xf32>
    %cst_185 = arith.constant 0.000000e+00 : f32
    %350 = vector.broadcast %cst_185 : f32 to vector<7x8xf32>
    %351 = arith.cmpf ogt, %349, %350 : vector<7x8xf32>
    %352 = arith.extui %351 : vector<7x8xi1> to vector<7x8xi32>
    %353 = arith.sitofp %352 : vector<7x8xi32> to vector<7x8xf32>
    %cst_186 = arith.constant dense<0.000000e+00> : vector<7x32xf32>
    %354 = tpu.matmul %353, %1, %cst_186 {dimension_numbers = #tpu.dot_dimension_numbers<[1], [0], [0], [1], [0, 0, 1, 1], [], []>} : vector<7x8xf32>, vector<8x32xf32>, vector<7x32xf32> -> vector<7x32xf32>
    %355 = arith.addf %354, %60 : vector<7x32xf32>
    %cst_187 = arith.constant 0.000000e+00 : f32
    %356 = vector.broadcast %cst_187 : f32 to vector<7x32xf32>
    %357 = arith.subf %356, %355 : vector<7x32xf32>
    %358 = math.exp %357 : vector<7x32xf32>
    %cst_188 = arith.constant 1.000000e+00 : f32
    %359 = vector.broadcast %cst_188 : f32 to vector<7x32xf32>
    %360 = arith.addf %359, %358 : vector<7x32xf32>
    %cst_189 = arith.constant 1.000000e+00 : f32
    %361 = vector.broadcast %cst_189 : f32 to vector<7x32xf32>
    %362 = arith.divf %361, %360 : vector<7x32xf32>
    %c9 = arith.constant 9 : index
    %c0_190 = arith.constant 0 : index
    %c0_191 = arith.constant 0 : index
    %363 = vector.load %arg10[%c9, %c0_190, %c0_191] : memref<20x7x32xf32, #tpu.memory_space<vmem>>, vector<1x7x32xf32>
    %364 = vector.shape_cast %363 : vector<1x7x32xf32> to vector<7x32xf32>
    %365 = arith.subf %362, %364 : vector<7x32xf32>
    %cst_192 = arith.constant 0.000000e+00 : f32
    %366 = vector.broadcast %cst_192 : f32 to vector<7x32xf32>
    %367 = arith.cmpf ogt, %365, %366 : vector<7x32xf32>
    %368 = arith.extui %367 : vector<7x32xi1> to vector<7x32xi32>
    %369 = arith.sitofp %368 : vector<7x32xi32> to vector<7x32xf32>
    %cst_193 = arith.constant dense<0.000000e+00> : vector<7x8xf32>
    %370 = tpu.matmul %369, %0, %cst_193 {dimension_numbers = #tpu.dot_dimension_numbers<[1], [0], [0], [1], [0, 0, 1, 1], [], []>} : vector<7x32xf32>, vector<32x8xf32>, vector<7x8xf32> -> vector<7x8xf32>
    %371 = arith.addf %370, %63 : vector<7x8xf32>
    %cst_194 = arith.constant 0.000000e+00 : f32
    %372 = vector.broadcast %cst_194 : f32 to vector<7x8xf32>
    %373 = arith.subf %372, %371 : vector<7x8xf32>
    %374 = math.exp %373 : vector<7x8xf32>
    %cst_195 = arith.constant 1.000000e+00 : f32
    %375 = vector.broadcast %cst_195 : f32 to vector<7x8xf32>
    %376 = arith.addf %375, %374 : vector<7x8xf32>
    %cst_196 = arith.constant 1.000000e+00 : f32
    %377 = vector.broadcast %cst_196 : f32 to vector<7x8xf32>
    %378 = arith.divf %377, %376 : vector<7x8xf32>
    %c9_197 = arith.constant 9 : index
    %c0_198 = arith.constant 0 : index
    %c0_199 = arith.constant 0 : index
    %379 = vector.load %arg11[%c9_197, %c0_198, %c0_199] : memref<20x7x8xf32, #tpu.memory_space<vmem>>, vector<1x7x8xf32>
    %380 = vector.shape_cast %379 : vector<1x7x8xf32> to vector<7x8xf32>
    %381 = arith.subf %378, %380 : vector<7x8xf32>
    %cst_200 = arith.constant 0.000000e+00 : f32
    %382 = vector.broadcast %cst_200 : f32 to vector<7x8xf32>
    %383 = arith.cmpf ogt, %381, %382 : vector<7x8xf32>
    %384 = arith.extui %383 : vector<7x8xi1> to vector<7x8xi32>
    %385 = arith.sitofp %384 : vector<7x8xi32> to vector<7x8xf32>
    %cst_201 = arith.constant dense<0.000000e+00> : vector<7x32xf32>
    %386 = tpu.matmul %385, %1, %cst_201 {dimension_numbers = #tpu.dot_dimension_numbers<[1], [0], [0], [1], [0, 0, 1, 1], [], []>} : vector<7x8xf32>, vector<8x32xf32>, vector<7x32xf32> -> vector<7x32xf32>
    %387 = arith.addf %386, %60 : vector<7x32xf32>
    %cst_202 = arith.constant 0.000000e+00 : f32
    %388 = vector.broadcast %cst_202 : f32 to vector<7x32xf32>
    %389 = arith.subf %388, %387 : vector<7x32xf32>
    %390 = math.exp %389 : vector<7x32xf32>
    %cst_203 = arith.constant 1.000000e+00 : f32
    %391 = vector.broadcast %cst_203 : f32 to vector<7x32xf32>
    %392 = arith.addf %391, %390 : vector<7x32xf32>
    %cst_204 = arith.constant 1.000000e+00 : f32
    %393 = vector.broadcast %cst_204 : f32 to vector<7x32xf32>
    %394 = arith.divf %393, %392 : vector<7x32xf32>
    %c10 = arith.constant 10 : index
    %c0_205 = arith.constant 0 : index
    %c0_206 = arith.constant 0 : index
    %395 = vector.load %arg10[%c10, %c0_205, %c0_206] : memref<20x7x32xf32, #tpu.memory_space<vmem>>, vector<1x7x32xf32>
    %396 = vector.shape_cast %395 : vector<1x7x32xf32> to vector<7x32xf32>
    %397 = arith.subf %394, %396 : vector<7x32xf32>
    %cst_207 = arith.constant 0.000000e+00 : f32
    %398 = vector.broadcast %cst_207 : f32 to vector<7x32xf32>
    %399 = arith.cmpf ogt, %397, %398 : vector<7x32xf32>
    %400 = arith.extui %399 : vector<7x32xi1> to vector<7x32xi32>
    %401 = arith.sitofp %400 : vector<7x32xi32> to vector<7x32xf32>
    %cst_208 = arith.constant dense<0.000000e+00> : vector<7x8xf32>
    %402 = tpu.matmul %401, %0, %cst_208 {dimension_numbers = #tpu.dot_dimension_numbers<[1], [0], [0], [1], [0, 0, 1, 1], [], []>} : vector<7x32xf32>, vector<32x8xf32>, vector<7x8xf32> -> vector<7x8xf32>
    %403 = arith.addf %402, %63 : vector<7x8xf32>
    %cst_209 = arith.constant 0.000000e+00 : f32
    %404 = vector.broadcast %cst_209 : f32 to vector<7x8xf32>
    %405 = arith.subf %404, %403 : vector<7x8xf32>
    %406 = math.exp %405 : vector<7x8xf32>
    %cst_210 = arith.constant 1.000000e+00 : f32
    %407 = vector.broadcast %cst_210 : f32 to vector<7x8xf32>
    %408 = arith.addf %407, %406 : vector<7x8xf32>
    %cst_211 = arith.constant 1.000000e+00 : f32
    %409 = vector.broadcast %cst_211 : f32 to vector<7x8xf32>
    %410 = arith.divf %409, %408 : vector<7x8xf32>
    %c10_212 = arith.constant 10 : index
    %c0_213 = arith.constant 0 : index
    %c0_214 = arith.constant 0 : index
    %411 = vector.load %arg11[%c10_212, %c0_213, %c0_214] : memref<20x7x8xf32, #tpu.memory_space<vmem>>, vector<1x7x8xf32>
    %412 = vector.shape_cast %411 : vector<1x7x8xf32> to vector<7x8xf32>
    %413 = arith.subf %410, %412 : vector<7x8xf32>
    %cst_215 = arith.constant 0.000000e+00 : f32
    %414 = vector.broadcast %cst_215 : f32 to vector<7x8xf32>
    %415 = arith.cmpf ogt, %413, %414 : vector<7x8xf32>
    %416 = arith.extui %415 : vector<7x8xi1> to vector<7x8xi32>
    %417 = arith.sitofp %416 : vector<7x8xi32> to vector<7x8xf32>
    %cst_216 = arith.constant dense<0.000000e+00> : vector<7x32xf32>
    %418 = tpu.matmul %417, %1, %cst_216 {dimension_numbers = #tpu.dot_dimension_numbers<[1], [0], [0], [1], [0, 0, 1, 1], [], []>} : vector<7x8xf32>, vector<8x32xf32>, vector<7x32xf32> -> vector<7x32xf32>
    %419 = arith.addf %418, %60 : vector<7x32xf32>
    %cst_217 = arith.constant 0.000000e+00 : f32
    %420 = vector.broadcast %cst_217 : f32 to vector<7x32xf32>
    %421 = arith.subf %420, %419 : vector<7x32xf32>
    %422 = math.exp %421 : vector<7x32xf32>
    %cst_218 = arith.constant 1.000000e+00 : f32
    %423 = vector.broadcast %cst_218 : f32 to vector<7x32xf32>
    %424 = arith.addf %423, %422 : vector<7x32xf32>
    %cst_219 = arith.constant 1.000000e+00 : f32
    %425 = vector.broadcast %cst_219 : f32 to vector<7x32xf32>
    %426 = arith.divf %425, %424 : vector<7x32xf32>
    %c11 = arith.constant 11 : index
    %c0_220 = arith.constant 0 : index
    %c0_221 = arith.constant 0 : index
    %427 = vector.load %arg10[%c11, %c0_220, %c0_221] : memref<20x7x32xf32, #tpu.memory_space<vmem>>, vector<1x7x32xf32>
    %428 = vector.shape_cast %427 : vector<1x7x32xf32> to vector<7x32xf32>
    %429 = arith.subf %426, %428 : vector<7x32xf32>
    %cst_222 = arith.constant 0.000000e+00 : f32
    %430 = vector.broadcast %cst_222 : f32 to vector<7x32xf32>
    %431 = arith.cmpf ogt, %429, %430 : vector<7x32xf32>
    %432 = arith.extui %431 : vector<7x32xi1> to vector<7x32xi32>
    %433 = arith.sitofp %432 : vector<7x32xi32> to vector<7x32xf32>
    %cst_223 = arith.constant dense<0.000000e+00> : vector<7x8xf32>
    %434 = tpu.matmul %433, %0, %cst_223 {dimension_numbers = #tpu.dot_dimension_numbers<[1], [0], [0], [1], [0, 0, 1, 1], [], []>} : vector<7x32xf32>, vector<32x8xf32>, vector<7x8xf32> -> vector<7x8xf32>
    %435 = arith.addf %434, %63 : vector<7x8xf32>
    %cst_224 = arith.constant 0.000000e+00 : f32
    %436 = vector.broadcast %cst_224 : f32 to vector<7x8xf32>
    %437 = arith.subf %436, %435 : vector<7x8xf32>
    %438 = math.exp %437 : vector<7x8xf32>
    %cst_225 = arith.constant 1.000000e+00 : f32
    %439 = vector.broadcast %cst_225 : f32 to vector<7x8xf32>
    %440 = arith.addf %439, %438 : vector<7x8xf32>
    %cst_226 = arith.constant 1.000000e+00 : f32
    %441 = vector.broadcast %cst_226 : f32 to vector<7x8xf32>
    %442 = arith.divf %441, %440 : vector<7x8xf32>
    %c11_227 = arith.constant 11 : index
    %c0_228 = arith.constant 0 : index
    %c0_229 = arith.constant 0 : index
    %443 = vector.load %arg11[%c11_227, %c0_228, %c0_229] : memref<20x7x8xf32, #tpu.memory_space<vmem>>, vector<1x7x8xf32>
    %444 = vector.shape_cast %443 : vector<1x7x8xf32> to vector<7x8xf32>
    %445 = arith.subf %442, %444 : vector<7x8xf32>
    %cst_230 = arith.constant 0.000000e+00 : f32
    %446 = vector.broadcast %cst_230 : f32 to vector<7x8xf32>
    %447 = arith.cmpf ogt, %445, %446 : vector<7x8xf32>
    %448 = arith.extui %447 : vector<7x8xi1> to vector<7x8xi32>
    %449 = arith.sitofp %448 : vector<7x8xi32> to vector<7x8xf32>
    %cst_231 = arith.constant dense<0.000000e+00> : vector<7x32xf32>
    %450 = tpu.matmul %449, %1, %cst_231 {dimension_numbers = #tpu.dot_dimension_numbers<[1], [0], [0], [1], [0, 0, 1, 1], [], []>} : vector<7x8xf32>, vector<8x32xf32>, vector<7x32xf32> -> vector<7x32xf32>
    %451 = arith.addf %450, %60 : vector<7x32xf32>
    %cst_232 = arith.constant 0.000000e+00 : f32
    %452 = vector.broadcast %cst_232 : f32 to vector<7x32xf32>
    %453 = arith.subf %452, %451 : vector<7x32xf32>
    %454 = math.exp %453 : vector<7x32xf32>
    %cst_233 = arith.constant 1.000000e+00 : f32
    %455 = vector.broadcast %cst_233 : f32 to vector<7x32xf32>
    %456 = arith.addf %455, %454 : vector<7x32xf32>
    %cst_234 = arith.constant 1.000000e+00 : f32
    %457 = vector.broadcast %cst_234 : f32 to vector<7x32xf32>
    %458 = arith.divf %457, %456 : vector<7x32xf32>
    %c12 = arith.constant 12 : index
    %c0_235 = arith.constant 0 : index
    %c0_236 = arith.constant 0 : index
    %459 = vector.load %arg10[%c12, %c0_235, %c0_236] : memref<20x7x32xf32, #tpu.memory_space<vmem>>, vector<1x7x32xf32>
    %460 = vector.shape_cast %459 : vector<1x7x32xf32> to vector<7x32xf32>
    %461 = arith.subf %458, %460 : vector<7x32xf32>
    %cst_237 = arith.constant 0.000000e+00 : f32
    %462 = vector.broadcast %cst_237 : f32 to vector<7x32xf32>
    %463 = arith.cmpf ogt, %461, %462 : vector<7x32xf32>
    %464 = arith.extui %463 : vector<7x32xi1> to vector<7x32xi32>
    %465 = arith.sitofp %464 : vector<7x32xi32> to vector<7x32xf32>
    %cst_238 = arith.constant dense<0.000000e+00> : vector<7x8xf32>
    %466 = tpu.matmul %465, %0, %cst_238 {dimension_numbers = #tpu.dot_dimension_numbers<[1], [0], [0], [1], [0, 0, 1, 1], [], []>} : vector<7x32xf32>, vector<32x8xf32>, vector<7x8xf32> -> vector<7x8xf32>
    %467 = arith.addf %466, %63 : vector<7x8xf32>
    %cst_239 = arith.constant 0.000000e+00 : f32
    %468 = vector.broadcast %cst_239 : f32 to vector<7x8xf32>
    %469 = arith.subf %468, %467 : vector<7x8xf32>
    %470 = math.exp %469 : vector<7x8xf32>
    %cst_240 = arith.constant 1.000000e+00 : f32
    %471 = vector.broadcast %cst_240 : f32 to vector<7x8xf32>
    %472 = arith.addf %471, %470 : vector<7x8xf32>
    %cst_241 = arith.constant 1.000000e+00 : f32
    %473 = vector.broadcast %cst_241 : f32 to vector<7x8xf32>
    %474 = arith.divf %473, %472 : vector<7x8xf32>
    %c12_242 = arith.constant 12 : index
    %c0_243 = arith.constant 0 : index
    %c0_244 = arith.constant 0 : index
    %475 = vector.load %arg11[%c12_242, %c0_243, %c0_244] : memref<20x7x8xf32, #tpu.memory_space<vmem>>, vector<1x7x8xf32>
    %476 = vector.shape_cast %475 : vector<1x7x8xf32> to vector<7x8xf32>
    %477 = arith.subf %474, %476 : vector<7x8xf32>
    %cst_245 = arith.constant 0.000000e+00 : f32
    %478 = vector.broadcast %cst_245 : f32 to vector<7x8xf32>
    %479 = arith.cmpf ogt, %477, %478 : vector<7x8xf32>
    %480 = arith.extui %479 : vector<7x8xi1> to vector<7x8xi32>
    %481 = arith.sitofp %480 : vector<7x8xi32> to vector<7x8xf32>
    %cst_246 = arith.constant dense<0.000000e+00> : vector<7x32xf32>
    %482 = tpu.matmul %481, %1, %cst_246 {dimension_numbers = #tpu.dot_dimension_numbers<[1], [0], [0], [1], [0, 0, 1, 1], [], []>} : vector<7x8xf32>, vector<8x32xf32>, vector<7x32xf32> -> vector<7x32xf32>
    %483 = arith.addf %482, %60 : vector<7x32xf32>
    %cst_247 = arith.constant 0.000000e+00 : f32
    %484 = vector.broadcast %cst_247 : f32 to vector<7x32xf32>
    %485 = arith.subf %484, %483 : vector<7x32xf32>
    %486 = math.exp %485 : vector<7x32xf32>
    %cst_248 = arith.constant 1.000000e+00 : f32
    %487 = vector.broadcast %cst_248 : f32 to vector<7x32xf32>
    %488 = arith.addf %487, %486 : vector<7x32xf32>
    %cst_249 = arith.constant 1.000000e+00 : f32
    %489 = vector.broadcast %cst_249 : f32 to vector<7x32xf32>
    %490 = arith.divf %489, %488 : vector<7x32xf32>
    %c13 = arith.constant 13 : index
    %c0_250 = arith.constant 0 : index
    %c0_251 = arith.constant 0 : index
    %491 = vector.load %arg10[%c13, %c0_250, %c0_251] : memref<20x7x32xf32, #tpu.memory_space<vmem>>, vector<1x7x32xf32>
    %492 = vector.shape_cast %491 : vector<1x7x32xf32> to vector<7x32xf32>
    %493 = arith.subf %490, %492 : vector<7x32xf32>
    %cst_252 = arith.constant 0.000000e+00 : f32
    %494 = vector.broadcast %cst_252 : f32 to vector<7x32xf32>
    %495 = arith.cmpf ogt, %493, %494 : vector<7x32xf32>
    %496 = arith.extui %495 : vector<7x32xi1> to vector<7x32xi32>
    %497 = arith.sitofp %496 : vector<7x32xi32> to vector<7x32xf32>
    %cst_253 = arith.constant dense<0.000000e+00> : vector<7x8xf32>
    %498 = tpu.matmul %497, %0, %cst_253 {dimension_numbers = #tpu.dot_dimension_numbers<[1], [0], [0], [1], [0, 0, 1, 1], [], []>} : vector<7x32xf32>, vector<32x8xf32>, vector<7x8xf32> -> vector<7x8xf32>
    %499 = arith.addf %498, %63 : vector<7x8xf32>
    %cst_254 = arith.constant 0.000000e+00 : f32
    %500 = vector.broadcast %cst_254 : f32 to vector<7x8xf32>
    %501 = arith.subf %500, %499 : vector<7x8xf32>
    %502 = math.exp %501 : vector<7x8xf32>
    %cst_255 = arith.constant 1.000000e+00 : f32
    %503 = vector.broadcast %cst_255 : f32 to vector<7x8xf32>
    %504 = arith.addf %503, %502 : vector<7x8xf32>
    %cst_256 = arith.constant 1.000000e+00 : f32
    %505 = vector.broadcast %cst_256 : f32 to vector<7x8xf32>
    %506 = arith.divf %505, %504 : vector<7x8xf32>
    %c13_257 = arith.constant 13 : index
    %c0_258 = arith.constant 0 : index
    %c0_259 = arith.constant 0 : index
    %507 = vector.load %arg11[%c13_257, %c0_258, %c0_259] : memref<20x7x8xf32, #tpu.memory_space<vmem>>, vector<1x7x8xf32>
    %508 = vector.shape_cast %507 : vector<1x7x8xf32> to vector<7x8xf32>
    %509 = arith.subf %506, %508 : vector<7x8xf32>
    %cst_260 = arith.constant 0.000000e+00 : f32
    %510 = vector.broadcast %cst_260 : f32 to vector<7x8xf32>
    %511 = arith.cmpf ogt, %509, %510 : vector<7x8xf32>
    %512 = arith.extui %511 : vector<7x8xi1> to vector<7x8xi32>
    %513 = arith.sitofp %512 : vector<7x8xi32> to vector<7x8xf32>
    %cst_261 = arith.constant dense<0.000000e+00> : vector<7x32xf32>
    %514 = tpu.matmul %513, %1, %cst_261 {dimension_numbers = #tpu.dot_dimension_numbers<[1], [0], [0], [1], [0, 0, 1, 1], [], []>} : vector<7x8xf32>, vector<8x32xf32>, vector<7x32xf32> -> vector<7x32xf32>
    %515 = arith.addf %514, %60 : vector<7x32xf32>
    %cst_262 = arith.constant 0.000000e+00 : f32
    %516 = vector.broadcast %cst_262 : f32 to vector<7x32xf32>
    %517 = arith.subf %516, %515 : vector<7x32xf32>
    %518 = math.exp %517 : vector<7x32xf32>
    %cst_263 = arith.constant 1.000000e+00 : f32
    %519 = vector.broadcast %cst_263 : f32 to vector<7x32xf32>
    %520 = arith.addf %519, %518 : vector<7x32xf32>
    %cst_264 = arith.constant 1.000000e+00 : f32
    %521 = vector.broadcast %cst_264 : f32 to vector<7x32xf32>
    %522 = arith.divf %521, %520 : vector<7x32xf32>
    %c14 = arith.constant 14 : index
    %c0_265 = arith.constant 0 : index
    %c0_266 = arith.constant 0 : index
    %523 = vector.load %arg10[%c14, %c0_265, %c0_266] : memref<20x7x32xf32, #tpu.memory_space<vmem>>, vector<1x7x32xf32>
    %524 = vector.shape_cast %523 : vector<1x7x32xf32> to vector<7x32xf32>
    %525 = arith.subf %522, %524 : vector<7x32xf32>
    %cst_267 = arith.constant 0.000000e+00 : f32
    %526 = vector.broadcast %cst_267 : f32 to vector<7x32xf32>
    %527 = arith.cmpf ogt, %525, %526 : vector<7x32xf32>
    %528 = arith.extui %527 : vector<7x32xi1> to vector<7x32xi32>
    %529 = arith.sitofp %528 : vector<7x32xi32> to vector<7x32xf32>
    %cst_268 = arith.constant dense<0.000000e+00> : vector<7x8xf32>
    %530 = tpu.matmul %529, %0, %cst_268 {dimension_numbers = #tpu.dot_dimension_numbers<[1], [0], [0], [1], [0, 0, 1, 1], [], []>} : vector<7x32xf32>, vector<32x8xf32>, vector<7x8xf32> -> vector<7x8xf32>
    %531 = arith.addf %530, %63 : vector<7x8xf32>
    %cst_269 = arith.constant 0.000000e+00 : f32
    %532 = vector.broadcast %cst_269 : f32 to vector<7x8xf32>
    %533 = arith.subf %532, %531 : vector<7x8xf32>
    %534 = math.exp %533 : vector<7x8xf32>
    %cst_270 = arith.constant 1.000000e+00 : f32
    %535 = vector.broadcast %cst_270 : f32 to vector<7x8xf32>
    %536 = arith.addf %535, %534 : vector<7x8xf32>
    %cst_271 = arith.constant 1.000000e+00 : f32
    %537 = vector.broadcast %cst_271 : f32 to vector<7x8xf32>
    %538 = arith.divf %537, %536 : vector<7x8xf32>
    %c14_272 = arith.constant 14 : index
    %c0_273 = arith.constant 0 : index
    %c0_274 = arith.constant 0 : index
    %539 = vector.load %arg11[%c14_272, %c0_273, %c0_274] : memref<20x7x8xf32, #tpu.memory_space<vmem>>, vector<1x7x8xf32>
    %540 = vector.shape_cast %539 : vector<1x7x8xf32> to vector<7x8xf32>
    %541 = arith.subf %538, %540 : vector<7x8xf32>
    %cst_275 = arith.constant 0.000000e+00 : f32
    %542 = vector.broadcast %cst_275 : f32 to vector<7x8xf32>
    %543 = arith.cmpf ogt, %541, %542 : vector<7x8xf32>
    %544 = arith.extui %543 : vector<7x8xi1> to vector<7x8xi32>
    %545 = arith.sitofp %544 : vector<7x8xi32> to vector<7x8xf32>
    %cst_276 = arith.constant dense<0.000000e+00> : vector<7x32xf32>
    %546 = tpu.matmul %545, %1, %cst_276 {dimension_numbers = #tpu.dot_dimension_numbers<[1], [0], [0], [1], [0, 0, 1, 1], [], []>} : vector<7x8xf32>, vector<8x32xf32>, vector<7x32xf32> -> vector<7x32xf32>
    %547 = arith.addf %546, %60 : vector<7x32xf32>
    %cst_277 = arith.constant 0.000000e+00 : f32
    %548 = vector.broadcast %cst_277 : f32 to vector<7x32xf32>
    %549 = arith.subf %548, %547 : vector<7x32xf32>
    %550 = math.exp %549 : vector<7x32xf32>
    %cst_278 = arith.constant 1.000000e+00 : f32
    %551 = vector.broadcast %cst_278 : f32 to vector<7x32xf32>
    %552 = arith.addf %551, %550 : vector<7x32xf32>
    %cst_279 = arith.constant 1.000000e+00 : f32
    %553 = vector.broadcast %cst_279 : f32 to vector<7x32xf32>
    %554 = arith.divf %553, %552 : vector<7x32xf32>
    %c15 = arith.constant 15 : index
    %c0_280 = arith.constant 0 : index
    %c0_281 = arith.constant 0 : index
    %555 = vector.load %arg10[%c15, %c0_280, %c0_281] : memref<20x7x32xf32, #tpu.memory_space<vmem>>, vector<1x7x32xf32>
    %556 = vector.shape_cast %555 : vector<1x7x32xf32> to vector<7x32xf32>
    %557 = arith.subf %554, %556 : vector<7x32xf32>
    %cst_282 = arith.constant 0.000000e+00 : f32
    %558 = vector.broadcast %cst_282 : f32 to vector<7x32xf32>
    %559 = arith.cmpf ogt, %557, %558 : vector<7x32xf32>
    %560 = arith.extui %559 : vector<7x32xi1> to vector<7x32xi32>
    %561 = arith.sitofp %560 : vector<7x32xi32> to vector<7x32xf32>
    %cst_283 = arith.constant dense<0.000000e+00> : vector<7x8xf32>
    %562 = tpu.matmul %561, %0, %cst_283 {dimension_numbers = #tpu.dot_dimension_numbers<[1], [0], [0], [1], [0, 0, 1, 1], [], []>} : vector<7x32xf32>, vector<32x8xf32>, vector<7x8xf32> -> vector<7x8xf32>
    %563 = arith.addf %562, %63 : vector<7x8xf32>
    %cst_284 = arith.constant 0.000000e+00 : f32
    %564 = vector.broadcast %cst_284 : f32 to vector<7x8xf32>
    %565 = arith.subf %564, %563 : vector<7x8xf32>
    %566 = math.exp %565 : vector<7x8xf32>
    %cst_285 = arith.constant 1.000000e+00 : f32
    %567 = vector.broadcast %cst_285 : f32 to vector<7x8xf32>
    %568 = arith.addf %567, %566 : vector<7x8xf32>
    %cst_286 = arith.constant 1.000000e+00 : f32
    %569 = vector.broadcast %cst_286 : f32 to vector<7x8xf32>
    %570 = arith.divf %569, %568 : vector<7x8xf32>
    %c15_287 = arith.constant 15 : index
    %c0_288 = arith.constant 0 : index
    %c0_289 = arith.constant 0 : index
    %571 = vector.load %arg11[%c15_287, %c0_288, %c0_289] : memref<20x7x8xf32, #tpu.memory_space<vmem>>, vector<1x7x8xf32>
    %572 = vector.shape_cast %571 : vector<1x7x8xf32> to vector<7x8xf32>
    %573 = arith.subf %570, %572 : vector<7x8xf32>
    %cst_290 = arith.constant 0.000000e+00 : f32
    %574 = vector.broadcast %cst_290 : f32 to vector<7x8xf32>
    %575 = arith.cmpf ogt, %573, %574 : vector<7x8xf32>
    %576 = arith.extui %575 : vector<7x8xi1> to vector<7x8xi32>
    %577 = arith.sitofp %576 : vector<7x8xi32> to vector<7x8xf32>
    %cst_291 = arith.constant dense<0.000000e+00> : vector<7x32xf32>
    %578 = tpu.matmul %577, %1, %cst_291 {dimension_numbers = #tpu.dot_dimension_numbers<[1], [0], [0], [1], [0, 0, 1, 1], [], []>} : vector<7x8xf32>, vector<8x32xf32>, vector<7x32xf32> -> vector<7x32xf32>
    %579 = arith.addf %578, %60 : vector<7x32xf32>
    %cst_292 = arith.constant 0.000000e+00 : f32
    %580 = vector.broadcast %cst_292 : f32 to vector<7x32xf32>
    %581 = arith.subf %580, %579 : vector<7x32xf32>
    %582 = math.exp %581 : vector<7x32xf32>
    %cst_293 = arith.constant 1.000000e+00 : f32
    %583 = vector.broadcast %cst_293 : f32 to vector<7x32xf32>
    %584 = arith.addf %583, %582 : vector<7x32xf32>
    %cst_294 = arith.constant 1.000000e+00 : f32
    %585 = vector.broadcast %cst_294 : f32 to vector<7x32xf32>
    %586 = arith.divf %585, %584 : vector<7x32xf32>
    %c16 = arith.constant 16 : index
    %c0_295 = arith.constant 0 : index
    %c0_296 = arith.constant 0 : index
    %587 = vector.load %arg10[%c16, %c0_295, %c0_296] : memref<20x7x32xf32, #tpu.memory_space<vmem>>, vector<1x7x32xf32>
    %588 = vector.shape_cast %587 : vector<1x7x32xf32> to vector<7x32xf32>
    %589 = arith.subf %586, %588 : vector<7x32xf32>
    %cst_297 = arith.constant 0.000000e+00 : f32
    %590 = vector.broadcast %cst_297 : f32 to vector<7x32xf32>
    %591 = arith.cmpf ogt, %589, %590 : vector<7x32xf32>
    %592 = arith.extui %591 : vector<7x32xi1> to vector<7x32xi32>
    %593 = arith.sitofp %592 : vector<7x32xi32> to vector<7x32xf32>
    %cst_298 = arith.constant dense<0.000000e+00> : vector<7x8xf32>
    %594 = tpu.matmul %593, %0, %cst_298 {dimension_numbers = #tpu.dot_dimension_numbers<[1], [0], [0], [1], [0, 0, 1, 1], [], []>} : vector<7x32xf32>, vector<32x8xf32>, vector<7x8xf32> -> vector<7x8xf32>
    %595 = arith.addf %594, %63 : vector<7x8xf32>
    %cst_299 = arith.constant 0.000000e+00 : f32
    %596 = vector.broadcast %cst_299 : f32 to vector<7x8xf32>
    %597 = arith.subf %596, %595 : vector<7x8xf32>
    %598 = math.exp %597 : vector<7x8xf32>
    %cst_300 = arith.constant 1.000000e+00 : f32
    %599 = vector.broadcast %cst_300 : f32 to vector<7x8xf32>
    %600 = arith.addf %599, %598 : vector<7x8xf32>
    %cst_301 = arith.constant 1.000000e+00 : f32
    %601 = vector.broadcast %cst_301 : f32 to vector<7x8xf32>
    %602 = arith.divf %601, %600 : vector<7x8xf32>
    %c16_302 = arith.constant 16 : index
    %c0_303 = arith.constant 0 : index
    %c0_304 = arith.constant 0 : index
    %603 = vector.load %arg11[%c16_302, %c0_303, %c0_304] : memref<20x7x8xf32, #tpu.memory_space<vmem>>, vector<1x7x8xf32>
    %604 = vector.shape_cast %603 : vector<1x7x8xf32> to vector<7x8xf32>
    %605 = arith.subf %602, %604 : vector<7x8xf32>
    %cst_305 = arith.constant 0.000000e+00 : f32
    %606 = vector.broadcast %cst_305 : f32 to vector<7x8xf32>
    %607 = arith.cmpf ogt, %605, %606 : vector<7x8xf32>
    %608 = arith.extui %607 : vector<7x8xi1> to vector<7x8xi32>
    %609 = arith.sitofp %608 : vector<7x8xi32> to vector<7x8xf32>
    %cst_306 = arith.constant dense<0.000000e+00> : vector<7x32xf32>
    %610 = tpu.matmul %609, %1, %cst_306 {dimension_numbers = #tpu.dot_dimension_numbers<[1], [0], [0], [1], [0, 0, 1, 1], [], []>} : vector<7x8xf32>, vector<8x32xf32>, vector<7x32xf32> -> vector<7x32xf32>
    %611 = arith.addf %610, %60 : vector<7x32xf32>
    %cst_307 = arith.constant 0.000000e+00 : f32
    %612 = vector.broadcast %cst_307 : f32 to vector<7x32xf32>
    %613 = arith.subf %612, %611 : vector<7x32xf32>
    %614 = math.exp %613 : vector<7x32xf32>
    %cst_308 = arith.constant 1.000000e+00 : f32
    %615 = vector.broadcast %cst_308 : f32 to vector<7x32xf32>
    %616 = arith.addf %615, %614 : vector<7x32xf32>
    %cst_309 = arith.constant 1.000000e+00 : f32
    %617 = vector.broadcast %cst_309 : f32 to vector<7x32xf32>
    %618 = arith.divf %617, %616 : vector<7x32xf32>
    %c17 = arith.constant 17 : index
    %c0_310 = arith.constant 0 : index
    %c0_311 = arith.constant 0 : index
    %619 = vector.load %arg10[%c17, %c0_310, %c0_311] : memref<20x7x32xf32, #tpu.memory_space<vmem>>, vector<1x7x32xf32>
    %620 = vector.shape_cast %619 : vector<1x7x32xf32> to vector<7x32xf32>
    %621 = arith.subf %618, %620 : vector<7x32xf32>
    %cst_312 = arith.constant 0.000000e+00 : f32
    %622 = vector.broadcast %cst_312 : f32 to vector<7x32xf32>
    %623 = arith.cmpf ogt, %621, %622 : vector<7x32xf32>
    %624 = arith.extui %623 : vector<7x32xi1> to vector<7x32xi32>
    %625 = arith.sitofp %624 : vector<7x32xi32> to vector<7x32xf32>
    %cst_313 = arith.constant dense<0.000000e+00> : vector<7x8xf32>
    %626 = tpu.matmul %625, %0, %cst_313 {dimension_numbers = #tpu.dot_dimension_numbers<[1], [0], [0], [1], [0, 0, 1, 1], [], []>} : vector<7x32xf32>, vector<32x8xf32>, vector<7x8xf32> -> vector<7x8xf32>
    %627 = arith.addf %626, %63 : vector<7x8xf32>
    %cst_314 = arith.constant 0.000000e+00 : f32
    %628 = vector.broadcast %cst_314 : f32 to vector<7x8xf32>
    %629 = arith.subf %628, %627 : vector<7x8xf32>
    %630 = math.exp %629 : vector<7x8xf32>
    %cst_315 = arith.constant 1.000000e+00 : f32
    %631 = vector.broadcast %cst_315 : f32 to vector<7x8xf32>
    %632 = arith.addf %631, %630 : vector<7x8xf32>
    %cst_316 = arith.constant 1.000000e+00 : f32
    %633 = vector.broadcast %cst_316 : f32 to vector<7x8xf32>
    %634 = arith.divf %633, %632 : vector<7x8xf32>
    %c17_317 = arith.constant 17 : index
    %c0_318 = arith.constant 0 : index
    %c0_319 = arith.constant 0 : index
    %635 = vector.load %arg11[%c17_317, %c0_318, %c0_319] : memref<20x7x8xf32, #tpu.memory_space<vmem>>, vector<1x7x8xf32>
    %636 = vector.shape_cast %635 : vector<1x7x8xf32> to vector<7x8xf32>
    %637 = arith.subf %634, %636 : vector<7x8xf32>
    %cst_320 = arith.constant 0.000000e+00 : f32
    %638 = vector.broadcast %cst_320 : f32 to vector<7x8xf32>
    %639 = arith.cmpf ogt, %637, %638 : vector<7x8xf32>
    %640 = arith.extui %639 : vector<7x8xi1> to vector<7x8xi32>
    %641 = arith.sitofp %640 : vector<7x8xi32> to vector<7x8xf32>
    %cst_321 = arith.constant dense<0.000000e+00> : vector<7x32xf32>
    %642 = tpu.matmul %641, %1, %cst_321 {dimension_numbers = #tpu.dot_dimension_numbers<[1], [0], [0], [1], [0, 0, 1, 1], [], []>} : vector<7x8xf32>, vector<8x32xf32>, vector<7x32xf32> -> vector<7x32xf32>
    %643 = arith.addf %642, %60 : vector<7x32xf32>
    %cst_322 = arith.constant 0.000000e+00 : f32
    %644 = vector.broadcast %cst_322 : f32 to vector<7x32xf32>
    %645 = arith.subf %644, %643 : vector<7x32xf32>
    %646 = math.exp %645 : vector<7x32xf32>
    %cst_323 = arith.constant 1.000000e+00 : f32
    %647 = vector.broadcast %cst_323 : f32 to vector<7x32xf32>
    %648 = arith.addf %647, %646 : vector<7x32xf32>
    %cst_324 = arith.constant 1.000000e+00 : f32
    %649 = vector.broadcast %cst_324 : f32 to vector<7x32xf32>
    %650 = arith.divf %649, %648 : vector<7x32xf32>
    %c18 = arith.constant 18 : index
    %c0_325 = arith.constant 0 : index
    %c0_326 = arith.constant 0 : index
    %651 = vector.load %arg10[%c18, %c0_325, %c0_326] : memref<20x7x32xf32, #tpu.memory_space<vmem>>, vector<1x7x32xf32>
    %652 = vector.shape_cast %651 : vector<1x7x32xf32> to vector<7x32xf32>
    %653 = arith.subf %650, %652 : vector<7x32xf32>
    %cst_327 = arith.constant 0.000000e+00 : f32
    %654 = vector.broadcast %cst_327 : f32 to vector<7x32xf32>
    %655 = arith.cmpf ogt, %653, %654 : vector<7x32xf32>
    %656 = arith.extui %655 : vector<7x32xi1> to vector<7x32xi32>
    %657 = arith.sitofp %656 : vector<7x32xi32> to vector<7x32xf32>
    %cst_328 = arith.constant dense<0.000000e+00> : vector<7x8xf32>
    %658 = tpu.matmul %657, %0, %cst_328 {dimension_numbers = #tpu.dot_dimension_numbers<[1], [0], [0], [1], [0, 0, 1, 1], [], []>} : vector<7x32xf32>, vector<32x8xf32>, vector<7x8xf32> -> vector<7x8xf32>
    %659 = arith.addf %658, %63 : vector<7x8xf32>
    %cst_329 = arith.constant 0.000000e+00 : f32
    %660 = vector.broadcast %cst_329 : f32 to vector<7x8xf32>
    %661 = arith.subf %660, %659 : vector<7x8xf32>
    %662 = math.exp %661 : vector<7x8xf32>
    %cst_330 = arith.constant 1.000000e+00 : f32
    %663 = vector.broadcast %cst_330 : f32 to vector<7x8xf32>
    %664 = arith.addf %663, %662 : vector<7x8xf32>
    %cst_331 = arith.constant 1.000000e+00 : f32
    %665 = vector.broadcast %cst_331 : f32 to vector<7x8xf32>
    %666 = arith.divf %665, %664 : vector<7x8xf32>
    %c18_332 = arith.constant 18 : index
    %c0_333 = arith.constant 0 : index
    %c0_334 = arith.constant 0 : index
    %667 = vector.load %arg11[%c18_332, %c0_333, %c0_334] : memref<20x7x8xf32, #tpu.memory_space<vmem>>, vector<1x7x8xf32>
    %668 = vector.shape_cast %667 : vector<1x7x8xf32> to vector<7x8xf32>
    %669 = arith.subf %666, %668 : vector<7x8xf32>
    %cst_335 = arith.constant 0.000000e+00 : f32
    %670 = vector.broadcast %cst_335 : f32 to vector<7x8xf32>
    %671 = arith.cmpf ogt, %669, %670 : vector<7x8xf32>
    %672 = arith.extui %671 : vector<7x8xi1> to vector<7x8xi32>
    %673 = arith.sitofp %672 : vector<7x8xi32> to vector<7x8xf32>
    %cst_336 = arith.constant dense<0.000000e+00> : vector<7x32xf32>
    %674 = tpu.matmul %673, %1, %cst_336 {dimension_numbers = #tpu.dot_dimension_numbers<[1], [0], [0], [1], [0, 0, 1, 1], [], []>} : vector<7x8xf32>, vector<8x32xf32>, vector<7x32xf32> -> vector<7x32xf32>
    %675 = arith.addf %674, %60 : vector<7x32xf32>
    %cst_337 = arith.constant 0.000000e+00 : f32
    %676 = vector.broadcast %cst_337 : f32 to vector<7x32xf32>
    %677 = arith.subf %676, %675 : vector<7x32xf32>
    %678 = math.exp %677 : vector<7x32xf32>
    %cst_338 = arith.constant 1.000000e+00 : f32
    %679 = vector.broadcast %cst_338 : f32 to vector<7x32xf32>
    %680 = arith.addf %679, %678 : vector<7x32xf32>
    %cst_339 = arith.constant 1.000000e+00 : f32
    %681 = vector.broadcast %cst_339 : f32 to vector<7x32xf32>
    %682 = arith.divf %681, %680 : vector<7x32xf32>
    %c19 = arith.constant 19 : index
    %c0_340 = arith.constant 0 : index
    %c0_341 = arith.constant 0 : index
    %683 = vector.load %arg10[%c19, %c0_340, %c0_341] : memref<20x7x32xf32, #tpu.memory_space<vmem>>, vector<1x7x32xf32>
    %684 = vector.shape_cast %683 : vector<1x7x32xf32> to vector<7x32xf32>
    %685 = arith.subf %682, %684 : vector<7x32xf32>
    %cst_342 = arith.constant 0.000000e+00 : f32
    %686 = vector.broadcast %cst_342 : f32 to vector<7x32xf32>
    %687 = arith.cmpf ogt, %685, %686 : vector<7x32xf32>
    %688 = arith.extui %687 : vector<7x32xi1> to vector<7x32xi32>
    %689 = arith.sitofp %688 : vector<7x32xi32> to vector<7x32xf32>
    %cst_343 = arith.constant dense<0.000000e+00> : vector<7x8xf32>
    %690 = tpu.matmul %689, %0, %cst_343 {dimension_numbers = #tpu.dot_dimension_numbers<[1], [0], [0], [1], [0, 0, 1, 1], [], []>} : vector<7x32xf32>, vector<32x8xf32>, vector<7x8xf32> -> vector<7x8xf32>
    %691 = arith.addf %690, %63 : vector<7x8xf32>
    %cst_344 = arith.constant 0.000000e+00 : f32
    %692 = vector.broadcast %cst_344 : f32 to vector<7x8xf32>
    %693 = arith.subf %692, %691 : vector<7x8xf32>
    %694 = math.exp %693 : vector<7x8xf32>
    %cst_345 = arith.constant 1.000000e+00 : f32
    %695 = vector.broadcast %cst_345 : f32 to vector<7x8xf32>
    %696 = arith.addf %695, %694 : vector<7x8xf32>
    %cst_346 = arith.constant 1.000000e+00 : f32
    %697 = vector.broadcast %cst_346 : f32 to vector<7x8xf32>
    %698 = arith.divf %697, %696 : vector<7x8xf32>
    %c19_347 = arith.constant 19 : index
    %c0_348 = arith.constant 0 : index
    %c0_349 = arith.constant 0 : index
    %699 = vector.load %arg11[%c19_347, %c0_348, %c0_349] : memref<20x7x8xf32, #tpu.memory_space<vmem>>, vector<1x7x8xf32>
    %700 = vector.shape_cast %699 : vector<1x7x8xf32> to vector<7x8xf32>
    %701 = arith.subf %698, %700 : vector<7x8xf32>
    %cst_350 = arith.constant 0.000000e+00 : f32
    %702 = vector.broadcast %cst_350 : f32 to vector<7x8xf32>
    %703 = arith.cmpf ogt, %701, %702 : vector<7x8xf32>
    %704 = arith.extui %703 : vector<7x8xi1> to vector<7x8xi32>
    %705 = arith.sitofp %704 : vector<7x8xi32> to vector<7x8xf32>
    %cst_351 = arith.constant dense<0.000000e+00> : vector<7x32xf32>
    %706 = tpu.matmul %705, %1, %cst_351 {dimension_numbers = #tpu.dot_dimension_numbers<[1], [0], [0], [1], [0, 0, 1, 1], [], []>} : vector<7x8xf32>, vector<8x32xf32>, vector<7x32xf32> -> vector<7x32xf32>
    %cst_352 = arith.constant dense<0.000000e+00> : vector<7x32xf32>
    %707 = tpu.matmul %64, %1, %cst_352 {dimension_numbers = #tpu.dot_dimension_numbers<[1], [0], [0], [1], [0, 0, 1, 1], [], []>} : vector<7x8xf32>, vector<8x32xf32>, vector<7x32xf32> -> vector<7x32xf32>
    %708 = vector.broadcast %7 : vector<1x32xf32> to vector<7x32xf32>
    %709 = arith.addf %706, %708 : vector<7x32xf32>
    %cst_353 = arith.constant 0.000000e+00 : f32
    %710 = vector.broadcast %cst_353 : f32 to vector<7x32xf32>
    %711 = arith.maximumf %709, %710 : vector<7x32xf32>
    %712 = math.absf %709 : vector<7x32xf32>
    %cst_354 = arith.constant 0.000000e+00 : f32
    %713 = vector.broadcast %cst_354 : f32 to vector<7x32xf32>
    %714 = arith.subf %713, %712 : vector<7x32xf32>
    %715 = math.exp %714 : vector<7x32xf32>
    %cst_355 = arith.constant 1.000000e+00 : f32
    %716 = vector.broadcast %cst_355 : f32 to vector<7x32xf32>
    %717 = arith.addf %716, %715 : vector<7x32xf32>
    %718 = math.log %717 : vector<7x32xf32>
    %719 = arith.addf %711, %718 : vector<7x32xf32>
    %cst_356 = arith.constant dense<0.000000e+00> : vector<7xf32>
    %720 = vector.multi_reduction <add>, %719, %cst_356 [1] : vector<7x32xf32> to vector<7xf32>
    %721 = vector.shape_cast %720 : vector<7xf32> to vector<7x1xf32>
    %cst_357 = arith.constant 0.000000e+00 : f32
    %722 = vector.broadcast %cst_357 : f32 to vector<7x1xf32>
    %723 = arith.subf %722, %721 : vector<7x1xf32>
    %724 = vector.broadcast %6 : vector<1x8xf32> to vector<7x8xf32>
    %725 = arith.mulf %705, %724 : vector<7x8xf32>
    %cst_358 = arith.constant dense<0.000000e+00> : vector<7xf32>
    %726 = vector.multi_reduction <add>, %725, %cst_358 [1] : vector<7x8xf32> to vector<7xf32>
    %727 = vector.shape_cast %726 : vector<7xf32> to vector<7x1xf32>
    %728 = arith.subf %723, %727 : vector<7x1xf32>
    %729 = vector.broadcast %7 : vector<1x32xf32> to vector<7x32xf32>
    %730 = arith.addf %707, %729 : vector<7x32xf32>
    %cst_359 = arith.constant 0.000000e+00 : f32
    %731 = vector.broadcast %cst_359 : f32 to vector<7x32xf32>
    %732 = arith.maximumf %730, %731 : vector<7x32xf32>
    %733 = math.absf %730 : vector<7x32xf32>
    %cst_360 = arith.constant 0.000000e+00 : f32
    %734 = vector.broadcast %cst_360 : f32 to vector<7x32xf32>
    %735 = arith.subf %734, %733 : vector<7x32xf32>
    %736 = math.exp %735 : vector<7x32xf32>
    %cst_361 = arith.constant 1.000000e+00 : f32
    %737 = vector.broadcast %cst_361 : f32 to vector<7x32xf32>
    %738 = arith.addf %737, %736 : vector<7x32xf32>
    %739 = math.log %738 : vector<7x32xf32>
    %740 = arith.addf %732, %739 : vector<7x32xf32>
    %cst_362 = arith.constant dense<0.000000e+00> : vector<7xf32>
    %741 = vector.multi_reduction <add>, %740, %cst_362 [1] : vector<7x32xf32> to vector<7xf32>
    %742 = vector.shape_cast %741 : vector<7xf32> to vector<7x1xf32>
    %cst_363 = arith.constant 0.000000e+00 : f32
    %743 = vector.broadcast %cst_363 : f32 to vector<7x1xf32>
    %744 = arith.subf %743, %742 : vector<7x1xf32>
    %745 = vector.broadcast %6 : vector<1x8xf32> to vector<7x8xf32>
    %746 = arith.mulf %64, %745 : vector<7x8xf32>
    %cst_364 = arith.constant dense<0.000000e+00> : vector<7xf32>
    %747 = vector.multi_reduction <add>, %746, %cst_364 [1] : vector<7x8xf32> to vector<7xf32>
    %748 = vector.shape_cast %747 : vector<7xf32> to vector<7x1xf32>
    %749 = arith.subf %744, %748 : vector<7x1xf32>
    %750 = arith.subf %728, %749 : vector<7x1xf32>
    %751 = arith.subf %706, %60 : vector<7x32xf32>
    %cst_365 = arith.constant 0.000000e+00 : f32
    %752 = vector.broadcast %cst_365 : f32 to vector<7x32xf32>
    %753 = arith.subf %752, %751 : vector<7x32xf32>
    %754 = math.exp %753 : vector<7x32xf32>
    %cst_366 = arith.constant 1.000000e+00 : f32
    %755 = vector.broadcast %cst_366 : f32 to vector<7x32xf32>
    %756 = arith.addf %755, %754 : vector<7x32xf32>
    %cst_367 = arith.constant 1.000000e+00 : f32
    %757 = vector.broadcast %cst_367 : f32 to vector<7x32xf32>
    %758 = arith.divf %757, %756 : vector<7x32xf32>
    %759 = arith.subf %707, %60 : vector<7x32xf32>
    %cst_368 = arith.constant 0.000000e+00 : f32
    %760 = vector.broadcast %cst_368 : f32 to vector<7x32xf32>
    %761 = arith.subf %760, %759 : vector<7x32xf32>
    %762 = math.exp %761 : vector<7x32xf32>
    %cst_369 = arith.constant 1.000000e+00 : f32
    %763 = vector.broadcast %cst_369 : f32 to vector<7x32xf32>
    %764 = arith.addf %763, %762 : vector<7x32xf32>
    %cst_370 = arith.constant 1.000000e+00 : f32
    %765 = vector.broadcast %cst_370 : f32 to vector<7x32xf32>
    %766 = arith.divf %765, %764 : vector<7x32xf32>
    %767 = arith.subf %758, %766 : vector<7x32xf32>
    %cst_371 = arith.constant dense<0.000000e+00> : vector<32x8xf32>
    %768 = tpu.matmul %758, %705, %cst_371 {dimension_numbers = #tpu.dot_dimension_numbers<[0], [0], [1], [1], [0, 1, 1, 1], [], []>} : vector<7x32xf32>, vector<7x8xf32>, vector<32x8xf32> -> vector<32x8xf32>
    %cst_372 = arith.constant dense<0.000000e+00> : vector<32x8xf32>
    %769 = tpu.matmul %766, %64, %cst_372 {dimension_numbers = #tpu.dot_dimension_numbers<[0], [0], [1], [1], [0, 1, 1, 1], [], []>} : vector<7x32xf32>, vector<7x8xf32>, vector<32x8xf32> -> vector<32x8xf32>
    %770 = arith.subf %768, %769 : vector<32x8xf32>
    %c0_373 = arith.constant 0 : index
    %c0_374 = arith.constant 0 : index
    %771 = vector.load %arg13[%c0_373, %c0_374] : memref<32x8xf32, #tpu.memory_space<vmem>>, vector<32x8xf32>
    tpu.vector_store %arg13[%c0_373, %c0_374], %770 {strides = array<i32>} : memref<32x8xf32, #tpu.memory_space<vmem>>, vector<32x8xf32>,
    %cst_375 = arith.constant dense<0.000000e+00> : vector<32xf32>
    %772 = vector.multi_reduction <add>, %767, %cst_375 [0] : vector<7x32xf32> to vector<32xf32>
    %773 = vector.shape_cast %772 : vector<32xf32> to vector<1x32xf32>
    %c0_376 = arith.constant 0 : index
    %c0_377 = arith.constant 0 : index
    %774 = vector.load %arg15[%c0_376, %c0_377] : memref<1x32xf32, #tpu.memory_space<vmem>>, vector<1x32xf32>
    tpu.vector_store %arg15[%c0_376, %c0_377], %773 {strides = array<i32>} : memref<1x32xf32, #tpu.memory_space<vmem>>, vector<1x32xf32>,
    %cst_378 = arith.constant dense<0.000000e+00> : vector<1xf32>
    %775 = vector.multi_reduction <add>, %750, %cst_378 [0] : vector<7x1xf32> to vector<1xf32>
    %776 = vector.shape_cast %775 : vector<1xf32> to vector<1x1xf32>
    %cst_379 = arith.constant 1.000000e+00 : f32
    %777 = vector.broadcast %cst_379 : f32 to vector<1x8xf32>
    %778 = vector.broadcast %776 : vector<1x1xf32> to vector<1x8xf32>
    %779 = arith.mulf %778, %777 : vector<1x8xf32>
    %c0_380 = arith.constant 0 : index
    %c0_381 = arith.constant 0 : index
    %780 = vector.load %arg14[%c0_380, %c0_381] : memref<1x8xf32, #tpu.memory_space<vmem>>, vector<1x8xf32>
    tpu.vector_store %arg14[%c0_380, %c0_381], %779 {strides = array<i32>} : memref<1x8xf32, #tpu.memory_space<vmem>>, vector<1x8xf32>,
    %cst_382 = arith.constant dense<0.000000e+00> : vector<32x32xf32>
    %781 = tpu.matmul %773, %57, %cst_382 {dimension_numbers = #tpu.dot_dimension_numbers<[0], [0], [1], [1], [0, 1, 1, 1], [], []>} : vector<1x32xf32>, vector<1x32xf32>, vector<32x32xf32> -> vector<32x32xf32>
    %c0_383 = arith.constant 0 : index
    %c0_384 = arith.constant 0 : index
    %782 = vector.load %arg17[%c0_383, %c0_384] : memref<32x32xf32, #tpu.memory_space<vmem>>, vector<32x32xf32>
    tpu.vector_store %arg17[%c0_383, %c0_384], %781 {strides = array<i32>} : memref<32x32xf32, #tpu.memory_space<vmem>>, vector<32x32xf32>,
    %cst_385 = arith.constant dense<0.000000e+00> : vector<8x32xf32>
    %783 = tpu.matmul %779, %57, %cst_385 {dimension_numbers = #tpu.dot_dimension_numbers<[0], [0], [1], [1], [0, 1, 1, 1], [], []>} : vector<1x8xf32>, vector<1x32xf32>, vector<8x32xf32> -> vector<8x32xf32>
    %c0_386 = arith.constant 0 : index
    %c0_387 = arith.constant 0 : index
    %784 = vector.load %arg16[%c0_386, %c0_387] : memref<8x32xf32, #tpu.memory_space<vmem>>, vector<8x32xf32>
    tpu.vector_store %arg16[%c0_386, %c0_387], %783 {strides = array<i32>} : memref<8x32xf32, #tpu.memory_space<vmem>>, vector<8x32xf32>,
    %785 = arith.subf %64, %705 : vector<7x8xf32>
    %786 = math.absf %785 : vector<7x8xf32>
    %cst_388 = arith.constant dense<0.000000e+00> : vector<7xf32>
    %787 = vector.multi_reduction <add>, %786, %cst_388 [1] : vector<7x8xf32> to vector<7xf32>
    %788 = vector.shape_cast %787 : vector<7xf32> to vector<7x1xf32>
    %cst_389 = arith.constant 8.000000e+00 : f32
    %789 = vector.broadcast %cst_389 : f32 to vector<7x1xf32>
    %790 = arith.divf %788, %789 : vector<7x1xf32>
    %c0_390 = arith.constant 0 : index
    %c0_391 = arith.constant 0 : index
    %791 = vector.load %arg12[%c0_390, %c0_391] : memref<7x1xf32, #tpu.memory_space<vmem>>, vector<7x1xf32>
    tpu.vector_store %arg12[%c0_390, %c0_391], %790 {strides = array<i32>} : memref<7x1xf32, #tpu.memory_space<vmem>>, vector<7x1xf32>,
    %792 = vector.extract_strided_slice %767 {offsets = [1, 0], sizes = [6, 32], strides = [1, 1]} : vector<7x32xf32> to vector<6x32xf32>
    %793 = vector.extract_strided_slice %750 {offsets = [1, 0], sizes = [6, 1], strides = [1, 1]} : vector<7x1xf32> to vector<6x1xf32>
    %794 = vector.extract_strided_slice %55 {offsets = [1, 0], sizes = [6, 32], strides = [1, 1]} : vector<8x32xf32> to vector<6x32xf32>
    %795 = vector.extract_strided_slice %55 {offsets = [0, 0], sizes = [6, 32], strides = [1, 1]} : vector<8x32xf32> to vector<6x32xf32>
    %796 = vector.extract_strided_slice %10 {offsets = [1, 0], sizes = [6, 8], strides = [1, 1]} : vector<8x8xf32> to vector<6x8xf32>
    %cst_392 = arith.constant dense<0.000000e+00> : vector<6x32xf32>
    %797 = tpu.matmul %792, %4, %cst_392 {dimension_numbers = #tpu.dot_dimension_numbers<[1], [0], [0], [1], [0, 0, 1, 1], [], []>} : vector<6x32xf32>, vector<32x32xf32>, vector<6x32xf32> -> vector<6x32xf32>
    %cst_393 = arith.constant dense<0.000000e+00> : vector<32xf32>
    %798 = vector.multi_reduction <add>, %3, %cst_393 [0] : vector<8x32xf32> to vector<32xf32>
    %799 = vector.shape_cast %798 : vector<32xf32> to vector<1x32xf32>
    %800 = vector.broadcast %793 : vector<6x1xf32> to vector<6x32xf32>
    %801 = vector.broadcast %799 : vector<1x32xf32> to vector<6x32xf32>
    %802 = arith.mulf %800, %801 : vector<6x32xf32>
    %803 = arith.addf %797, %802 : vector<6x32xf32>
    %804 = arith.mulf %803, %794 : vector<6x32xf32>
    %cst_394 = arith.constant 1.000000e+00 : f32
    %805 = vector.broadcast %cst_394 : f32 to vector<6x32xf32>
    %806 = arith.subf %805, %794 : vector<6x32xf32>
    %807 = arith.mulf %804, %806 : vector<6x32xf32>
    %cst_395 = arith.constant dense<0.000000e+00> : vector<32xf32>
    %808 = vector.multi_reduction <add>, %807, %cst_395 [0] : vector<6x32xf32> to vector<32xf32>
    %809 = vector.shape_cast %808 : vector<32xf32> to vector<1x32xf32>
    %c0_396 = arith.constant 0 : index
    %c0_397 = arith.constant 0 : index
    %810 = vector.load %arg18[%c0_396, %c0_397] : memref<1x32xf32, #tpu.memory_space<vmem>>, vector<1x32xf32>
    tpu.vector_store %arg18[%c0_396, %c0_397], %809 {strides = array<i32>} : memref<1x32xf32, #tpu.memory_space<vmem>>, vector<1x32xf32>,
    %cst_398 = arith.constant dense<0.000000e+00> : vector<32x32xf32>
    %811 = tpu.matmul %807, %795, %cst_398 {dimension_numbers = #tpu.dot_dimension_numbers<[0], [0], [1], [1], [0, 1, 1, 1], [], []>} : vector<6x32xf32>, vector<6x32xf32>, vector<32x32xf32> -> vector<32x32xf32>
    %c0_399 = arith.constant 0 : index
    %c0_400 = arith.constant 0 : index
    %812 = vector.load %arg20[%c0_399, %c0_400] : memref<32x32xf32, #tpu.memory_space<vmem>>, vector<32x32xf32>
    tpu.vector_store %arg20[%c0_399, %c0_400], %811 {strides = array<i32>} : memref<32x32xf32, #tpu.memory_space<vmem>>, vector<32x32xf32>,
    %cst_401 = arith.constant dense<0.000000e+00> : vector<32x8xf32>
    %813 = tpu.matmul %807, %796, %cst_401 {dimension_numbers = #tpu.dot_dimension_numbers<[0], [0], [1], [1], [0, 1, 1, 1], [], []>} : vector<6x32xf32>, vector<6x8xf32>, vector<32x8xf32> -> vector<32x8xf32>
    %c0_402 = arith.constant 0 : index
    %c0_403 = arith.constant 0 : index
    %814 = vector.load %arg19[%c0_402, %c0_403] : memref<32x8xf32, #tpu.memory_space<vmem>>, vector<32x8xf32>
    tpu.vector_store %arg19[%c0_402, %c0_403], %813 {strides = array<i32>} : memref<32x8xf32, #tpu.memory_space<vmem>>, vector<32x8xf32>,
    return
  }
}

</mosaic_0001>

<llo_original>
// kernel: tpu_custom_call.1
$region0: #{tpu_custom_call.1}
  #allocation0 [shape = 'u32[]', space=smem, size = 0x4, offset = 0x4, fixed_abs, tag = 'smem constant byte address 0x4 - core index']
  #allocation1 [shape = 'u32[72,128]{1,0:T(1,128)}', space=vmem, size = 0x9000, scoped, tag = 'internal scratch']
  #allocation2 [shape = 'f32[8,32]{1,0:T(8,128)}', space=vmem, size = 0x1000, scoped, tag = 'scratch operand']
  %s0 = inlined_call_operand.vmem [shape: f32[8,8], index: 0, kind: input, shape index: {}]
  %s1 = inlined_call_operand.vmem [shape: f32[32,8], index: 1, kind: input, shape index: {}]
  %s2 = inlined_call_operand.vmem [shape: f32[32,32], index: 2, kind: input, shape index: {}]
  %s3 = inlined_call_operand.vmem [shape: f32[8,32], index: 3, kind: input, shape index: {}]
  %s4 = inlined_call_operand.vmem [shape: f32[32,32], index: 4, kind: input, shape index: {}]
  %s5 = inlined_call_operand.vmem [shape: f32[32,8], index: 5, kind: input, shape index: {}]
  %s6 = inlined_call_operand.vmem [shape: f32[1,8], index: 6, kind: input, shape index: {}]
  %s7 = inlined_call_operand.vmem [shape: f32[1,32], index: 7, kind: input, shape index: {}]
  %s8 = inlined_call_operand.vmem [shape: f32[1,32], index: 8, kind: input, shape index: {}]
  %s9 = inlined_call_operand.vmem [shape: f32[1,32], index: 9, kind: input, shape index: {}]
  %s10 = inlined_call_operand.vmem [shape: f32[20,7,32], index: 10, kind: input, shape index: {}]
  %s11 = inlined_call_operand.vmem [shape: f32[20,7,8], index: 11, kind: input, shape index: {}]
  %s12 = inlined_call_operand.vmem [shape: f32[7,1], index: 12, kind: output, shape index: {0}]
  %s13 = inlined_call_operand.vmem [shape: f32[32,8], index: 13, kind: output, shape index: {1}]
  %s14 = inlined_call_operand.hbm [shape: f32[1,8], index: 14, kind: output, shape index: {2}]
  %s15 = inlined_call_operand.hbm [shape: f32[1,32], index: 15, kind: output, shape index: {3}]
  %s16 = inlined_call_operand.hbm [shape: f32[8,32], index: 16, kind: output, shape index: {4}]
  %s17 = inlined_call_operand.hbm [shape: f32[32,32], index: 17, kind: output, shape index: {5}]
  %s18 = inlined_call_operand.hbm [shape: f32[1,32], index: 18, kind: output, shape index: {6}]
  %s19 = inlined_call_operand.vmem [shape: f32[32,8], index: 19, kind: output, shape index: {7}]
  %s20 = inlined_call_operand.hbm [shape: f32[32,32], index: 20, kind: output, shape index: {8}]
  %21 = xla_tuple %s12, %s13, %s14, %s15, %s16, %s17, %s18, %s19, %s20
  %s22 = sld [smem:[#allocation0]]
  $region122: #{tpu_custom_call.1} parent=0
    _
  %s24 = ssub.s32 1, %s22
  %s25 = scalar_select 0, %s24, %s22
  $region1: #{tpu_custom_call.1} parent=0
    #allocation3 [shape = 'u8[512]{0}', space=vmem, size = 0x400, scoped, tag = 'output window, operand 2, single buffered']
    #allocation4 [shape = 's32[1]{0}', space=sflag, size = 0x4, scoped, tag = 'scoped memory for tpu_custom_call.1']
    #allocation5 [shape = 'u8[512]{0}', space=vmem, size = 0x400, scoped, tag = 'output window, operand 3, single buffered']
    #allocation6 [shape = 's32[1]{0}', space=sflag, size = 0x4, scoped, tag = 'scoped memory for tpu_custom_call.1']
    #allocation7 [shape = 'u8[4096]{0}', space=vmem, size = 0x1000, scoped, tag = 'output window, operand 4, single buffered']
    #allocation8 [shape = 'u8[16384]{0}', space=vmem, size = 0x4000, scoped, tag = 'output window, operand 5, single buffered']
    #allocation9 [shape = 's32[1]{0}', space=sflag, size = 0x4, scoped, tag = 'scoped memory for tpu_custom_call.1']
    #allocation10 [shape = 'u8[512]{0}', space=vmem, size = 0x400, scoped, tag = 'output window, operand 6, single buffered']
    #allocation11 [shape = 'u8[16384]{0}', space=vmem, size = 0x4000, scoped, tag = 'output window, operand 8, single buffered']
    #allocation12 [shape = 's32[1]{0}', space=sflag, size = 0x4, scoped, tag = 'scoped memory for tpu_custom_call.1']
    %26 = vsyncpa [#allocation4], 0
    %27 = vsyncpa [#allocation6], 0
    %28 = vsyncpa [#allocation9], 0
    %29 = vsyncpa [#allocation12], 0
    // Predicated region
    $region2: #{tpu_custom_call.1} parent=1 // pred_check
      _
    $region3: #{tpu_custom_call.1} parent=1 // pred_check_branch
      %31 = sbr.rel (0) target = $region5
    $region4: #{tpu_custom_call.1} parent=1 // pred_region
      _
    $region5: #{tpu_custom_call.1} parent=1 // pred_fallthru
      _
    // Predicated region
    $region6: #{tpu_custom_call.1} parent=1 // pred_check
      _
    $region7: #{tpu_custom_call.1} parent=1 // pred_check_branch
      %33 = sbr.rel (0) target = $region9
    $region8: #{tpu_custom_call.1} parent=1 // pred_region
      _
    $region9: #{tpu_custom_call.1} parent=1 // pred_fallthru
      _
    // Predicated region
    $region10: #{tpu_custom_call.1} parent=1 // pred_check
      _
    $region11: #{tpu_custom_call.1} parent=1 // pred_check_branch
      %35 = sbr.rel (0) target = $region13
    $region12: #{tpu_custom_call.1} parent=1 // pred_region
      _
    $region13: #{tpu_custom_call.1} parent=1 // pred_fallthru
      _
    // Predicated region
    $region14: #{tpu_custom_call.1} parent=1 // pred_check
      _
    $region15: #{tpu_custom_call.1} parent=1 // pred_check_branch
      %37 = sbr.rel (0) target = $region17
    $region16: #{tpu_custom_call.1} parent=1 // pred_region
      _
    $region17: #{tpu_custom_call.1} parent=1 // pred_fallthru
      _
    // Predicated region
    $region18: #{tpu_custom_call.1} parent=1 // pred_check
      _
    $region19: #{tpu_custom_call.1} parent=1 // pred_check_branch
      %39 = sbr.rel (0) target = $region21
    $region20: #{tpu_custom_call.1} parent=1 // pred_region
      _
    $region21: #{tpu_custom_call.1} parent=1 // pred_fallthru
      _
    // Predicated region
    $region22: #{tpu_custom_call.1} parent=1 // pred_check
      _
    $region23: #{tpu_custom_call.1} parent=1 // pred_check_branch
      %41 = sbr.rel (0) target = $region25
    $region24: #{tpu_custom_call.1} parent=1 // pred_region
      _
    $region25: #{tpu_custom_call.1} parent=1 // pred_fallthru
      _
    // Predicated region
    $region26: #{tpu_custom_call.1} parent=1 // pred_check
      _
    $region27: #{tpu_custom_call.1} parent=1 // pred_check_branch
      %43 = sbr.rel (0) target = $region29
    $region28: #{tpu_custom_call.1} parent=1 // pred_region
      _
    $region29: #{tpu_custom_call.1} parent=1 // pred_fallthru
      _
    // Predicated region
    $region30: #{tpu_custom_call.1} parent=1 // pred_check
      _
    $region31: #{tpu_custom_call.1} parent=1 // pred_check_branch
      %45 = sbr.rel (0) target = $region33
    $region32: #{tpu_custom_call.1} parent=1 // pred_region
      _
    $region33: #{tpu_custom_call.1} parent=1 // pred_fallthru
      _
    // Predicated region
    $region34: #{tpu_custom_call.1} parent=1 // pred_check
      _
    $region35: #{tpu_custom_call.1} parent=1 // pred_check_branch
      %47 = sbr.rel (0) target = $region37
    $region36: #{tpu_custom_call.1} parent=1 // pred_region
      _
    $region37: #{tpu_custom_call.1} parent=1 // pred_fallthru
      _
    // Predicated region
    $region38: #{tpu_custom_call.1} parent=1 // pred_check
      _
    $region39: #{tpu_custom_call.1} parent=1 // pred_check_branch
      %49 = sbr.rel (0) target = $region41
    $region40: #{tpu_custom_call.1} parent=1 // pred_region
      _
    $region41: #{tpu_custom_call.1} parent=1 // pred_fallthru
      _
    // Predicated region
    $region42: #{tpu_custom_call.1} parent=1 // pred_check
      _
    $region43: #{tpu_custom_call.1} parent=1 // pred_check_branch
      %51 = sbr.rel (0) target = $region45
    $region44: #{tpu_custom_call.1} parent=1 // pred_region
      _
    $region45: #{tpu_custom_call.1} parent=1 // pred_fallthru
      _
    // Predicated region
    $region46: #{tpu_custom_call.1} parent=1 // pred_check
      _
    $region47: #{tpu_custom_call.1} parent=1 // pred_check_branch
      %53 = sbr.rel (0) target = $region49
    $region48: #{tpu_custom_call.1} parent=1 // pred_region
      _
    $region49: #{tpu_custom_call.1} parent=1 // pred_fallthru
      _
    %v54 = vld [vmem:[%s1] sm:$0xff]
    %v55 = vld [vmem:[%s1 + $0x8] sm:$0xff]
    %v56 = vld [vmem:[%s1 + $0x10] sm:$0xff]
    %v57 = vld [vmem:[%s1 + $0x18] sm:$0xff]
    %v58 = vld [vmem:[%s2] sm:$0xff]
    %v59 = vld [vmem:[%s2 + $0x8] sm:$0xff]
    %v60 = vld [vmem:[%s2 + $0x10] sm:$0xff]
    %v61 = vld [vmem:[%s2 + $0x18] sm:$0xff]
    %v62 = vld [vmem:[%s3] sm:$0xff]
    %v63 = vld [vmem:[%s4] sm:$0xff]
    %v64 = vld [vmem:[%s4 + $0x8] sm:$0xff]
    %v65 = vld [vmem:[%s4 + $0x10] sm:$0xff]
    %v66 = vld [vmem:[%s4 + $0x18] sm:$0xff]
    %v67 = vld [vmem:[%s5] sm:$0xff]
    %v68 = vld [vmem:[%s5 + $0x8] sm:$0xff]
    %v69 = vld [vmem:[%s5 + $0x10] sm:$0xff]
    %v70 = vld [vmem:[%s5 + $0x18] sm:$0xff]
    %v71 = vld [vmem:[%s6] sm:$0x1]
    %v72 = vld [vmem:[%s7] sm:$0x1]
    %v73 = vld [vmem:[%s8] sm:$0x1]
    %v74 = vld [vmem:[%s9] sm:$0x1]
    %v75 = vld [vmem:[%s0] sm:$0xff]
    %vm76 = vcmask 253952
    %77 = vst.msk [vmem:[#allocation2] sm:$0x1] %vm76, %v74
    %78 = vst.msk [vmem:[#allocation2 + $0x1] sm:$0x1] %vm76, %v74
    %vm79 = vcmask 261120
    %v81 = vsel %vm79, %v74, 0
    %v84 = vsel %vm79, %v58, 0
    %v87 = vsel %vm79, %v59, 0
    %v90 = vsel %vm79, %v60, 0
    %v93 = vsel %vm79, %v61, 0
    %95 = vmatpush.xpose.msra.mxu0 0.0
    %96 = vmatpush.xpose.msra.mxu0 0.0
    %97 = vmatpush.xpose.msra.mxu0 0.0
    %98 = vmatpush.xpose.msra.mxu0 0.0
    %99 = vmatpush.xpose.msra.mxu0 0.0
    %100 = vmatpush.xpose.msra.mxu0 0.0
    %101 = vmatpush.xpose.msra.mxu0 0.0
    %102 = vmatpush.xpose.msra.mxu0 0.0
    %103 = vmatpush.xpose.msra.mxu0 0.0
    %104 = vmatpush.xpose.msra.mxu0 0.0
    %105 = vmatpush.xpose.msra.mxu0 0.0
    %106 = vmatpush.xpose.msra.mxu0 0.0
    %107 = vmatpush.xpose.msra.mxu0 %v93
    %108 = vmatpush.xpose.msra.mxu0 %v90
    %109 = vmatpush.xpose.msra.mxu0 %v87
    %110 = vmatpush.xpose.msra.mxu0 %v84
    %111 = vmatmul.f32.gmra.mxu0 %v81
    %v112 = vpop.f32.mrf.mxu0
    %v113 = vadd.f32 0.0, %v112
    %114 = vdwg.mxu0
    %v116 = vrot.slane %v75, 1
    %vm117 = vcmask 64512
    %v118 = vsel %vm117, %v116, 0
    %v121 = vsel %vm117, %v67, 0
    %v124 = vsel %vm117, %v68, 0
    %v127 = vsel %vm117, %v69, 0
    %v130 = vsel %vm117, %v70, 0
    %132 = vmatpush.xpose.msra.mxu0 0.0
    %133 = vmatpush.xpose.msra.mxu0 0.0
    %134 = vmatpush.xpose.msra.mxu0 0.0
    %135 = vmatpush.xpose.msra.mxu0 0.0
    %136 = vmatpush.xpose.msra.mxu0 0.0
    %137 = vmatpush.xpose.msra.mxu0 0.0
    %138 = vmatpush.xpose.msra.mxu0 0.0
    %139 = vmatpush.xpose.msra.mxu0 0.0
    %140 = vmatpush.xpose.msra.mxu0 0.0
    %141 = vmatpush.xpose.msra.mxu0 0.0
    %142 = vmatpush.xpose.msra.mxu0 0.0
    %143 = vmatpush.xpose.msra.mxu0 0.0
    %144 = vmatpush.xpose.msra.mxu0 %v130
    %145 = vmatpush.xpose.msra.mxu0 %v127
    %146 = vmatpush.xpose.msra.mxu0 %v124
    %147 = vmatpush.xpose.msra.mxu0 %v121
    %148 = vmatmul.f32.gmra.mxu0 %v118
    %v149 = vpop.f32.mrf.mxu0
    %v150 = vadd.f32 %v113, %v149
    %151 = vdwg.mxu0
    %v152 = vadd.f32 %v150, %v73
    %v153 = vtanh.pop %v152
    %154 = vst.msk [vmem:[#allocation2 + $0x2] sm:$0x1] %vm76, %v153
    %v156 = vsel %vm79, %v153, 0
    %158 = vmatpush.xpose.msra.mxu0 0.0
    %159 = vmatpush.xpose.msra.mxu0 0.0
    %160 = vmatpush.xpose.msra.mxu0 0.0
    %161 = vmatpush.xpose.msra.mxu0 0.0
    %162 = vmatpush.xpose.msra.mxu0 0.0
    %163 = vmatpush.xpose.msra.mxu0 0.0
    %164 = vmatpush.xpose.msra.mxu0 0.0
    %165 = vmatpush.xpose.msra.mxu0 0.0
    %166 = vmatpush.xpose.msra.mxu0 0.0
    %167 = vmatpush.xpose.msra.mxu0 0.0
    %168 = vmatpush.xpose.msra.mxu0 0.0
    %169 = vmatpush.xpose.msra.mxu0 0.0
    %170 = vmatpush.xpose.msra.mxu0 %v93
    %171 = vmatpush.xpose.msra.mxu0 %v90
    %172 = vmatpush.xpose.msra.mxu0 %v87
    %173 = vmatpush.xpose.msra.mxu0 %v84
    %174 = vmatmul.f32.gmra.mxu0 %v156
    %v175 = vpop.f32.mrf.mxu0
    %v176 = vadd.f32 0.0, %v175
    %177 = vdwg.mxu0
    %v178 = vrot.slane %v75, 2
    %v179 = vsel %vm117, %v178, 0
    %181 = vmatpush.xpose.msra.mxu0 0.0
    %182 = vmatpush.xpose.msra.mxu0 0.0
    %183 = vmatpush.xpose.msra.mxu0 0.0
    %184 = vmatpush.xpose.msra.mxu0 0.0
    %185 = vmatpush.xpose.msra.mxu0 0.0
    %186 = vmatpush.xpose.msra.mxu0 0.0
    %187 = vmatpush.xpose.msra.mxu0 0.0
    %188 = vmatpush.xpose.msra.mxu0 0.0
    %189 = vmatpush.xpose.msra.mxu0 0.0
    %190 = vmatpush.xpose.msra.mxu0 0.0
    %191 = vmatpush.xpose.msra.mxu0 0.0
    %192 = vmatpush.xpose.msra.mxu0 0.0
    %193 = vmatpush.xpose.msra.mxu0 %v130
    %194 = vmatpush.xpose.msra.mxu0 %v127
    %195 = vmatpush.xpose.msra.mxu0 %v124
    %196 = vmatpush.xpose.msra.mxu0 %v121
    %197 = vmatmul.f32.gmra.mxu0 %v179
    %v198 = vpop.f32.mrf.mxu0
    %v199 = vadd.f32 %v176, %v198
    %200 = vdwg.mxu0
    %v201 = vadd.f32 %v199, %v73
    %v202 = vtanh.pop %v201
    %203 = vst.msk [vmem:[#allocation2 + $0x3] sm:$0x1] %vm76, %v202
    %v205 = vsel %vm79, %v202, 0
    %207 = vmatpush.xpose.msra.mxu0 0.0
    %208 = vmatpush.xpose.msra.mxu0 0.0
    %209 = vmatpush.xpose.msra.mxu0 0.0
    %210 = vmatpush.xpose.msra.mxu0 0.0
    %211 = vmatpush.xpose.msra.mxu0 0.0
    %212 = vmatpush.xpose.msra.mxu0 0.0
    %213 = vmatpush.xpose.msra.mxu0 0.0
    %214 = vmatpush.xpose.msra.mxu0 0.0
    %215 = vmatpush.xpose.msra.mxu0 0.0
    %216 = vmatpush.xpose.msra.mxu0 0.0
    %217 = vmatpush.xpose.msra.mxu0 0.0
    %218 = vmatpush.xpose.msra.mxu0 0.0
    %219 = vmatpush.xpose.msra.mxu0 %v93
    %220 = vmatpush.xpose.msra.mxu0 %v90
    %221 = vmatpush.xpose.msra.mxu0 %v87
    %222 = vmatpush.xpose.msra.mxu0 %v84
    %223 = vmatmul.f32.gmra.mxu0 %v205
    %v224 = vpop.f32.mrf.mxu0
    %v225 = vadd.f32 0.0, %v224
    %226 = vdwg.mxu0
    %v227 = vrot.slane %v75, 3
    %v228 = vsel %vm117, %v227, 0
    %230 = vmatpush.xpose.msra.mxu0 0.0
    %231 = vmatpush.xpose.msra.mxu0 0.0
    %232 = vmatpush.xpose.msra.mxu0 0.0
    %233 = vmatpush.xpose.msra.mxu0 0.0
    %234 = vmatpush.xpose.msra.mxu0 0.0
    %235 = vmatpush.xpose.msra.mxu0 0.0
    %236 = vmatpush.xpose.msra.mxu0 0.0
    %237 = vmatpush.xpose.msra.mxu0 0.0
    %238 = vmatpush.xpose.msra.mxu0 0.0
    %239 = vmatpush.xpose.msra.mxu0 0.0
    %240 = vmatpush.xpose.msra.mxu0 0.0
    %241 = vmatpush.xpose.msra.mxu0 0.0
    %242 = vmatpush.xpose.msra.mxu0 %v130
    %243 = vmatpush.xpose.msra.mxu0 %v127
    %244 = vmatpush.xpose.msra.mxu0 %v124
    %245 = vmatpush.xpose.msra.mxu0 %v121
    %246 = vmatmul.f32.gmra.mxu0 %v228
    %v247 = vpop.f32.mrf.mxu0
    %v248 = vadd.f32 %v225, %v247
    %249 = vdwg.mxu0
    %v250 = vadd.f32 %v248, %v73
    %v251 = vtanh.pop %v250
    %252 = vst.msk [vmem:[#allocation2 + $0x4] sm:$0x1] %vm76, %v251
    %v254 = vsel %vm79, %v251, 0
    %256 = vmatpush.xpose.msra.mxu0 0.0
    %257 = vmatpush.xpose.msra.mxu0 0.0
    %258 = vmatpush.xpose.msra.mxu0 0.0
    %259 = vmatpush.xpose.msra.mxu0 0.0
    %260 = vmatpush.xpose.msra.mxu0 0.0
    %261 = vmatpush.xpose.msra.mxu0 0.0
    %262 = vmatpush.xpose.msra.mxu0 0.0
    %263 = vmatpush.xpose.msra.mxu0 0.0
    %264 = vmatpush.xpose.msra.mxu0 0.0
    %265 = vmatpush.xpose.msra.mxu0 0.0
    %266 = vmatpush.xpose.msra.mxu0 0.0
    %267 = vmatpush.xpose.msra.mxu0 0.0
    %268 = vmatpush.xpose.msra.mxu0 %v93
    %269 = vmatpush.xpose.msra.mxu0 %v90
    %270 = vmatpush.xpose.msra.mxu0 %v87
    %271 = vmatpush.xpose.msra.mxu0 %v84
    %272 = vmatmul.f32.gmra.mxu0 %v254
    %v273 = vpop.f32.mrf.mxu0
    %v274 = vadd.f32 0.0, %v273
    %275 = vdwg.mxu0
    %v276 = vrot.slane %v75, 4
    %v277 = vsel %vm117, %v276, 0
    %279 = vmatpush.xpose.msra.mxu0 0.0
    %280 = vmatpush.xpose.msra.mxu0 0.0
    %281 = vmatpush.xpose.msra.mxu0 0.0
    %282 = vmatpush.xpose.msra.mxu0 0.0
    %283 = vmatpush.xpose.msra.mxu0 0.0
    %284 = vmatpush.xpose.msra.mxu0 0.0
    %285 = vmatpush.xpose.msra.mxu0 0.0
    %286 = vmatpush.xpose.msra.mxu0 0.0
    %287 = vmatpush.xpose.msra.mxu0 0.0
    %288 = vmatpush.xpose.msra.mxu0 0.0
    %289 = vmatpush.xpose.msra.mxu0 0.0
    %290 = vmatpush.xpose.msra.mxu0 0.0
    %291 = vmatpush.xpose.msra.mxu0 %v130
    %292 = vmatpush.xpose.msra.mxu0 %v127
    %293 = vmatpush.xpose.msra.mxu0 %v124
    %294 = vmatpush.xpose.msra.mxu0 %v121
    %295 = vmatmul.f32.gmra.mxu0 %v277
    %v296 = vpop.f32.mrf.mxu0
    %v297 = vadd.f32 %v274, %v296
    %298 = vdwg.mxu0
    %v299 = vadd.f32 %v297, %v73
    %v300 = vtanh.pop %v299
    %301 = vst.msk [vmem:[#allocation2 + $0x5] sm:$0x1] %vm76, %v300
    %v303 = vsel %vm79, %v300, 0
    %305 = vmatpush.xpose.msra.mxu0 0.0
    %306 = vmatpush.xpose.msra.mxu0 0.0
    %307 = vmatpush.xpose.msra.mxu0 0.0
    %308 = vmatpush.xpose.msra.mxu0 0.0
    %309 = vmatpush.xpose.msra.mxu0 0.0
    %310 = vmatpush.xpose.msra.mxu0 0.0
    %311 = vmatpush.xpose.msra.mxu0 0.0
    %312 = vmatpush.xpose.msra.mxu0 0.0
    %313 = vmatpush.xpose.msra.mxu0 0.0
    %314 = vmatpush.xpose.msra.mxu0 0.0
    %315 = vmatpush.xpose.msra.mxu0 0.0
    %316 = vmatpush.xpose.msra.mxu0 0.0
    %317 = vmatpush.xpose.msra.mxu0 %v93
    %318 = vmatpush.xpose.msra.mxu0 %v90
    %319 = vmatpush.xpose.msra.mxu0 %v87
    %320 = vmatpush.xpose.msra.mxu0 %v84
    %321 = vmatmul.f32.gmra.mxu0 %v303
    %v322 = vpop.f32.mrf.mxu0
    %v323 = vadd.f32 0.0, %v322
    %324 = vdwg.mxu0
    %v325 = vrot.slane %v75, 5
    %v326 = vsel %vm117, %v325, 0
    %328 = vmatpush.xpose.msra.mxu0 0.0
    %329 = vmatpush.xpose.msra.mxu0 0.0
    %330 = vmatpush.xpose.msra.mxu0 0.0
    %331 = vmatpush.xpose.msra.mxu0 0.0
    %332 = vmatpush.xpose.msra.mxu0 0.0
    %333 = vmatpush.xpose.msra.mxu0 0.0
    %334 = vmatpush.xpose.msra.mxu0 0.0
    %335 = vmatpush.xpose.msra.mxu0 0.0
    %336 = vmatpush.xpose.msra.mxu0 0.0
    %337 = vmatpush.xpose.msra.mxu0 0.0
    %338 = vmatpush.xpose.msra.mxu0 0.0
    %339 = vmatpush.xpose.msra.mxu0 0.0
    %340 = vmatpush.xpose.msra.mxu0 %v130
    %341 = vmatpush.xpose.msra.mxu0 %v127
    %342 = vmatpush.xpose.msra.mxu0 %v124
    %343 = vmatpush.xpose.msra.mxu0 %v121
    %344 = vmatmul.f32.gmra.mxu0 %v326
    %v345 = vpop.f32.mrf.mxu0
    %v346 = vadd.f32 %v323, %v345
    %347 = vdwg.mxu0
    %v348 = vadd.f32 %v346, %v73
    %v349 = vtanh.pop %v348
    %350 = vst.msk [vmem:[#allocation2 + $0x6] sm:$0x1] %vm76, %v349
    %v352 = vsel %vm79, %v349, 0
    %354 = vmatpush.xpose.msra.mxu0 0.0
    %355 = vmatpush.xpose.msra.mxu0 0.0
    %356 = vmatpush.xpose.msra.mxu0 0.0
    %357 = vmatpush.xpose.msra.mxu0 0.0
    %358 = vmatpush.xpose.msra.mxu0 0.0
    %359 = vmatpush.xpose.msra.mxu0 0.0
    %360 = vmatpush.xpose.msra.mxu0 0.0
    %361 = vmatpush.xpose.msra.mxu0 0.0
    %362 = vmatpush.xpose.msra.mxu0 0.0
    %363 = vmatpush.xpose.msra.mxu0 0.0
    %364 = vmatpush.xpose.msra.mxu0 0.0
    %365 = vmatpush.xpose.msra.mxu0 0.0
    %366 = vmatpush.xpose.msra.mxu0 %v93
    %367 = vmatpush.xpose.msra.mxu0 %v90
    %368 = vmatpush.xpose.msra.mxu0 %v87
    %369 = vmatpush.xpose.msra.mxu0 %v84
    %370 = vmatmul.f32.gmra.mxu0 %v352
    %v371 = vpop.f32.mrf.mxu0
    %v372 = vadd.f32 0.0, %v371
    %373 = vdwg.mxu0
    %v374 = vrot.slane %v75, 6
    %v375 = vsel %vm117, %v374, 0
    %377 = vmatpush.xpose.msra.mxu0 0.0
    %378 = vmatpush.xpose.msra.mxu0 0.0
    %379 = vmatpush.xpose.msra.mxu0 0.0
    %380 = vmatpush.xpose.msra.mxu0 0.0
    %381 = vmatpush.xpose.msra.mxu0 0.0
    %382 = vmatpush.xpose.msra.mxu0 0.0
    %383 = vmatpush.xpose.msra.mxu0 0.0
    %384 = vmatpush.xpose.msra.mxu0 0.0
    %385 = vmatpush.xpose.msra.mxu0 0.0
    %386 = vmatpush.xpose.msra.mxu0 0.0
    %387 = vmatpush.xpose.msra.mxu0 0.0
    %388 = vmatpush.xpose.msra.mxu0 0.0
    %389 = vmatpush.xpose.msra.mxu0 %v130
    %390 = vmatpush.xpose.msra.mxu0 %v127
    %391 = vmatpush.xpose.msra.mxu0 %v124
    %392 = vmatpush.xpose.msra.mxu0 %v121
    %393 = vmatmul.f32.gmra.mxu0 %v375
    %v394 = vpop.f32.mrf.mxu0
    %v395 = vadd.f32 %v372, %v394
    %396 = vdwg.mxu0
    %v397 = vadd.f32 %v395, %v73
    %v398 = vtanh.pop %v397
    %399 = vst.msk [vmem:[#allocation2 + $0x7] sm:$0x1] %vm76, %v398
    %v400 = vld [vmem:[#allocation2] sm:$0xff]
    %v402 = vperm.slane %v72, 0
    %v405 = vrot.slane %v400, 1
    %v406 = vsel %vm79, %v405, 0
    %v409 = vsel %vm79, %v63, 0
    %v412 = vsel %vm79, %v64, 0
    %v415 = vsel %vm79, %v65, 0
    %v418 = vsel %vm79, %v66, 0
    %420 = vmatpush.xpose.msra.mxu0 0.0
    %421 = vmatpush.xpose.msra.mxu0 0.0
    %422 = vmatpush.xpose.msra.mxu0 0.0
    %423 = vmatpush.xpose.msra.mxu0 0.0
    %424 = vmatpush.xpose.msra.mxu0 0.0
    %425 = vmatpush.xpose.msra.mxu0 0.0
    %426 = vmatpush.xpose.msra.mxu0 0.0
    %427 = vmatpush.xpose.msra.mxu0 0.0
    %428 = vmatpush.xpose.msra.mxu0 0.0
    %429 = vmatpush.xpose.msra.mxu0 0.0
    %430 = vmatpush.xpose.msra.mxu0 0.0
    %431 = vmatpush.xpose.msra.mxu0 0.0
    %432 = vmatpush.xpose.msra.mxu0 %v418
    %433 = vmatpush.xpose.msra.mxu0 %v415
    %434 = vmatpush.xpose.msra.mxu0 %v412
    %435 = vmatpush.xpose.msra.mxu0 %v409
    %436 = vmatmul.f32.gmra.mxu0 %v406
    %v437 = vpop.f32.mrf.mxu0
    %v438 = vadd.f32 %v402, %v437
    %439 = vdwg.mxu0
    %v441 = vperm.slane %v71, 0
    %v444 = vsel %vm79, %v62, 0
    %446 = vmatpush.xpose.msra.mxu0 0.0
    %447 = vmatpush.xpose.msra.mxu0 0.0
    %448 = vmatpush.xpose.msra.mxu0 0.0
    %449 = vmatpush.xpose.msra.mxu0 0.0
    %450 = vmatpush.xpose.msra.mxu0 0.0
    %451 = vmatpush.xpose.msra.mxu0 0.0
    %452 = vmatpush.xpose.msra.mxu0 0.0
    %453 = vmatpush.xpose.msra.mxu0 0.0
    %454 = vmatpush.xpose.msra.mxu0 0.0
    %455 = vmatpush.xpose.msra.mxu0 0.0
    %456 = vmatpush.xpose.msra.mxu0 0.0
    %457 = vmatpush.xpose.msra.mxu0 0.0
    %458 = vmatpush.xpose.msra.mxu0 0.0
    %459 = vmatpush.xpose.msra.mxu0 0.0
    %460 = vmatpush.xpose.msra.mxu0 0.0
    %461 = vmatpush.xpose.msra.mxu0 %v444
    %462 = vmatmul.f32.gmra.mxu0 %v406
    %v463 = vpop.f32.mrf.mxu0
    %v464 = vadd.f32 %v441, %v463
    %465 = vdwg.mxu0
    %v466 = vsel %vm117, %v75, 0
    %v469 = vsel %vm117, %v54, 0
    %v472 = vsel %vm117, %v55, 0
    %v475 = vsel %vm117, %v56, 0
    %v478 = vsel %vm117, %v57, 0
    %480 = vmatpush.xpose.msra.mxu0 0.0
    %481 = vmatpush.xpose.msra.mxu0 0.0
    %482 = vmatpush.xpose.msra.mxu0 0.0
    %483 = vmatpush.xpose.msra.mxu0 0.0
    %484 = vmatpush.xpose.msra.mxu0 0.0
    %485 = vmatpush.xpose.msra.mxu0 0.0
    %486 = vmatpush.xpose.msra.mxu0 0.0
    %487 = vmatpush.xpose.msra.mxu0 0.0
    %488 = vmatpush.xpose.msra.mxu0 0.0
    %489 = vmatpush.xpose.msra.mxu0 0.0
    %490 = vmatpush.xpose.msra.mxu0 0.0
    %491 = vmatpush.xpose.msra.mxu0 0.0
    %492 = vmatpush.xpose.msra.mxu0 %v478
    %493 = vmatpush.xpose.msra.mxu0 %v475
    %494 = vmatpush.xpose.msra.mxu0 %v472
    %495 = vmatpush.xpose.msra.mxu0 %v469
    %496 = vmatmul.f32.gmra.mxu0 %v466
    %v497 = vpop.f32.mrf.mxu0
    %v498 = vadd.f32 %v438, %v497
    %499 = vdwg.mxu0
    %v500 = vsub.f32 0.0, %v498
    %v501 = vmul.f32 %v500, 1.442695
    %v502 = vpow.pop %v501
    %v503 = vadd.f32 %v502, 1.0
    %v504 = vrcp.pop %v503
    %v505 = vmul.f32 %v503, %v504
    %v506 = vsub.f32 1.0, %v505
    %v507 = vmul.f32 %v504, %v506
    %v508 = vadd.f32 %v504, %v507
    %vm509 = vweird.f32 %v503
    %vm510 = vweird.f32 %v504
    %vm511 = vmor %vm509, %vm510
    %v512 = vsel %vm511, %v504, %v508
    %v513 = vand.u32 2147483647, %v503
    %vm514 = vcmp.eq.f32.partialorder %v513, 8.507059e+37
    %v515 = vand.u32 %v503, 2147483648
    %v516 = vor.u32 1.1754944e-38, %v515
    %v517 = vsel %vm514, %v516, %v512
    %v518 = vmul.f32 1.0, %v517
    %v519 = vld [vmem:[%s10] sm:$0x7f]
    %v520 = vsub.f32 %v518, %v519
    %vm521 = vcmp.gt.f32.partialorder %v520, 0.0
    %v522 = vsel %vm521, 1, 0
    %v523 = vcvt.s32.f32 %v522
    %v525 = vsel %vm79, %v523, 0
    %527 = vmatpush.msra.mxu0 0.0
    %528 = vmatpush.msra.mxu0 0.0
    %529 = vmatpush.msra.mxu0 0.0
    %530 = vmatpush.msra.mxu0 0.0
    %531 = vmatpush.msra.mxu0 0.0
    %532 = vmatpush.msra.mxu0 0.0
    %533 = vmatpush.msra.mxu0 0.0
    %534 = vmatpush.msra.mxu0 0.0
    %535 = vmatpush.msra.mxu0 0.0
    %536 = vmatpush.msra.mxu0 0.0
    %537 = vmatpush.msra.mxu0 0.0
    %538 = vmatpush.msra.mxu0 0.0
    %539 = vmatpush.msra.mxu0 %v57
    %540 = vmatpush.msra.mxu0 %v56
    %541 = vmatpush.msra.mxu0 %v55
    %542 = vmatpush.msra.mxu0 %v54
    %543 = vmatmul.f32.gmra.mxu0 %v525
    %v544 = vpop.f32.mrf.mxu0
    %v545 = vadd.f32 %v464, %v544
    %546 = vdwg.mxu0
    %v547 = vsub.f32 0.0, %v545
    %v548 = vmul.f32 %v547, 1.442695
    %v549 = vpow.pop %v548
    %v550 = vadd.f32 %v549, 1.0
    %v551 = vrcp.pop %v550
    %v552 = vmul.f32 %v550, %v551
    %v553 = vsub.f32 1.0, %v552
    %v554 = vmul.f32 %v551, %v553
    %v555 = vadd.f32 %v551, %v554
    %vm556 = vweird.f32 %v550
    %vm557 = vweird.f32 %v551
    %vm558 = vmor %vm556, %vm557
    %v559 = vsel %vm558, %v551, %v555
    %v560 = vand.u32 2147483647, %v550
    %vm561 = vcmp.eq.f32.partialorder %v560, 8.507059e+37
    %v562 = vand.u32 %v550, 2147483648
    %v563 = vor.u32 1.1754944e-38, %v562
    %v564 = vsel %vm561, %v563, %v559
    %v565 = vmul.f32 1.0, %v564
    %v566 = vld [vmem:[%s11] sm:$0x7f]
    %v567 = vsub.f32 %v565, %v566
    %vm568 = vcmp.gt.f32.partialorder %v567, 0.0
    %v569 = vsel %vm568, 1, 0
    %v570 = vcvt.s32.f32 %v569
    %v572 = vsel %vm117, %v570, 0
    %574 = vmatpush.xpose.msra.mxu0 0.0
    %575 = vmatpush.xpose.msra.mxu0 0.0
    %576 = vmatpush.xpose.msra.mxu0 0.0
    %577 = vmatpush.xpose.msra.mxu0 0.0
    %578 = vmatpush.xpose.msra.mxu0 0.0
    %579 = vmatpush.xpose.msra.mxu0 0.0
    %580 = vmatpush.xpose.msra.mxu0 0.0
    %581 = vmatpush.xpose.msra.mxu0 0.0
    %582 = vmatpush.xpose.msra.mxu0 0.0
    %583 = vmatpush.xpose.msra.mxu0 0.0
    %584 = vmatpush.xpose.msra.mxu0 0.0
    %585 = vmatpush.xpose.msra.mxu0 0.0
    %586 = vmatpush.xpose.msra.mxu0 %v478
    %587 = vmatpush.xpose.msra.mxu0 %v475
    %588 = vmatpush.xpose.msra.mxu0 %v472
    %589 = vmatpush.xpose.msra.mxu0 %v469
    %590 = vmatmul.f32.gmra.mxu0 %v572
    %v591 = vpop.f32.mrf.mxu0
    %v592 = vadd.f32 %v438, %v591
    %593 = vdwg.mxu0
    %v594 = vsub.f32 0.0, %v592
    %v595 = vmul.f32 %v594, 1.442695
    %v596 = vpow.pop %v595
    %v597 = vadd.f32 %v596, 1.0
    %v598 = vrcp.pop %v597
    %v599 = vmul.f32 %v597, %v598
    %v600 = vsub.f32 1.0, %v599
    %v601 = vmul.f32 %v598, %v600
    %v602 = vadd.f32 %v598, %v601
    %vm603 = vweird.f32 %v597
    %vm604 = vweird.f32 %v598
    %vm605 = vmor %vm603, %vm604
    %v606 = vsel %vm605, %v598, %v602
    %v607 = vand.u32 2147483647, %v597
    %vm608 = vcmp.eq.f32.partialorder %v607, 8.507059e+37
    %v609 = vand.u32 %v597, 2147483648
    %v610 = vor.u32 1.1754944e-38, %v609
    %v611 = vsel %vm608, %v610, %v606
    %v612 = vmul.f32 1.0, %v611
    %s613 = scalar_lea.vmem %s10, 8
    %v614 = vld [vmem:[%s613] sm:$0x7f]
    %v615 = vsub.f32 %v612, %v614
    %vm616 = vcmp.gt.f32.partialorder %v615, 0.0
    %v617 = vsel %vm616, 1, 0
    %v618 = vcvt.s32.f32 %v617
    %v620 = vsel %vm79, %v618, 0
    %622 = vmatpush.msra.mxu0 0.0
    %623 = vmatpush.msra.mxu0 0.0
    %624 = vmatpush.msra.mxu0 0.0
    %625 = vmatpush.msra.mxu0 0.0
    %626 = vmatpush.msra.mxu0 0.0
    %627 = vmatpush.msra.mxu0 0.0
    %628 = vmatpush.msra.mxu0 0.0
    %629 = vmatpush.msra.mxu0 0.0
    %630 = vmatpush.msra.mxu0 0.0
    %631 = vmatpush.msra.mxu0 0.0
    %632 = vmatpush.msra.mxu0 0.0
    %633 = vmatpush.msra.mxu0 0.0
    %634 = vmatpush.msra.mxu0 %v57
    %635 = vmatpush.msra.mxu0 %v56
    %636 = vmatpush.msra.mxu0 %v55
    %637 = vmatpush.msra.mxu0 %v54
    %638 = vmatmul.f32.gmra.mxu0 %v620
    %v639 = vpop.f32.mrf.mxu0
    %v640 = vadd.f32 %v464, %v639
    %641 = vdwg.mxu0
    %v642 = vsub.f32 0.0, %v640
    %v643 = vmul.f32 %v642, 1.442695
    %v644 = vpow.pop %v643
    %v645 = vadd.f32 %v644, 1.0
    %v646 = vrcp.pop %v645
    %v647 = vmul.f32 %v645, %v646
    %v648 = vsub.f32 1.0, %v647
    %v649 = vmul.f32 %v646, %v648
    %v650 = vadd.f32 %v646, %v649
    %vm651 = vweird.f32 %v645
    %vm652 = vweird.f32 %v646
    %vm653 = vmor %vm651, %vm652
    %v654 = vsel %vm653, %v646, %v650
    %v655 = vand.u32 2147483647, %v645
    %vm656 = vcmp.eq.f32.partialorder %v655, 8.507059e+37
    %v657 = vand.u32 %v645, 2147483648
    %v658 = vor.u32 1.1754944e-38, %v657
    %v659 = vsel %vm656, %v658, %v654
    %v660 = vmul.f32 1.0, %v659
    %s661 = scalar_lea.vmem %s11, 8
    %v662 = vld [vmem:[%s661] sm:$0x7f]
    %v663 = vsub.f32 %v660, %v662
    %vm664 = vcmp.gt.f32.partialorder %v663, 0.0
    %v665 = vsel %vm664, 1, 0
    %v666 = vcvt.s32.f32 %v665
    %v668 = vsel %vm117, %v666, 0
    %670 = vmatpush.xpose.msra.mxu0 0.0
    %671 = vmatpush.xpose.msra.mxu0 0.0
    %672 = vmatpush.xpose.msra.mxu0 0.0
    %673 = vmatpush.xpose.msra.mxu0 0.0
    %674 = vmatpush.xpose.msra.mxu0 0.0
    %675 = vmatpush.xpose.msra.mxu0 0.0
    %676 = vmatpush.xpose.msra.mxu0 0.0
    %677 = vmatpush.xpose.msra.mxu0 0.0
    %678 = vmatpush.xpose.msra.mxu0 0.0
    %679 = vmatpush.xpose.msra.mxu0 0.0
    %680 = vmatpush.xpose.msra.mxu0 0.0
    %681 = vmatpush.xpose.msra.mxu0 0.0
    %682 = vmatpush.xpose.msra.mxu0 %v478
    %683 = vmatpush.xpose.msra.mxu0 %v475
    %684 = vmatpush.xpose.msra.mxu0 %v472
    %685 = vmatpush.xpose.msra.mxu0 %v469
    %686 = vmatmul.f32.gmra.mxu0 %v668
    %v687 = vpop.f32.mrf.mxu0
    %v688 = vadd.f32 %v438, %v687
    %689 = vdwg.mxu0
    %v690 = vsub.f32 0.0, %v688
    %v691 = vmul.f32 %v690, 1.442695
    %v692 = vpow.pop %v691
    %v693 = vadd.f32 %v692, 1.0
    %v694 = vrcp.pop %v693
    %v695 = vmul.f32 %v693, %v694
    %v696 = vsub.f32 1.0, %v695
    %v697 = vmul.f32 %v694, %v696
    %v698 = vadd.f32 %v694, %v697
    %vm699 = vweird.f32 %v693
    %vm700 = vweird.f32 %v694
    %vm701 = vmor %vm699, %vm700
    %v702 = vsel %vm701, %v694, %v698
    %v703 = vand.u32 2147483647, %v693
    %vm704 = vcmp.eq.f32.partialorder %v703, 8.507059e+37
    %v705 = vand.u32 %v693, 2147483648
    %v706 = vor.u32 1.1754944e-38, %v705
    %v707 = vsel %vm704, %v706, %v702
    %v708 = vmul.f32 1.0, %v707
    %s709 = scalar_lea.vmem %s10, 16
    %v710 = vld [vmem:[%s709] sm:$0x7f]
    %v711 = vsub.f32 %v708, %v710
    %vm712 = vcmp.gt.f32.partialorder %v711, 0.0
    %v713 = vsel %vm712, 1, 0
    %v714 = vcvt.s32.f32 %v713
    %v716 = vsel %vm79, %v714, 0
    %718 = vmatpush.msra.mxu0 0.0
    %719 = vmatpush.msra.mxu0 0.0
    %720 = vmatpush.msra.mxu0 0.0
    %721 = vmatpush.msra.mxu0 0.0
    %722 = vmatpush.msra.mxu0 0.0
    %723 = vmatpush.msra.mxu0 0.0
    %724 = vmatpush.msra.mxu0 0.0
    %725 = vmatpush.msra.mxu0 0.0
    %726 = vmatpush.msra.mxu0 0.0
    %727 = vmatpush.msra.mxu0 0.0
    %728 = vmatpush.msra.mxu0 0.0
    %729 = vmatpush.msra.mxu0 0.0
    %730 = vmatpush.msra.mxu0 %v57
    %731 = vmatpush.msra.mxu0 %v56
    %732 = vmatpush.msra.mxu0 %v55
    %733 = vmatpush.msra.mxu0 %v54
    %734 = vmatmul.f32.gmra.mxu0 %v716
    %v735 = vpop.f32.mrf.mxu0
    %v736 = vadd.f32 %v464, %v735
    %737 = vdwg.mxu0
    %v738 = vsub.f32 0.0, %v736
    %v739 = vmul.f32 %v738, 1.442695
    %v740 = vpow.pop %v739
    %v741 = vadd.f32 %v740, 1.0
    %v742 = vrcp.pop %v741
    %v743 = vmul.f32 %v741, %v742
    %v744 = vsub.f32 1.0, %v743
    %v745 = vmul.f32 %v742, %v744
    %v746 = vadd.f32 %v742, %v745
    %vm747 = vweird.f32 %v741
    %vm748 = vweird.f32 %v742
    %vm749 = vmor %vm747, %vm748
    %v750 = vsel %vm749, %v742, %v746
    %v751 = vand.u32 2147483647, %v741
    %vm752 = vcmp.eq.f32.partialorder %v751, 8.507059e+37
    %v753 = vand.u32 %v741, 2147483648
    %v754 = vor.u32 1.1754944e-38, %v753
    %v755 = vsel %vm752, %v754, %v750
    %v756 = vmul.f32 1.0, %v755
    %s757 = scalar_lea.vmem %s11, 16
    %v758 = vld [vmem:[%s757] sm:$0x7f]
    %v759 = vsub.f32 %v756, %v758
    %vm760 = vcmp.gt.f32.partialorder %v759, 0.0
    %v761 = vsel %vm760, 1, 0
    %v762 = vcvt.s32.f32 %v761
    %v764 = vsel %vm117, %v762, 0
    %766 = vmatpush.xpose.msra.mxu0 0.0
    %767 = vmatpush.xpose.msra.mxu0 0.0
    %768 = vmatpush.xpose.msra.mxu0 0.0
    %769 = vmatpush.xpose.msra.mxu0 0.0
    %770 = vmatpush.xpose.msra.mxu0 0.0
    %771 = vmatpush.xpose.msra.mxu0 0.0
    %772 = vmatpush.xpose.msra.mxu0 0.0
    %773 = vmatpush.xpose.msra.mxu0 0.0
    %774 = vmatpush.xpose.msra.mxu0 0.0
    %775 = vmatpush.xpose.msra.mxu0 0.0
    %776 = vmatpush.xpose.msra.mxu0 0.0
    %777 = vmatpush.xpose.msra.mxu0 0.0
    %778 = vmatpush.xpose.msra.mxu0 %v478
    %779 = vmatpush.xpose.msra.mxu0 %v475
    %780 = vmatpush.xpose.msra.mxu0 %v472
    %781 = vmatpush.xpose.msra.mxu0 %v469
    %782 = vmatmul.f32.gmra.mxu0 %v764
    %v783 = vpop.f32.mrf.mxu0
    %v784 = vadd.f32 %v438, %v783
    %785 = vdwg.mxu0
    %v786 = vsub.f32 0.0, %v784
    %v787 = vmul.f32 %v786, 1.442695
    %v788 = vpow.pop %v787
    %v789 = vadd.f32 %v788, 1.0
    %v790 = vrcp.pop %v789
    %v791 = vmul.f32 %v789, %v790
    %v792 = vsub.f32 1.0, %v791
    %v793 = vmul.f32 %v790, %v792
    %v794 = vadd.f32 %v790, %v793
    %vm795 = vweird.f32 %v789
    %vm796 = vweird.f32 %v790
    %vm797 = vmor %vm795, %vm796
    %v798 = vsel %vm797, %v790, %v794
    %v799 = vand.u32 2147483647, %v789
    %vm800 = vcmp.eq.f32.partialorder %v799, 8.507059e+37
    %v801 = vand.u32 %v789, 2147483648
    %v802 = vor.u32 1.1754944e-38, %v801
    %v803 = vsel %vm800, %v802, %v798
    %v804 = vmul.f32 1.0, %v803
    %s805 = scalar_lea.vmem %s10, 24
    %v806 = vld [vmem:[%s805] sm:$0x7f]
    %v807 = vsub.f32 %v804, %v806
    %vm808 = vcmp.gt.f32.partialorder %v807, 0.0
    %v809 = vsel %vm808, 1, 0
    %v810 = vcvt.s32.f32 %v809
    %v812 = vsel %vm79, %v810, 0
    %814 = vmatpush.msra.mxu0 0.0
    %815 = vmatpush.msra.mxu0 0.0
    %816 = vmatpush.msra.mxu0 0.0
    %817 = vmatpush.msra.mxu0 0.0
    %818 = vmatpush.msra.mxu0 0.0
    %819 = vmatpush.msra.mxu0 0.0
    %820 = vmatpush.msra.mxu0 0.0
    %821 = vmatpush.msra.mxu0 0.0
    %822 = vmatpush.msra.mxu0 0.0
    %823 = vmatpush.msra.mxu0 0.0
    %824 = vmatpush.msra.mxu0 0.0
    %825 = vmatpush.msra.mxu0 0.0
    %826 = vmatpush.msra.mxu0 %v57
    %827 = vmatpush.msra.mxu0 %v56
    %828 = vmatpush.msra.mxu0 %v55
    %829 = vmatpush.msra.mxu0 %v54
    %830 = vmatmul.f32.gmra.mxu0 %v812
    %v831 = vpop.f32.mrf.mxu0
    %v832 = vadd.f32 %v464, %v831
    %833 = vdwg.mxu0
    %v834 = vsub.f32 0.0, %v832
    %v835 = vmul.f32 %v834, 1.442695
    %v836 = vpow.pop %v835
    %v837 = vadd.f32 %v836, 1.0
    %v838 = vrcp.pop %v837
    %v839 = vmul.f32 %v837, %v838
    %v840 = vsub.f32 1.0, %v839
    %v841 = vmul.f32 %v838, %v840
    %v842 = vadd.f32 %v838, %v841
    %vm843 = vweird.f32 %v837
    %vm844 = vweird.f32 %v838
    %vm845 = vmor %vm843, %vm844
    %v846 = vsel %vm845, %v838, %v842
    %v847 = vand.u32 2147483647, %v837
    %vm848 = vcmp.eq.f32.partialorder %v847, 8.507059e+37
    %v849 = vand.u32 %v837, 2147483648
    %v850 = vor.u32 1.1754944e-38, %v849
    %v851 = vsel %vm848, %v850, %v846
    %v852 = vmul.f32 1.0, %v851
    %s853 = scalar_lea.vmem %s11, 24
    %v854 = vld [vmem:[%s853] sm:$0x7f]
    %v855 = vsub.f32 %v852, %v854
    %vm856 = vcmp.gt.f32.partialorder %v855, 0.0
    %v857 = vsel %vm856, 1, 0
    %v858 = vcvt.s32.f32 %v857
    %v860 = vsel %vm117, %v858, 0
    %862 = vmatpush.xpose.msra.mxu0 0.0
    %863 = vmatpush.xpose.msra.mxu0 0.0
    %864 = vmatpush.xpose.msra.mxu0 0.0
    %865 = vmatpush.xpose.msra.mxu0 0.0
    %866 = vmatpush.xpose.msra.mxu0 0.0
    %867 = vmatpush.xpose.msra.mxu0 0.0
    %868 = vmatpush.xpose.msra.mxu0 0.0
    %869 = vmatpush.xpose.msra.mxu0 0.0
    %870 = vmatpush.xpose.msra.mxu0 0.0
    %871 = vmatpush.xpose.msra.mxu0 0.0
    %872 = vmatpush.xpose.msra.mxu0 0.0
    %873 = vmatpush.xpose.msra.mxu0 0.0
    %874 = vmatpush.xpose.msra.mxu0 %v478
    %875 = vmatpush.xpose.msra.mxu0 %v475
    %876 = vmatpush.xpose.msra.mxu0 %v472
    %877 = vmatpush.xpose.msra.mxu0 %v469
    %878 = vmatmul.f32.gmra.mxu0 %v860
    %v879 = vpop.f32.mrf.mxu0
    %v880 = vadd.f32 %v438, %v879
    %881 = vdwg.mxu0
    %v882 = vsub.f32 0.0, %v880
    %v883 = vmul.f32 %v882, 1.442695
    %v884 = vpow.pop %v883
    %v885 = vadd.f32 %v884, 1.0
    %v886 = vrcp.pop %v885
    %v887 = vmul.f32 %v885, %v886
    %v888 = vsub.f32 1.0, %v887
    %v889 = vmul.f32 %v886, %v888
    %v890 = vadd.f32 %v886, %v889
    %vm891 = vweird.f32 %v885
    %vm892 = vweird.f32 %v886
    %vm893 = vmor %vm891, %vm892
    %v894 = vsel %vm893, %v886, %v890
    %v895 = vand.u32 2147483647, %v885
    %vm896 = vcmp.eq.f32.partialorder %v895, 8.507059e+37
    %v897 = vand.u32 %v885, 2147483648
    %v898 = vor.u32 1.1754944e-38, %v897
    %v899 = vsel %vm896, %v898, %v894
    %v900 = vmul.f32 1.0, %v899
    %s901 = scalar_lea.vmem %s10, 32
    %v902 = vld [vmem:[%s901] sm:$0x7f]
    %v903 = vsub.f32 %v900, %v902
    %vm904 = vcmp.gt.f32.partialorder %v903, 0.0
    %v905 = vsel %vm904, 1, 0
    %v906 = vcvt.s32.f32 %v905
    %v908 = vsel %vm79, %v906, 0
    %910 = vmatpush.msra.mxu0 0.0
    %911 = vmatpush.msra.mxu0 0.0
    %912 = vmatpush.msra.mxu0 0.0
    %913 = vmatpush.msra.mxu0 0.0
    %914 = vmatpush.msra.mxu0 0.0
    %915 = vmatpush.msra.mxu0 0.0
    %916 = vmatpush.msra.mxu0 0.0
    %917 = vmatpush.msra.mxu0 0.0
    %918 = vmatpush.msra.mxu0 0.0
    %919 = vmatpush.msra.mxu0 0.0
    %920 = vmatpush.msra.mxu0 0.0
    %921 = vmatpush.msra.mxu0 0.0
    %922 = vmatpush.msra.mxu0 %v57
    %923 = vmatpush.msra.mxu0 %v56
    %924 = vmatpush.msra.mxu0 %v55
    %925 = vmatpush.msra.mxu0 %v54
    %926 = vmatmul.f32.gmra.mxu0 %v908
    %v927 = vpop.f32.mrf.mxu0
    %v928 = vadd.f32 %v464, %v927
    %929 = vdwg.mxu0
    %v930 = vsub.f32 0.0, %v928
    %v931 = vmul.f32 %v930, 1.442695
    %v932 = vpow.pop %v931
    %v933 = vadd.f32 %v932, 1.0
    %v934 = vrcp.pop %v933
    %v935 = vmul.f32 %v933, %v934
    %v936 = vsub.f32 1.0, %v935
    %v937 = vmul.f32 %v934, %v936
    %v938 = vadd.f32 %v934, %v937
    %vm939 = vweird.f32 %v933
    %vm940 = vweird.f32 %v934
    %vm941 = vmor %vm939, %vm940
    %v942 = vsel %vm941, %v934, %v938
    %v943 = vand.u32 2147483647, %v933
    %vm944 = vcmp.eq.f32.partialorder %v943, 8.507059e+37
    %v945 = vand.u32 %v933, 2147483648
    %v946 = vor.u32 1.1754944e-38, %v945
    %v947 = vsel %vm944, %v946, %v942
    %v948 = vmul.f32 1.0, %v947
    %s949 = scalar_lea.vmem %s11, 32
    %v950 = vld [vmem:[%s949] sm:$0x7f]
    %v951 = vsub.f32 %v948, %v950
    %vm952 = vcmp.gt.f32.partialorder %v951, 0.0
    %v953 = vsel %vm952, 1, 0
    %v954 = vcvt.s32.f32 %v953
    %v956 = vsel %vm117, %v954, 0
    %958 = vmatpush.xpose.msra.mxu0 0.0
    %959 = vmatpush.xpose.msra.mxu0 0.0
    %960 = vmatpush.xpose.msra.mxu0 0.0
    %961 = vmatpush.xpose.msra.mxu0 0.0
    %962 = vmatpush.xpose.msra.mxu0 0.0
    %963 = vmatpush.xpose.msra.mxu0 0.0
    %964 = vmatpush.xpose.msra.mxu0 0.0
    %965 = vmatpush.xpose.msra.mxu0 0.0
    %966 = vmatpush.xpose.msra.mxu0 0.0
    %967 = vmatpush.xpose.msra.mxu0 0.0
    %968 = vmatpush.xpose.msra.mxu0 0.0
    %969 = vmatpush.xpose.msra.mxu0 0.0
    %970 = vmatpush.xpose.msra.mxu0 %v478
    %971 = vmatpush.xpose.msra.mxu0 %v475
    %972 = vmatpush.xpose.msra.mxu0 %v472
    %973 = vmatpush.xpose.msra.mxu0 %v469
    %974 = vmatmul.f32.gmra.mxu0 %v956
    %v975 = vpop.f32.mrf.mxu0
    %v976 = vadd.f32 %v438, %v975
    %977 = vdwg.mxu0
    %v978 = vsub.f32 0.0, %v976
    %v979 = vmul.f32 %v978, 1.442695
    %v980 = vpow.pop %v979
    %v981 = vadd.f32 %v980, 1.0
    %v982 = vrcp.pop %v981
    %v983 = vmul.f32 %v981, %v982
    %v984 = vsub.f32 1.0, %v983
    %v985 = vmul.f32 %v982, %v984
    %v986 = vadd.f32 %v982, %v985
    %vm987 = vweird.f32 %v981
    %vm988 = vweird.f32 %v982
    %vm989 = vmor %vm987, %vm988
    %v990 = vsel %vm989, %v982, %v986
    %v991 = vand.u32 2147483647, %v981
    %vm992 = vcmp.eq.f32.partialorder %v991, 8.507059e+37
    %v993 = vand.u32 %v981, 2147483648
    %v994 = vor.u32 1.1754944e-38, %v993
    %v995 = vsel %vm992, %v994, %v990
    %v996 = vmul.f32 1.0, %v995
    %s997 = scalar_lea.vmem %s10, 40
    %v998 = vld [vmem:[%s997] sm:$0x7f]
    %v999 = vsub.f32 %v996, %v998
    %vm1000 = vcmp.gt.f32.partialorder %v999, 0.0
    %v1001 = vsel %vm1000, 1, 0
    %v1002 = vcvt.s32.f32 %v1001
    %v1004 = vsel %vm79, %v1002, 0
    %1006 = vmatpush.msra.mxu0 0.0
    %1007 = vmatpush.msra.mxu0 0.0
    %1008 = vmatpush.msra.mxu0 0.0
    %1009 = vmatpush.msra.mxu0 0.0
    %1010 = vmatpush.msra.mxu0 0.0
    %1011 = vmatpush.msra.mxu0 0.0
    %1012 = vmatpush.msra.mxu0 0.0
    %1013 = vmatpush.msra.mxu0 0.0
    %1014 = vmatpush.msra.mxu0 0.0
    %1015 = vmatpush.msra.mxu0 0.0
    %1016 = vmatpush.msra.mxu0 0.0
    %1017 = vmatpush.msra.mxu0 0.0
    %1018 = vmatpush.msra.mxu0 %v57
    %1019 = vmatpush.msra.mxu0 %v56
    %1020 = vmatpush.msra.mxu0 %v55
    %1021 = vmatpush.msra.mxu0 %v54
    %1022 = vmatmul.f32.gmra.mxu0 %v1004
    %v1023 = vpop.f32.mrf.mxu0
    %v1024 = vadd.f32 %v464, %v1023
    %1025 = vdwg.mxu0
    %v1026 = vsub.f32 0.0, %v1024
    %v1027 = vmul.f32 %v1026, 1.442695
    %v1028 = vpow.pop %v1027
    %v1029 = vadd.f32 %v1028, 1.0
    %v1030 = vrcp.pop %v1029
    %v1031 = vmul.f32 %v1029, %v1030
    %v1032 = vsub.f32 1.0, %v1031
    %v1033 = vmul.f32 %v1030, %v1032
    %v1034 = vadd.f32 %v1030, %v1033
    %vm1035 = vweird.f32 %v1029
    %vm1036 = vweird.f32 %v1030
    %vm1037 = vmor %vm1035, %vm1036
    %v1038 = vsel %vm1037, %v1030, %v1034
    %v1039 = vand.u32 2147483647, %v1029
    %vm1040 = vcmp.eq.f32.partialorder %v1039, 8.507059e+37
    %v1041 = vand.u32 %v1029, 2147483648
    %v1042 = vor.u32 1.1754944e-38, %v1041
    %v1043 = vsel %vm1040, %v1042, %v1038
    %v1044 = vmul.f32 1.0, %v1043
    %s1045 = scalar_lea.vmem %s11, 40
    %v1046 = vld [vmem:[%s1045] sm:$0x7f]
    %v1047 = vsub.f32 %v1044, %v1046
    %vm1048 = vcmp.gt.f32.partialorder %v1047, 0.0
    %v1049 = vsel %vm1048, 1, 0
    %v1050 = vcvt.s32.f32 %v1049
    %v1052 = vsel %vm117, %v1050, 0
    %1054 = vmatpush.xpose.msra.mxu0 0.0
    %1055 = vmatpush.xpose.msra.mxu0 0.0
    %1056 = vmatpush.xpose.msra.mxu0 0.0
    %1057 = vmatpush.xpose.msra.mxu0 0.0
    %1058 = vmatpush.xpose.msra.mxu0 0.0
    %1059 = vmatpush.xpose.msra.mxu0 0.0
    %1060 = vmatpush.xpose.msra.mxu0 0.0
    %1061 = vmatpush.xpose.msra.mxu0 0.0
    %1062 = vmatpush.xpose.msra.mxu0 0.0
    %1063 = vmatpush.xpose.msra.mxu0 0.0
    %1064 = vmatpush.xpose.msra.mxu0 0.0
    %1065 = vmatpush.xpose.msra.mxu0 0.0
    %1066 = vmatpush.xpose.msra.mxu0 %v478
    %1067 = vmatpush.xpose.msra.mxu0 %v475
    %1068 = vmatpush.xpose.msra.mxu0 %v472
    %1069 = vmatpush.xpose.msra.mxu0 %v469
    %1070 = vmatmul.f32.gmra.mxu0 %v1052
    %v1071 = vpop.f32.mrf.mxu0
    %v1072 = vadd.f32 %v438, %v1071
    %1073 = vdwg.mxu0
    %v1074 = vsub.f32 0.0, %v1072
    %v1075 = vmul.f32 %v1074, 1.442695
    %v1076 = vpow.pop %v1075
    %v1077 = vadd.f32 %v1076, 1.0
    %v1078 = vrcp.pop %v1077
    %v1079 = vmul.f32 %v1077, %v1078
    %v1080 = vsub.f32 1.0, %v1079
    %v1081 = vmul.f32 %v1078, %v1080
    %v1082 = vadd.f32 %v1078, %v1081
    %vm1083 = vweird.f32 %v1077
    %vm1084 = vweird.f32 %v1078
    %vm1085 = vmor %vm1083, %vm1084
    %v1086 = vsel %vm1085, %v1078, %v1082
    %v1087 = vand.u32 2147483647, %v1077
    %vm1088 = vcmp.eq.f32.partialorder %v1087, 8.507059e+37
    %v1089 = vand.u32 %v1077, 2147483648
    %v1090 = vor.u32 1.1754944e-38, %v1089
    %v1091 = vsel %vm1088, %v1090, %v1086
    %v1092 = vmul.f32 1.0, %v1091
    %s1093 = scalar_lea.vmem %s10, 48
    %v1094 = vld [vmem:[%s1093] sm:$0x7f]
    %v1095 = vsub.f32 %v1092, %v1094
    %vm1096 = vcmp.gt.f32.partialorder %v1095, 0.0
    %v1097 = vsel %vm1096, 1, 0
    %v1098 = vcvt.s32.f32 %v1097
    %v1100 = vsel %vm79, %v1098, 0
    %1102 = vmatpush.msra.mxu0 0.0
    %1103 = vmatpush.msra.mxu0 0.0
    %1104 = vmatpush.msra.mxu0 0.0
    %1105 = vmatpush.msra.mxu0 0.0
    %1106 = vmatpush.msra.mxu0 0.0
    %1107 = vmatpush.msra.mxu0 0.0
    %1108 = vmatpush.msra.mxu0 0.0
    %1109 = vmatpush.msra.mxu0 0.0
    %1110 = vmatpush.msra.mxu0 0.0
    %1111 = vmatpush.msra.mxu0 0.0
    %1112 = vmatpush.msra.mxu0 0.0
    %1113 = vmatpush.msra.mxu0 0.0
    %1114 = vmatpush.msra.mxu0 %v57
    %1115 = vmatpush.msra.mxu0 %v56
    %1116 = vmatpush.msra.mxu0 %v55
    %1117 = vmatpush.msra.mxu0 %v54
    %1118 = vmatmul.f32.gmra.mxu0 %v1100
    %v1119 = vpop.f32.mrf.mxu0
    %v1120 = vadd.f32 %v464, %v1119
    %1121 = vdwg.mxu0
    %v1122 = vsub.f32 0.0, %v1120
    %v1123 = vmul.f32 %v1122, 1.442695
    %v1124 = vpow.pop %v1123
    %v1125 = vadd.f32 %v1124, 1.0
    %v1126 = vrcp.pop %v1125
    %v1127 = vmul.f32 %v1125, %v1126
    %v1128 = vsub.f32 1.0, %v1127
    %v1129 = vmul.f32 %v1126, %v1128
    %v1130 = vadd.f32 %v1126, %v1129
    %vm1131 = vweird.f32 %v1125
    %vm1132 = vweird.f32 %v1126
    %vm1133 = vmor %vm1131, %vm1132
    %v1134 = vsel %vm1133, %v1126, %v1130
    %v1135 = vand.u32 2147483647, %v1125
    %vm1136 = vcmp.eq.f32.partialorder %v1135, 8.507059e+37
    %v1137 = vand.u32 %v1125, 2147483648
    %v1138 = vor.u32 1.1754944e-38, %v1137
    %v1139 = vsel %vm1136, %v1138, %v1134
    %v1140 = vmul.f32 1.0, %v1139
    %s1141 = scalar_lea.vmem %s11, 48
    %v1142 = vld [vmem:[%s1141] sm:$0x7f]
    %v1143 = vsub.f32 %v1140, %v1142
    %vm1144 = vcmp.gt.f32.partialorder %v1143, 0.0
    %v1145 = vsel %vm1144, 1, 0
    %v1146 = vcvt.s32.f32 %v1145
    %v1148 = vsel %vm117, %v1146, 0
    %1150 = vmatpush.xpose.msra.mxu0 0.0
    %1151 = vmatpush.xpose.msra.mxu0 0.0
    %1152 = vmatpush.xpose.msra.mxu0 0.0
    %1153 = vmatpush.xpose.msra.mxu0 0.0
    %1154 = vmatpush.xpose.msra.mxu0 0.0
    %1155 = vmatpush.xpose.msra.mxu0 0.0
    %1156 = vmatpush.xpose.msra.mxu0 0.0
    %1157 = vmatpush.xpose.msra.mxu0 0.0
    %1158 = vmatpush.xpose.msra.mxu0 0.0
    %1159 = vmatpush.xpose.msra.mxu0 0.0
    %1160 = vmatpush.xpose.msra.mxu0 0.0
    %1161 = vmatpush.xpose.msra.mxu0 0.0
    %1162 = vmatpush.xpose.msra.mxu0 %v478
    %1163 = vmatpush.xpose.msra.mxu0 %v475
    %1164 = vmatpush.xpose.msra.mxu0 %v472
    %1165 = vmatpush.xpose.msra.mxu0 %v469
    %1166 = vmatmul.f32.gmra.mxu0 %v1148
    %v1167 = vpop.f32.mrf.mxu0
    %v1168 = vadd.f32 %v438, %v1167
    %1169 = vdwg.mxu0
    %v1170 = vsub.f32 0.0, %v1168
    %v1171 = vmul.f32 %v1170, 1.442695
    %v1172 = vpow.pop %v1171
    %v1173 = vadd.f32 %v1172, 1.0
    %v1174 = vrcp.pop %v1173
    %v1175 = vmul.f32 %v1173, %v1174
    %v1176 = vsub.f32 1.0, %v1175
    %v1177 = vmul.f32 %v1174, %v1176
    %v1178 = vadd.f32 %v1174, %v1177
    %vm1179 = vweird.f32 %v1173
    %vm1180 = vweird.f32 %v1174
    %vm1181 = vmor %vm1179, %vm1180
    %v1182 = vsel %vm1181, %v1174, %v1178
    %v1183 = vand.u32 2147483647, %v1173
    %vm1184 = vcmp.eq.f32.partialorder %v1183, 8.507059e+37
    %v1185 = vand.u32 %v1173, 2147483648
    %v1186 = vor.u32 1.1754944e-38, %v1185
    %v1187 = vsel %vm1184, %v1186, %v1182
    %v1188 = vmul.f32 1.0, %v1187
    %s1189 = scalar_lea.vmem %s10, 56
    %v1190 = vld [vmem:[%s1189] sm:$0x7f]
    %v1191 = vsub.f32 %v1188, %v1190
    %vm1192 = vcmp.gt.f32.partialorder %v1191, 0.0
    %v1193 = vsel %vm1192, 1, 0
    %v1194 = vcvt.s32.f32 %v1193
    %v1196 = vsel %vm79, %v1194, 0
    %1198 = vmatpush.msra.mxu0 0.0
    %1199 = vmatpush.msra.mxu0 0.0
    %1200 = vmatpush.msra.mxu0 0.0
    %1201 = vmatpush.msra.mxu0 0.0
    %1202 = vmatpush.msra.mxu0 0.0
    %1203 = vmatpush.msra.mxu0 0.0
    %1204 = vmatpush.msra.mxu0 0.0
    %1205 = vmatpush.msra.mxu0 0.0
    %1206 = vmatpush.msra.mxu0 0.0
    %1207 = vmatpush.msra.mxu0 0.0
    %1208 = vmatpush.msra.mxu0 0.0
    %1209 = vmatpush.msra.mxu0 0.0
    %1210 = vmatpush.msra.mxu0 %v57
    %1211 = vmatpush.msra.mxu0 %v56
    %1212 = vmatpush.msra.mxu0 %v55
    %1213 = vmatpush.msra.mxu0 %v54
    %1214 = vmatmul.f32.gmra.mxu0 %v1196
    %v1215 = vpop.f32.mrf.mxu0
    %v1216 = vadd.f32 %v464, %v1215
    %1217 = vdwg.mxu0
    %v1218 = vsub.f32 0.0, %v1216
    %v1219 = vmul.f32 %v1218, 1.442695
    %v1220 = vpow.pop %v1219
    %v1221 = vadd.f32 %v1220, 1.0
    %v1222 = vrcp.pop %v1221
    %v1223 = vmul.f32 %v1221, %v1222
    %v1224 = vsub.f32 1.0, %v1223
    %v1225 = vmul.f32 %v1222, %v1224
    %v1226 = vadd.f32 %v1222, %v1225
    %vm1227 = vweird.f32 %v1221
    %vm1228 = vweird.f32 %v1222
    %vm1229 = vmor %vm1227, %vm1228
    %v1230 = vsel %vm1229, %v1222, %v1226
    %v1231 = vand.u32 2147483647, %v1221
    %vm1232 = vcmp.eq.f32.partialorder %v1231, 8.507059e+37
    %v1233 = vand.u32 %v1221, 2147483648
    %v1234 = vor.u32 1.1754944e-38, %v1233
    %v1235 = vsel %vm1232, %v1234, %v1230
    %v1236 = vmul.f32 1.0, %v1235
    %s1237 = scalar_lea.vmem %s11, 56
    %v1238 = vld [vmem:[%s1237] sm:$0x7f]
    %v1239 = vsub.f32 %v1236, %v1238
    %vm1240 = vcmp.gt.f32.partialorder %v1239, 0.0
    %v1241 = vsel %vm1240, 1, 0
    %v1242 = vcvt.s32.f32 %v1241
    %v1244 = vsel %vm117, %v1242, 0
    %1246 = vmatpush.xpose.msra.mxu0 0.0
    %1247 = vmatpush.xpose.msra.mxu0 0.0
    %1248 = vmatpush.xpose.msra.mxu0 0.0
    %1249 = vmatpush.xpose.msra.mxu0 0.0
    %1250 = vmatpush.xpose.msra.mxu0 0.0
    %1251 = vmatpush.xpose.msra.mxu0 0.0
    %1252 = vmatpush.xpose.msra.mxu0 0.0
    %1253 = vmatpush.xpose.msra.mxu0 0.0
    %1254 = vmatpush.xpose.msra.mxu0 0.0
    %1255 = vmatpush.xpose.msra.mxu0 0.0
    %1256 = vmatpush.xpose.msra.mxu0 0.0
    %1257 = vmatpush.xpose.msra.mxu0 0.0
    %1258 = vmatpush.xpose.msra.mxu0 %v478
    %1259 = vmatpush.xpose.msra.mxu0 %v475
    %1260 = vmatpush.xpose.msra.mxu0 %v472
    %1261 = vmatpush.xpose.msra.mxu0 %v469
    %1262 = vmatmul.f32.gmra.mxu0 %v1244
    %v1263 = vpop.f32.mrf.mxu0
    %v1264 = vadd.f32 %v438, %v1263
    %1265 = vdwg.mxu0
    %v1266 = vsub.f32 0.0, %v1264
    %v1267 = vmul.f32 %v1266, 1.442695
    %v1268 = vpow.pop %v1267
    %v1269 = vadd.f32 %v1268, 1.0
    %v1270 = vrcp.pop %v1269
    %v1271 = vmul.f32 %v1269, %v1270
    %v1272 = vsub.f32 1.0, %v1271
    %v1273 = vmul.f32 %v1270, %v1272
    %v1274 = vadd.f32 %v1270, %v1273
    %vm1275 = vweird.f32 %v1269
    %vm1276 = vweird.f32 %v1270
    %vm1277 = vmor %vm1275, %vm1276
    %v1278 = vsel %vm1277, %v1270, %v1274
    %v1279 = vand.u32 2147483647, %v1269
    %vm1280 = vcmp.eq.f32.partialorder %v1279, 8.507059e+37
    %v1281 = vand.u32 %v1269, 2147483648
    %v1282 = vor.u32 1.1754944e-38, %v1281
    %v1283 = vsel %vm1280, %v1282, %v1278
    %v1284 = vmul.f32 1.0, %v1283
    %s1285 = scalar_lea.vmem %s10, 64
    %v1286 = vld [vmem:[%s1285] sm:$0x7f]
    %v1287 = vsub.f32 %v1284, %v1286
    %vm1288 = vcmp.gt.f32.partialorder %v1287, 0.0
    %v1289 = vsel %vm1288, 1, 0
    %v1290 = vcvt.s32.f32 %v1289
    %v1292 = vsel %vm79, %v1290, 0
    %1294 = vmatpush.msra.mxu0 0.0
    %1295 = vmatpush.msra.mxu0 0.0
    %1296 = vmatpush.msra.mxu0 0.0
    %1297 = vmatpush.msra.mxu0 0.0
    %1298 = vmatpush.msra.mxu0 0.0
    %1299 = vmatpush.msra.mxu0 0.0
    %1300 = vmatpush.msra.mxu0 0.0
    %1301 = vmatpush.msra.mxu0 0.0
    %1302 = vmatpush.msra.mxu0 0.0
    %1303 = vmatpush.msra.mxu0 0.0
    %1304 = vmatpush.msra.mxu0 0.0
    %1305 = vmatpush.msra.mxu0 0.0
    %1306 = vmatpush.msra.mxu0 %v57
    %1307 = vmatpush.msra.mxu0 %v56
    %1308 = vmatpush.msra.mxu0 %v55
    %1309 = vmatpush.msra.mxu0 %v54
    %1310 = vmatmul.f32.gmra.mxu0 %v1292
    %v1311 = vpop.f32.mrf.mxu0
    %v1312 = vadd.f32 %v464, %v1311
    %1313 = vdwg.mxu0
    %v1314 = vsub.f32 0.0, %v1312
    %v1315 = vmul.f32 %v1314, 1.442695
    %v1316 = vpow.pop %v1315
    %v1317 = vadd.f32 %v1316, 1.0
    %v1318 = vrcp.pop %v1317
    %v1319 = vmul.f32 %v1317, %v1318
    %v1320 = vsub.f32 1.0, %v1319
    %v1321 = vmul.f32 %v1318, %v1320
    %v1322 = vadd.f32 %v1318, %v1321
    %vm1323 = vweird.f32 %v1317
    %vm1324 = vweird.f32 %v1318
    %vm1325 = vmor %vm1323, %vm1324
    %v1326 = vsel %vm1325, %v1318, %v1322
    %v1327 = vand.u32 2147483647, %v1317
    %vm1328 = vcmp.eq.f32.partialorder %v1327, 8.507059e+37
    %v1329 = vand.u32 %v1317, 2147483648
    %v1330 = vor.u32 1.1754944e-38, %v1329
    %v1331 = vsel %vm1328, %v1330, %v1326
    %v1332 = vmul.f32 1.0, %v1331
    %s1333 = scalar_lea.vmem %s11, 64
    %v1334 = vld [vmem:[%s1333] sm:$0x7f]
    %v1335 = vsub.f32 %v1332, %v1334
    %vm1336 = vcmp.gt.f32.partialorder %v1335, 0.0
    %v1337 = vsel %vm1336, 1, 0
    %v1338 = vcvt.s32.f32 %v1337
    %v1340 = vsel %vm117, %v1338, 0
    %1342 = vmatpush.xpose.msra.mxu0 0.0
    %1343 = vmatpush.xpose.msra.mxu0 0.0
    %1344 = vmatpush.xpose.msra.mxu0 0.0
    %1345 = vmatpush.xpose.msra.mxu0 0.0
    %1346 = vmatpush.xpose.msra.mxu0 0.0
    %1347 = vmatpush.xpose.msra.mxu0 0.0
    %1348 = vmatpush.xpose.msra.mxu0 0.0
    %1349 = vmatpush.xpose.msra.mxu0 0.0
    %1350 = vmatpush.xpose.msra.mxu0 0.0
    %1351 = vmatpush.xpose.msra.mxu0 0.0
    %1352 = vmatpush.xpose.msra.mxu0 0.0
    %1353 = vmatpush.xpose.msra.mxu0 0.0
    %1354 = vmatpush.xpose.msra.mxu0 %v478
    %1355 = vmatpush.xpose.msra.mxu0 %v475
    %1356 = vmatpush.xpose.msra.mxu0 %v472
    %1357 = vmatpush.xpose.msra.mxu0 %v469
    %1358 = vmatmul.f32.gmra.mxu0 %v1340
    %v1359 = vpop.f32.mrf.mxu0
    %v1360 = vadd.f32 %v438, %v1359
    %1361 = vdwg.mxu0
    %v1362 = vsub.f32 0.0, %v1360
    %v1363 = vmul.f32 %v1362, 1.442695
    %v1364 = vpow.pop %v1363
    %v1365 = vadd.f32 %v1364, 1.0
    %v1366 = vrcp.pop %v1365
    %v1367 = vmul.f32 %v1365, %v1366
    %v1368 = vsub.f32 1.0, %v1367
    %v1369 = vmul.f32 %v1366, %v1368
    %v1370 = vadd.f32 %v1366, %v1369
    %vm1371 = vweird.f32 %v1365
    %vm1372 = vweird.f32 %v1366
    %vm1373 = vmor %vm1371, %vm1372
    %v1374 = vsel %vm1373, %v1366, %v1370
    %v1375 = vand.u32 2147483647, %v1365
    %vm1376 = vcmp.eq.f32.partialorder %v1375, 8.507059e+37
    %v1377 = vand.u32 %v1365, 2147483648
    %v1378 = vor.u32 1.1754944e-38, %v1377
    %v1379 = vsel %vm1376, %v1378, %v1374
    %v1380 = vmul.f32 1.0, %v1379
    %s1381 = scalar_lea.vmem %s10, 72
    %v1382 = vld [vmem:[%s1381] sm:$0x7f]
    %v1383 = vsub.f32 %v1380, %v1382
    %vm1384 = vcmp.gt.f32.partialorder %v1383, 0.0
    %v1385 = vsel %vm1384, 1, 0
    %v1386 = vcvt.s32.f32 %v1385
    %v1388 = vsel %vm79, %v1386, 0
    %1390 = vmatpush.msra.mxu0 0.0
    %1391 = vmatpush.msra.mxu0 0.0
    %1392 = vmatpush.msra.mxu0 0.0
    %1393 = vmatpush.msra.mxu0 0.0
    %1394 = vmatpush.msra.mxu0 0.0
    %1395 = vmatpush.msra.mxu0 0.0
    %1396 = vmatpush.msra.mxu0 0.0
    %1397 = vmatpush.msra.mxu0 0.0
    %1398 = vmatpush.msra.mxu0 0.0
    %1399 = vmatpush.msra.mxu0 0.0
    %1400 = vmatpush.msra.mxu0 0.0
    %1401 = vmatpush.msra.mxu0 0.0
    %1402 = vmatpush.msra.mxu0 %v57
    %1403 = vmatpush.msra.mxu0 %v56
    %1404 = vmatpush.msra.mxu0 %v55
    %1405 = vmatpush.msra.mxu0 %v54
    %1406 = vmatmul.f32.gmra.mxu0 %v1388
    %v1407 = vpop.f32.mrf.mxu0
    %v1408 = vadd.f32 %v464, %v1407
    %1409 = vdwg.mxu0
    %v1410 = vsub.f32 0.0, %v1408
    %v1411 = vmul.f32 %v1410, 1.442695
    %v1412 = vpow.pop %v1411
    %v1413 = vadd.f32 %v1412, 1.0
    %v1414 = vrcp.pop %v1413
    %v1415 = vmul.f32 %v1413, %v1414
    %v1416 = vsub.f32 1.0, %v1415
    %v1417 = vmul.f32 %v1414, %v1416
    %v1418 = vadd.f32 %v1414, %v1417
    %vm1419 = vweird.f32 %v1413
    %vm1420 = vweird.f32 %v1414
    %vm1421 = vmor %vm1419, %vm1420
    %v1422 = vsel %vm1421, %v1414, %v1418
    %v1423 = vand.u32 2147483647, %v1413
    %vm1424 = vcmp.eq.f32.partialorder %v1423, 8.507059e+37
    %v1425 = vand.u32 %v1413, 2147483648
    %v1426 = vor.u32 1.1754944e-38, %v1425
    %v1427 = vsel %vm1424, %v1426, %v1422
    %v1428 = vmul.f32 1.0, %v1427
    %s1429 = scalar_lea.vmem %s11, 72
    %v1430 = vld [vmem:[%s1429] sm:$0x7f]
    %v1431 = vsub.f32 %v1428, %v1430
    %vm1432 = vcmp.gt.f32.partialorder %v1431, 0.0
    %v1433 = vsel %vm1432, 1, 0
    %v1434 = vcvt.s32.f32 %v1433
    %v1436 = vsel %vm117, %v1434, 0
    %1438 = vmatpush.xpose.msra.mxu0 0.0
    %1439 = vmatpush.xpose.msra.mxu0 0.0
    %1440 = vmatpush.xpose.msra.mxu0 0.0
    %1441 = vmatpush.xpose.msra.mxu0 0.0
    %1442 = vmatpush.xpose.msra.mxu0 0.0
    %1443 = vmatpush.xpose.msra.mxu0 0.0
    %1444 = vmatpush.xpose.msra.mxu0 0.0
    %1445 = vmatpush.xpose.msra.mxu0 0.0
    %1446 = vmatpush.xpose.msra.mxu0 0.0
    %1447 = vmatpush.xpose.msra.mxu0 0.0
    %1448 = vmatpush.xpose.msra.mxu0 0.0
    %1449 = vmatpush.xpose.msra.mxu0 0.0
    %1450 = vmatpush.xpose.msra.mxu0 %v478
    %1451 = vmatpush.xpose.msra.mxu0 %v475
    %1452 = vmatpush.xpose.msra.mxu0 %v472
    %1453 = vmatpush.xpose.msra.mxu0 %v469
    %1454 = vmatmul.f32.gmra.mxu0 %v1436
    %v1455 = vpop.f32.mrf.mxu0
    %v1456 = vadd.f32 %v438, %v1455
    %1457 = vdwg.mxu0
    %v1458 = vsub.f32 0.0, %v1456
    %v1459 = vmul.f32 %v1458, 1.442695
    %v1460 = vpow.pop %v1459
    %v1461 = vadd.f32 %v1460, 1.0
    %v1462 = vrcp.pop %v1461
    %v1463 = vmul.f32 %v1461, %v1462
    %v1464 = vsub.f32 1.0, %v1463
    %v1465 = vmul.f32 %v1462, %v1464
    %v1466 = vadd.f32 %v1462, %v1465
    %vm1467 = vweird.f32 %v1461
    %vm1468 = vweird.f32 %v1462
    %vm1469 = vmor %vm1467, %vm1468
    %v1470 = vsel %vm1469, %v1462, %v1466
    %v1471 = vand.u32 2147483647, %v1461
    %vm1472 = vcmp.eq.f32.partialorder %v1471, 8.507059e+37
    %v1473 = vand.u32 %v1461, 2147483648
    %v1474 = vor.u32 1.1754944e-38, %v1473
    %v1475 = vsel %vm1472, %v1474, %v1470
    %v1476 = vmul.f32 1.0, %v1475
    %s1477 = scalar_lea.vmem %s10, 80
    %v1478 = vld [vmem:[%s1477] sm:$0x7f]
    %v1479 = vsub.f32 %v1476, %v1478
    %vm1480 = vcmp.gt.f32.partialorder %v1479, 0.0
    %v1481 = vsel %vm1480, 1, 0
    %v1482 = vcvt.s32.f32 %v1481
    %v1484 = vsel %vm79, %v1482, 0
    %1486 = vmatpush.msra.mxu0 0.0
    %1487 = vmatpush.msra.mxu0 0.0
    %1488 = vmatpush.msra.mxu0 0.0
    %1489 = vmatpush.msra.mxu0 0.0
    %1490 = vmatpush.msra.mxu0 0.0
    %1491 = vmatpush.msra.mxu0 0.0
    %1492 = vmatpush.msra.mxu0 0.0
    %1493 = vmatpush.msra.mxu0 0.0
    %1494 = vmatpush.msra.mxu0 0.0
    %1495 = vmatpush.msra.mxu0 0.0
    %1496 = vmatpush.msra.mxu0 0.0
    %1497 = vmatpush.msra.mxu0 0.0
    %1498 = vmatpush.msra.mxu0 %v57
    %1499 = vmatpush.msra.mxu0 %v56
    %1500 = vmatpush.msra.mxu0 %v55
    %1501 = vmatpush.msra.mxu0 %v54
    %1502 = vmatmul.f32.gmra.mxu0 %v1484
    %v1503 = vpop.f32.mrf.mxu0
    %v1504 = vadd.f32 %v464, %v1503
    %1505 = vdwg.mxu0
    %v1506 = vsub.f32 0.0, %v1504
    %v1507 = vmul.f32 %v1506, 1.442695
    %v1508 = vpow.pop %v1507
    %v1509 = vadd.f32 %v1508, 1.0
    %v1510 = vrcp.pop %v1509
    %v1511 = vmul.f32 %v1509, %v1510
    %v1512 = vsub.f32 1.0, %v1511
    %v1513 = vmul.f32 %v1510, %v1512
    %v1514 = vadd.f32 %v1510, %v1513
    %vm1515 = vweird.f32 %v1509
    %vm1516 = vweird.f32 %v1510
    %vm1517 = vmor %vm1515, %vm1516
    %v1518 = vsel %vm1517, %v1510, %v1514
    %v1519 = vand.u32 2147483647, %v1509
    %vm1520 = vcmp.eq.f32.partialorder %v1519, 8.507059e+37
    %v1521 = vand.u32 %v1509, 2147483648
    %v1522 = vor.u32 1.1754944e-38, %v1521
    %v1523 = vsel %vm1520, %v1522, %v1518
    %v1524 = vmul.f32 1.0, %v1523
    %s1525 = scalar_lea.vmem %s11, 80
    %v1526 = vld [vmem:[%s1525] sm:$0x7f]
    %v1527 = vsub.f32 %v1524, %v1526
    %vm1528 = vcmp.gt.f32.partialorder %v1527, 0.0
    %v1529 = vsel %vm1528, 1, 0
    %v1530 = vcvt.s32.f32 %v1529
    %v1532 = vsel %vm117, %v1530, 0
    %1534 = vmatpush.xpose.msra.mxu0 0.0
    %1535 = vmatpush.xpose.msra.mxu0 0.0
    %1536 = vmatpush.xpose.msra.mxu0 0.0
    %1537 = vmatpush.xpose.msra.mxu0 0.0
    %1538 = vmatpush.xpose.msra.mxu0 0.0
    %1539 = vmatpush.xpose.msra.mxu0 0.0
    %1540 = vmatpush.xpose.msra.mxu0 0.0
    %1541 = vmatpush.xpose.msra.mxu0 0.0
    %1542 = vmatpush.xpose.msra.mxu0 0.0
    %1543 = vmatpush.xpose.msra.mxu0 0.0
    %1544 = vmatpush.xpose.msra.mxu0 0.0
    %1545 = vmatpush.xpose.msra.mxu0 0.0
    %1546 = vmatpush.xpose.msra.mxu0 %v478
    %1547 = vmatpush.xpose.msra.mxu0 %v475
    %1548 = vmatpush.xpose.msra.mxu0 %v472
    %1549 = vmatpush.xpose.msra.mxu0 %v469
    %1550 = vmatmul.f32.gmra.mxu0 %v1532
    %v1551 = vpop.f32.mrf.mxu0
    %v1552 = vadd.f32 %v438, %v1551
    %1553 = vdwg.mxu0
    %v1554 = vsub.f32 0.0, %v1552
    %v1555 = vmul.f32 %v1554, 1.442695
    %v1556 = vpow.pop %v1555
    %v1557 = vadd.f32 %v1556, 1.0
    %v1558 = vrcp.pop %v1557
    %v1559 = vmul.f32 %v1557, %v1558
    %v1560 = vsub.f32 1.0, %v1559
    %v1561 = vmul.f32 %v1558, %v1560
    %v1562 = vadd.f32 %v1558, %v1561
    %vm1563 = vweird.f32 %v1557
    %vm1564 = vweird.f32 %v1558
    %vm1565 = vmor %vm1563, %vm1564
    %v1566 = vsel %vm1565, %v1558, %v1562
    %v1567 = vand.u32 2147483647, %v1557
    %vm1568 = vcmp.eq.f32.partialorder %v1567, 8.507059e+37
    %v1569 = vand.u32 %v1557, 2147483648
    %v1570 = vor.u32 1.1754944e-38, %v1569
    %v1571 = vsel %vm1568, %v1570, %v1566
    %v1572 = vmul.f32 1.0, %v1571
    %s1573 = scalar_lea.vmem %s10, 88
    %v1574 = vld [vmem:[%s1573] sm:$0x7f]
    %v1575 = vsub.f32 %v1572, %v1574
    %vm1576 = vcmp.gt.f32.partialorder %v1575, 0.0
    %v1577 = vsel %vm1576, 1, 0
    %v1578 = vcvt.s32.f32 %v1577
    %v1580 = vsel %vm79, %v1578, 0
    %1582 = vmatpush.msra.mxu0 0.0
    %1583 = vmatpush.msra.mxu0 0.0
    %1584 = vmatpush.msra.mxu0 0.0
    %1585 = vmatpush.msra.mxu0 0.0
    %1586 = vmatpush.msra.mxu0 0.0
    %1587 = vmatpush.msra.mxu0 0.0
    %1588 = vmatpush.msra.mxu0 0.0
    %1589 = vmatpush.msra.mxu0 0.0
    %1590 = vmatpush.msra.mxu0 0.0
    %1591 = vmatpush.msra.mxu0 0.0
    %1592 = vmatpush.msra.mxu0 0.0
    %1593 = vmatpush.msra.mxu0 0.0
    %1594 = vmatpush.msra.mxu0 %v57
    %1595 = vmatpush.msra.mxu0 %v56
    %1596 = vmatpush.msra.mxu0 %v55
    %1597 = vmatpush.msra.mxu0 %v54
    %1598 = vmatmul.f32.gmra.mxu0 %v1580
    %v1599 = vpop.f32.mrf.mxu0
    %v1600 = vadd.f32 %v464, %v1599
    %1601 = vdwg.mxu0
    %v1602 = vsub.f32 0.0, %v1600
    %v1603 = vmul.f32 %v1602, 1.442695
    %v1604 = vpow.pop %v1603
    %v1605 = vadd.f32 %v1604, 1.0
    %v1606 = vrcp.pop %v1605
    %v1607 = vmul.f32 %v1605, %v1606
    %v1608 = vsub.f32 1.0, %v1607
    %v1609 = vmul.f32 %v1606, %v1608
    %v1610 = vadd.f32 %v1606, %v1609
    %vm1611 = vweird.f32 %v1605
    %vm1612 = vweird.f32 %v1606
    %vm1613 = vmor %vm1611, %vm1612
    %v1614 = vsel %vm1613, %v1606, %v1610
    %v1615 = vand.u32 2147483647, %v1605
    %vm1616 = vcmp.eq.f32.partialorder %v1615, 8.507059e+37
    %v1617 = vand.u32 %v1605, 2147483648
    %v1618 = vor.u32 1.1754944e-38, %v1617
    %v1619 = vsel %vm1616, %v1618, %v1614
    %v1620 = vmul.f32 1.0, %v1619
    %s1621 = scalar_lea.vmem %s11, 88
    %v1622 = vld [vmem:[%s1621] sm:$0x7f]
    %v1623 = vsub.f32 %v1620, %v1622
    %vm1624 = vcmp.gt.f32.partialorder %v1623, 0.0
    %v1625 = vsel %vm1624, 1, 0
    %v1626 = vcvt.s32.f32 %v1625
    %v1628 = vsel %vm117, %v1626, 0
    %1630 = vmatpush.xpose.msra.mxu0 0.0
    %1631 = vmatpush.xpose.msra.mxu0 0.0
    %1632 = vmatpush.xpose.msra.mxu0 0.0
    %1633 = vmatpush.xpose.msra.mxu0 0.0
    %1634 = vmatpush.xpose.msra.mxu0 0.0
    %1635 = vmatpush.xpose.msra.mxu0 0.0
    %1636 = vmatpush.xpose.msra.mxu0 0.0
    %1637 = vmatpush.xpose.msra.mxu0 0.0
    %1638 = vmatpush.xpose.msra.mxu0 0.0
    %1639 = vmatpush.xpose.msra.mxu0 0.0
    %1640 = vmatpush.xpose.msra.mxu0 0.0
    %1641 = vmatpush.xpose.msra.mxu0 0.0
    %1642 = vmatpush.xpose.msra.mxu0 %v478
    %1643 = vmatpush.xpose.msra.mxu0 %v475
    %1644 = vmatpush.xpose.msra.mxu0 %v472
    %1645 = vmatpush.xpose.msra.mxu0 %v469
    %1646 = vmatmul.f32.gmra.mxu0 %v1628
    %v1647 = vpop.f32.mrf.mxu0
    %v1648 = vadd.f32 %v438, %v1647
    %1649 = vdwg.mxu0
    %v1650 = vsub.f32 0.0, %v1648
    %v1651 = vmul.f32 %v1650, 1.442695
    %v1652 = vpow.pop %v1651
    %v1653 = vadd.f32 %v1652, 1.0
    %v1654 = vrcp.pop %v1653
    %v1655 = vmul.f32 %v1653, %v1654
    %v1656 = vsub.f32 1.0, %v1655
    %v1657 = vmul.f32 %v1654, %v1656
    %v1658 = vadd.f32 %v1654, %v1657
    %vm1659 = vweird.f32 %v1653
    %vm1660 = vweird.f32 %v1654
    %vm1661 = vmor %vm1659, %vm1660
    %v1662 = vsel %vm1661, %v1654, %v1658
    %v1663 = vand.u32 2147483647, %v1653
    %vm1664 = vcmp.eq.f32.partialorder %v1663, 8.507059e+37
    %v1665 = vand.u32 %v1653, 2147483648
    %v1666 = vor.u32 1.1754944e-38, %v1665
    %v1667 = vsel %vm1664, %v1666, %v1662
    %v1668 = vmul.f32 1.0, %v1667
    %s1669 = scalar_lea.vmem %s10, 96
    %v1670 = vld [vmem:[%s1669] sm:$0x7f]
    %v1671 = vsub.f32 %v1668, %v1670
    %vm1672 = vcmp.gt.f32.partialorder %v1671, 0.0
    %v1673 = vsel %vm1672, 1, 0
    %v1674 = vcvt.s32.f32 %v1673
    %v1676 = vsel %vm79, %v1674, 0
    %1678 = vmatpush.msra.mxu0 0.0
    %1679 = vmatpush.msra.mxu0 0.0
    %1680 = vmatpush.msra.mxu0 0.0
    %1681 = vmatpush.msra.mxu0 0.0
    %1682 = vmatpush.msra.mxu0 0.0
    %1683 = vmatpush.msra.mxu0 0.0
    %1684 = vmatpush.msra.mxu0 0.0
    %1685 = vmatpush.msra.mxu0 0.0
    %1686 = vmatpush.msra.mxu0 0.0
    %1687 = vmatpush.msra.mxu0 0.0
    %1688 = vmatpush.msra.mxu0 0.0
    %1689 = vmatpush.msra.mxu0 0.0
    %1690 = vmatpush.msra.mxu0 %v57
    %1691 = vmatpush.msra.mxu0 %v56
    %1692 = vmatpush.msra.mxu0 %v55
    %1693 = vmatpush.msra.mxu0 %v54
    %1694 = vmatmul.f32.gmra.mxu0 %v1676
    %v1695 = vpop.f32.mrf.mxu0
    %v1696 = vadd.f32 %v464, %v1695
    %1697 = vdwg.mxu0
    %v1698 = vsub.f32 0.0, %v1696
    %v1699 = vmul.f32 %v1698, 1.442695
    %v1700 = vpow.pop %v1699
    %v1701 = vadd.f32 %v1700, 1.0
    %v1702 = vrcp.pop %v1701
    %v1703 = vmul.f32 %v1701, %v1702
    %v1704 = vsub.f32 1.0, %v1703
    %v1705 = vmul.f32 %v1702, %v1704
    %v1706 = vadd.f32 %v1702, %v1705
    %vm1707 = vweird.f32 %v1701
    %vm1708 = vweird.f32 %v1702
    %vm1709 = vmor %vm1707, %vm1708
    %v1710 = vsel %vm1709, %v1702, %v1706
    %v1711 = vand.u32 2147483647, %v1701
    %vm1712 = vcmp.eq.f32.partialorder %v1711, 8.507059e+37
    %v1713 = vand.u32 %v1701, 2147483648
    %v1714 = vor.u32 1.1754944e-38, %v1713
    %v1715 = vsel %vm1712, %v1714, %v1710
    %v1716 = vmul.f32 1.0, %v1715
    %s1717 = scalar_lea.vmem %s11, 96
    %v1718 = vld [vmem:[%s1717] sm:$0x7f]
    %v1719 = vsub.f32 %v1716, %v1718
    %vm1720 = vcmp.gt.f32.partialorder %v1719, 0.0
    %v1721 = vsel %vm1720, 1, 0
    %v1722 = vcvt.s32.f32 %v1721
    %v1724 = vsel %vm117, %v1722, 0
    %1726 = vmatpush.xpose.msra.mxu0 0.0
    %1727 = vmatpush.xpose.msra.mxu0 0.0
    %1728 = vmatpush.xpose.msra.mxu0 0.0
    %1729 = vmatpush.xpose.msra.mxu0 0.0
    %1730 = vmatpush.xpose.msra.mxu0 0.0
    %1731 = vmatpush.xpose.msra.mxu0 0.0
    %1732 = vmatpush.xpose.msra.mxu0 0.0
    %1733 = vmatpush.xpose.msra.mxu0 0.0
    %1734 = vmatpush.xpose.msra.mxu0 0.0
    %1735 = vmatpush.xpose.msra.mxu0 0.0
    %1736 = vmatpush.xpose.msra.mxu0 0.0
    %1737 = vmatpush.xpose.msra.mxu0 0.0
    %1738 = vmatpush.xpose.msra.mxu0 %v478
    %1739 = vmatpush.xpose.msra.mxu0 %v475
    %1740 = vmatpush.xpose.msra.mxu0 %v472
    %1741 = vmatpush.xpose.msra.mxu0 %v469
    %1742 = vmatmul.f32.gmra.mxu0 %v1724
    %v1743 = vpop.f32.mrf.mxu0
    %v1744 = vadd.f32 %v438, %v1743
    %1745 = vdwg.mxu0
    %v1746 = vsub.f32 0.0, %v1744
    %v1747 = vmul.f32 %v1746, 1.442695
    %v1748 = vpow.pop %v1747
    %v1749 = vadd.f32 %v1748, 1.0
    %v1750 = vrcp.pop %v1749
    %v1751 = vmul.f32 %v1749, %v1750
    %v1752 = vsub.f32 1.0, %v1751
    %v1753 = vmul.f32 %v1750, %v1752
    %v1754 = vadd.f32 %v1750, %v1753
    %vm1755 = vweird.f32 %v1749
    %vm1756 = vweird.f32 %v1750
    %vm1757 = vmor %vm1755, %vm1756
    %v1758 = vsel %vm1757, %v1750, %v1754
    %v1759 = vand.u32 2147483647, %v1749
    %vm1760 = vcmp.eq.f32.partialorder %v1759, 8.507059e+37
    %v1761 = vand.u32 %v1749, 2147483648
    %v1762 = vor.u32 1.1754944e-38, %v1761
    %v1763 = vsel %vm1760, %v1762, %v1758
    %v1764 = vmul.f32 1.0, %v1763
    %s1765 = scalar_lea.vmem %s10, 104
    %v1766 = vld [vmem:[%s1765] sm:$0x7f]
    %v1767 = vsub.f32 %v1764, %v1766
    %vm1768 = vcmp.gt.f32.partialorder %v1767, 0.0
    %v1769 = vsel %vm1768, 1, 0
    %v1770 = vcvt.s32.f32 %v1769
    %v1772 = vsel %vm79, %v1770, 0
    %1774 = vmatpush.msra.mxu0 0.0
    %1775 = vmatpush.msra.mxu0 0.0
    %1776 = vmatpush.msra.mxu0 0.0
    %1777 = vmatpush.msra.mxu0 0.0
    %1778 = vmatpush.msra.mxu0 0.0
    %1779 = vmatpush.msra.mxu0 0.0
    %1780 = vmatpush.msra.mxu0 0.0
    %1781 = vmatpush.msra.mxu0 0.0
    %1782 = vmatpush.msra.mxu0 0.0
    %1783 = vmatpush.msra.mxu0 0.0
    %1784 = vmatpush.msra.mxu0 0.0
    %1785 = vmatpush.msra.mxu0 0.0
    %1786 = vmatpush.msra.mxu0 %v57
    %1787 = vmatpush.msra.mxu0 %v56
    %1788 = vmatpush.msra.mxu0 %v55
    %1789 = vmatpush.msra.mxu0 %v54
    %1790 = vmatmul.f32.gmra.mxu0 %v1772
    %v1791 = vpop.f32.mrf.mxu0
    %v1792 = vadd.f32 %v464, %v1791
    %1793 = vdwg.mxu0
    %v1794 = vsub.f32 0.0, %v1792
    %v1795 = vmul.f32 %v1794, 1.442695
    %v1796 = vpow.pop %v1795
    %v1797 = vadd.f32 %v1796, 1.0
    %v1798 = vrcp.pop %v1797
    %v1799 = vmul.f32 %v1797, %v1798
    %v1800 = vsub.f32 1.0, %v1799
    %v1801 = vmul.f32 %v1798, %v1800
    %v1802 = vadd.f32 %v1798, %v1801
    %vm1803 = vweird.f32 %v1797
    %vm1804 = vweird.f32 %v1798
    %vm1805 = vmor %vm1803, %vm1804
    %v1806 = vsel %vm1805, %v1798, %v1802
    %v1807 = vand.u32 2147483647, %v1797
    %vm1808 = vcmp.eq.f32.partialorder %v1807, 8.507059e+37
    %v1809 = vand.u32 %v1797, 2147483648
    %v1810 = vor.u32 1.1754944e-38, %v1809
    %v1811 = vsel %vm1808, %v1810, %v1806
    %v1812 = vmul.f32 1.0, %v1811
    %s1813 = scalar_lea.vmem %s11, 104
    %v1814 = vld [vmem:[%s1813] sm:$0x7f]
    %v1815 = vsub.f32 %v1812, %v1814
    %vm1816 = vcmp.gt.f32.partialorder %v1815, 0.0
    %v1817 = vsel %vm1816, 1, 0
    %v1818 = vcvt.s32.f32 %v1817
    %v1820 = vsel %vm117, %v1818, 0
    %1822 = vmatpush.xpose.msra.mxu0 0.0
    %1823 = vmatpush.xpose.msra.mxu0 0.0
    %1824 = vmatpush.xpose.msra.mxu0 0.0
    %1825 = vmatpush.xpose.msra.mxu0 0.0
    %1826 = vmatpush.xpose.msra.mxu0 0.0
    %1827 = vmatpush.xpose.msra.mxu0 0.0
    %1828 = vmatpush.xpose.msra.mxu0 0.0
    %1829 = vmatpush.xpose.msra.mxu0 0.0
    %1830 = vmatpush.xpose.msra.mxu0 0.0
    %1831 = vmatpush.xpose.msra.mxu0 0.0
    %1832 = vmatpush.xpose.msra.mxu0 0.0
    %1833 = vmatpush.xpose.msra.mxu0 0.0
    %1834 = vmatpush.xpose.msra.mxu0 %v478
    %1835 = vmatpush.xpose.msra.mxu0 %v475
    %1836 = vmatpush.xpose.msra.mxu0 %v472
    %1837 = vmatpush.xpose.msra.mxu0 %v469
    %1838 = vmatmul.f32.gmra.mxu0 %v1820
    %v1839 = vpop.f32.mrf.mxu0
    %v1840 = vadd.f32 %v438, %v1839
    %1841 = vdwg.mxu0
    %v1842 = vsub.f32 0.0, %v1840
    %v1843 = vmul.f32 %v1842, 1.442695
    %v1844 = vpow.pop %v1843
    %v1845 = vadd.f32 %v1844, 1.0
    %v1846 = vrcp.pop %v1845
    %v1847 = vmul.f32 %v1845, %v1846
    %v1848 = vsub.f32 1.0, %v1847
    %v1849 = vmul.f32 %v1846, %v1848
    %v1850 = vadd.f32 %v1846, %v1849
    %vm1851 = vweird.f32 %v1845
    %vm1852 = vweird.f32 %v1846
    %vm1853 = vmor %vm1851, %vm1852
    %v1854 = vsel %vm1853, %v1846, %v1850
    %v1855 = vand.u32 2147483647, %v1845
    %vm1856 = vcmp.eq.f32.partialorder %v1855, 8.507059e+37
    %v1857 = vand.u32 %v1845, 2147483648
    %v1858 = vor.u32 1.1754944e-38, %v1857
    %v1859 = vsel %vm1856, %v1858, %v1854
    %v1860 = vmul.f32 1.0, %v1859
    %s1861 = scalar_lea.vmem %s10, 112
    %v1862 = vld [vmem:[%s1861] sm:$0x7f]
    %v1863 = vsub.f32 %v1860, %v1862
    %vm1864 = vcmp.gt.f32.partialorder %v1863, 0.0
    %v1865 = vsel %vm1864, 1, 0
    %v1866 = vcvt.s32.f32 %v1865
    %v1868 = vsel %vm79, %v1866, 0
    %1870 = vmatpush.msra.mxu0 0.0
    %1871 = vmatpush.msra.mxu0 0.0
    %1872 = vmatpush.msra.mxu0 0.0
    %1873 = vmatpush.msra.mxu0 0.0
    %1874 = vmatpush.msra.mxu0 0.0
    %1875 = vmatpush.msra.mxu0 0.0
    %1876 = vmatpush.msra.mxu0 0.0
    %1877 = vmatpush.msra.mxu0 0.0
    %1878 = vmatpush.msra.mxu0 0.0
    %1879 = vmatpush.msra.mxu0 0.0
    %1880 = vmatpush.msra.mxu0 0.0
    %1881 = vmatpush.msra.mxu0 0.0
    %1882 = vmatpush.msra.mxu0 %v57
    %1883 = vmatpush.msra.mxu0 %v56
    %1884 = vmatpush.msra.mxu0 %v55
    %1885 = vmatpush.msra.mxu0 %v54
    %1886 = vmatmul.f32.gmra.mxu0 %v1868
    %v1887 = vpop.f32.mrf.mxu0
    %v1888 = vadd.f32 %v464, %v1887
    %1889 = vdwg.mxu0
    %v1890 = vsub.f32 0.0, %v1888
    %v1891 = vmul.f32 %v1890, 1.442695
    %v1892 = vpow.pop %v1891
    %v1893 = vadd.f32 %v1892, 1.0
    %v1894 = vrcp.pop %v1893
    %v1895 = vmul.f32 %v1893, %v1894
    %v1896 = vsub.f32 1.0, %v1895
    %v1897 = vmul.f32 %v1894, %v1896
    %v1898 = vadd.f32 %v1894, %v1897
    %vm1899 = vweird.f32 %v1893
    %vm1900 = vweird.f32 %v1894
    %vm1901 = vmor %vm1899, %vm1900
    %v1902 = vsel %vm1901, %v1894, %v1898
    %v1903 = vand.u32 2147483647, %v1893
    %vm1904 = vcmp.eq.f32.partialorder %v1903, 8.507059e+37
    %v1905 = vand.u32 %v1893, 2147483648
    %v1906 = vor.u32 1.1754944e-38, %v1905
    %v1907 = vsel %vm1904, %v1906, %v1902
    %v1908 = vmul.f32 1.0, %v1907
    %s1909 = scalar_lea.vmem %s11, 112
    %v1910 = vld [vmem:[%s1909] sm:$0x7f]
    %v1911 = vsub.f32 %v1908, %v1910
    %vm1912 = vcmp.gt.f32.partialorder %v1911, 0.0
    %v1913 = vsel %vm1912, 1, 0
    %v1914 = vcvt.s32.f32 %v1913
    %v1916 = vsel %vm117, %v1914, 0
    %1918 = vmatpush.xpose.msra.mxu0 0.0
    %1919 = vmatpush.xpose.msra.mxu0 0.0
    %1920 = vmatpush.xpose.msra.mxu0 0.0
    %1921 = vmatpush.xpose.msra.mxu0 0.0
    %1922 = vmatpush.xpose.msra.mxu0 0.0
    %1923 = vmatpush.xpose.msra.mxu0 0.0
    %1924 = vmatpush.xpose.msra.mxu0 0.0
    %1925 = vmatpush.xpose.msra.mxu0 0.0
    %1926 = vmatpush.xpose.msra.mxu0 0.0
    %1927 = vmatpush.xpose.msra.mxu0 0.0
    %1928 = vmatpush.xpose.msra.mxu0 0.0
    %1929 = vmatpush.xpose.msra.mxu0 0.0
    %1930 = vmatpush.xpose.msra.mxu0 %v478
    %1931 = vmatpush.xpose.msra.mxu0 %v475
    %1932 = vmatpush.xpose.msra.mxu0 %v472
    %1933 = vmatpush.xpose.msra.mxu0 %v469
    %1934 = vmatmul.f32.gmra.mxu0 %v1916
    %v1935 = vpop.f32.mrf.mxu0
    %v1936 = vadd.f32 %v438, %v1935
    %1937 = vdwg.mxu0
    %v1938 = vsub.f32 0.0, %v1936
    %v1939 = vmul.f32 %v1938, 1.442695
    %v1940 = vpow.pop %v1939
    %v1941 = vadd.f32 %v1940, 1.0
    %v1942 = vrcp.pop %v1941
    %v1943 = vmul.f32 %v1941, %v1942
    %v1944 = vsub.f32 1.0, %v1943
    %v1945 = vmul.f32 %v1942, %v1944
    %v1946 = vadd.f32 %v1942, %v1945
    %vm1947 = vweird.f32 %v1941
    %vm1948 = vweird.f32 %v1942
    %vm1949 = vmor %vm1947, %vm1948
    %v1950 = vsel %vm1949, %v1942, %v1946
    %v1951 = vand.u32 2147483647, %v1941
    %vm1952 = vcmp.eq.f32.partialorder %v1951, 8.507059e+37
    %v1953 = vand.u32 %v1941, 2147483648
    %v1954 = vor.u32 1.1754944e-38, %v1953
    %v1955 = vsel %vm1952, %v1954, %v1950
    %v1956 = vmul.f32 1.0, %v1955
    %s1957 = scalar_lea.vmem %s10, 120
    %v1958 = vld [vmem:[%s1957] sm:$0x7f]
    %v1959 = vsub.f32 %v1956, %v1958
    %vm1960 = vcmp.gt.f32.partialorder %v1959, 0.0
    %v1961 = vsel %vm1960, 1, 0
    %v1962 = vcvt.s32.f32 %v1961
    %v1964 = vsel %vm79, %v1962, 0
    %1966 = vmatpush.msra.mxu0 0.0
    %1967 = vmatpush.msra.mxu0 0.0
    %1968 = vmatpush.msra.mxu0 0.0
    %1969 = vmatpush.msra.mxu0 0.0
    %1970 = vmatpush.msra.mxu0 0.0
    %1971 = vmatpush.msra.mxu0 0.0
    %1972 = vmatpush.msra.mxu0 0.0
    %1973 = vmatpush.msra.mxu0 0.0
    %1974 = vmatpush.msra.mxu0 0.0
    %1975 = vmatpush.msra.mxu0 0.0
    %1976 = vmatpush.msra.mxu0 0.0
    %1977 = vmatpush.msra.mxu0 0.0
    %1978 = vmatpush.msra.mxu0 %v57
    %1979 = vmatpush.msra.mxu0 %v56
    %1980 = vmatpush.msra.mxu0 %v55
    %1981 = vmatpush.msra.mxu0 %v54
    %1982 = vmatmul.f32.gmra.mxu0 %v1964
    %v1983 = vpop.f32.mrf.mxu0
    %v1984 = vadd.f32 %v464, %v1983
    %1985 = vdwg.mxu0
    %v1986 = vsub.f32 0.0, %v1984
    %v1987 = vmul.f32 %v1986, 1.442695
    %v1988 = vpow.pop %v1987
    %v1989 = vadd.f32 %v1988, 1.0
    %v1990 = vrcp.pop %v1989
    %v1991 = vmul.f32 %v1989, %v1990
    %v1992 = vsub.f32 1.0, %v1991
    %v1993 = vmul.f32 %v1990, %v1992
    %v1994 = vadd.f32 %v1990, %v1993
    %vm1995 = vweird.f32 %v1989
    %vm1996 = vweird.f32 %v1990
    %vm1997 = vmor %vm1995, %vm1996
    %v1998 = vsel %vm1997, %v1990, %v1994
    %v1999 = vand.u32 2147483647, %v1989
    %vm2000 = vcmp.eq.f32.partialorder %v1999, 8.507059e+37
    %v2001 = vand.u32 %v1989, 2147483648
    %v2002 = vor.u32 1.1754944e-38, %v2001
    %v2003 = vsel %vm2000, %v2002, %v1998
    %v2004 = vmul.f32 1.0, %v2003
    %s2005 = scalar_lea.vmem %s11, 120
    %v2006 = vld [vmem:[%s2005] sm:$0x7f]
    %v2007 = vsub.f32 %v2004, %v2006
    %vm2008 = vcmp.gt.f32.partialorder %v2007, 0.0
    %v2009 = vsel %vm2008, 1, 0
    %v2010 = vcvt.s32.f32 %v2009
    %v2012 = vsel %vm117, %v2010, 0
    %2014 = vmatpush.xpose.msra.mxu0 0.0
    %2015 = vmatpush.xpose.msra.mxu0 0.0
    %2016 = vmatpush.xpose.msra.mxu0 0.0
    %2017 = vmatpush.xpose.msra.mxu0 0.0
    %2018 = vmatpush.xpose.msra.mxu0 0.0
    %2019 = vmatpush.xpose.msra.mxu0 0.0
    %2020 = vmatpush.xpose.msra.mxu0 0.0
    %2021 = vmatpush.xpose.msra.mxu0 0.0
    %2022 = vmatpush.xpose.msra.mxu0 0.0
    %2023 = vmatpush.xpose.msra.mxu0 0.0
    %2024 = vmatpush.xpose.msra.mxu0 0.0
    %2025 = vmatpush.xpose.msra.mxu0 0.0
    %2026 = vmatpush.xpose.msra.mxu0 %v478
    %2027 = vmatpush.xpose.msra.mxu0 %v475
    %2028 = vmatpush.xpose.msra.mxu0 %v472
    %2029 = vmatpush.xpose.msra.mxu0 %v469
    %2030 = vmatmul.f32.gmra.mxu0 %v2012
    %v2031 = vpop.f32.mrf.mxu0
    %v2032 = vadd.f32 %v438, %v2031
    %2033 = vdwg.mxu0
    %v2034 = vsub.f32 0.0, %v2032
    %v2035 = vmul.f32 %v2034, 1.442695
    %v2036 = vpow.pop %v2035
    %v2037 = vadd.f32 %v2036, 1.0
    %v2038 = vrcp.pop %v2037
    %v2039 = vmul.f32 %v2037, %v2038
    %v2040 = vsub.f32 1.0, %v2039
    %v2041 = vmul.f32 %v2038, %v2040
    %v2042 = vadd.f32 %v2038, %v2041
    %vm2043 = vweird.f32 %v2037
    %vm2044 = vweird.f32 %v2038
    %vm2045 = vmor %vm2043, %vm2044
    %v2046 = vsel %vm2045, %v2038, %v2042
    %v2047 = vand.u32 2147483647, %v2037
    %vm2048 = vcmp.eq.f32.partialorder %v2047, 8.507059e+37
    %v2049 = vand.u32 %v2037, 2147483648
    %v2050 = vor.u32 1.1754944e-38, %v2049
    %v2051 = vsel %vm2048, %v2050, %v2046
    %v2052 = vmul.f32 1.0, %v2051
    %s2053 = scalar_lea.vmem %s10, 128
    %v2054 = vld [vmem:[%s2053] sm:$0x7f]
    %v2055 = vsub.f32 %v2052, %v2054
    %vm2056 = vcmp.gt.f32.partialorder %v2055, 0.0
    %v2057 = vsel %vm2056, 1, 0
    %v2058 = vcvt.s32.f32 %v2057
    %v2060 = vsel %vm79, %v2058, 0
    %2062 = vmatpush.msra.mxu0 0.0
    %2063 = vmatpush.msra.mxu0 0.0
    %2064 = vmatpush.msra.mxu0 0.0
    %2065 = vmatpush.msra.mxu0 0.0
    %2066 = vmatpush.msra.mxu0 0.0
    %2067 = vmatpush.msra.mxu0 0.0
    %2068 = vmatpush.msra.mxu0 0.0
    %2069 = vmatpush.msra.mxu0 0.0
    %2070 = vmatpush.msra.mxu0 0.0
    %2071 = vmatpush.msra.mxu0 0.0
    %2072 = vmatpush.msra.mxu0 0.0
    %2073 = vmatpush.msra.mxu0 0.0
    %2074 = vmatpush.msra.mxu0 %v57
    %2075 = vmatpush.msra.mxu0 %v56
    %2076 = vmatpush.msra.mxu0 %v55
    %2077 = vmatpush.msra.mxu0 %v54
    %2078 = vmatmul.f32.gmra.mxu0 %v2060
    %v2079 = vpop.f32.mrf.mxu0
    %v2080 = vadd.f32 %v464, %v2079
    %2081 = vdwg.mxu0
    %v2082 = vsub.f32 0.0, %v2080
    %v2083 = vmul.f32 %v2082, 1.442695
    %v2084 = vpow.pop %v2083
    %v2085 = vadd.f32 %v2084, 1.0
    %v2086 = vrcp.pop %v2085
    %v2087 = vmul.f32 %v2085, %v2086
    %v2088 = vsub.f32 1.0, %v2087
    %v2089 = vmul.f32 %v2086, %v2088
    %v2090 = vadd.f32 %v2086, %v2089
    %vm2091 = vweird.f32 %v2085
    %vm2092 = vweird.f32 %v2086
    %vm2093 = vmor %vm2091, %vm2092
    %v2094 = vsel %vm2093, %v2086, %v2090
    %v2095 = vand.u32 2147483647, %v2085
    %vm2096 = vcmp.eq.f32.partialorder %v2095, 8.507059e+37
    %v2097 = vand.u32 %v2085, 2147483648
    %v2098 = vor.u32 1.1754944e-38, %v2097
    %v2099 = vsel %vm2096, %v2098, %v2094
    %v2100 = vmul.f32 1.0, %v2099
    %s2101 = scalar_lea.vmem %s11, 128
    %v2102 = vld [vmem:[%s2101] sm:$0x7f]
    %v2103 = vsub.f32 %v2100, %v2102
    %vm2104 = vcmp.gt.f32.partialorder %v2103, 0.0
    %v2105 = vsel %vm2104, 1, 0
    %v2106 = vcvt.s32.f32 %v2105
    %v2108 = vsel %vm117, %v2106, 0
    %2110 = vmatpush.xpose.msra.mxu0 0.0
    %2111 = vmatpush.xpose.msra.mxu0 0.0
    %2112 = vmatpush.xpose.msra.mxu0 0.0
    %2113 = vmatpush.xpose.msra.mxu0 0.0
    %2114 = vmatpush.xpose.msra.mxu0 0.0
    %2115 = vmatpush.xpose.msra.mxu0 0.0
    %2116 = vmatpush.xpose.msra.mxu0 0.0
    %2117 = vmatpush.xpose.msra.mxu0 0.0
    %2118 = vmatpush.xpose.msra.mxu0 0.0
    %2119 = vmatpush.xpose.msra.mxu0 0.0
    %2120 = vmatpush.xpose.msra.mxu0 0.0
    %2121 = vmatpush.xpose.msra.mxu0 0.0
    %2122 = vmatpush.xpose.msra.mxu0 %v478
    %2123 = vmatpush.xpose.msra.mxu0 %v475
    %2124 = vmatpush.xpose.msra.mxu0 %v472
    %2125 = vmatpush.xpose.msra.mxu0 %v469
    %2126 = vmatmul.f32.gmra.mxu0 %v2108
    %v2127 = vpop.f32.mrf.mxu0
    %v2128 = vadd.f32 %v438, %v2127
    %2129 = vdwg.mxu0
    %v2130 = vsub.f32 0.0, %v2128
    %v2131 = vmul.f32 %v2130, 1.442695
    %v2132 = vpow.pop %v2131
    %v2133 = vadd.f32 %v2132, 1.0
    %v2134 = vrcp.pop %v2133
    %v2135 = vmul.f32 %v2133, %v2134
    %v2136 = vsub.f32 1.0, %v2135
    %v2137 = vmul.f32 %v2134, %v2136
    %v2138 = vadd.f32 %v2134, %v2137
    %vm2139 = vweird.f32 %v2133
    %vm2140 = vweird.f32 %v2134
    %vm2141 = vmor %vm2139, %vm2140
    %v2142 = vsel %vm2141, %v2134, %v2138
    %v2143 = vand.u32 2147483647, %v2133
    %vm2144 = vcmp.eq.f32.partialorder %v2143, 8.507059e+37
    %v2145 = vand.u32 %v2133, 2147483648
    %v2146 = vor.u32 1.1754944e-38, %v2145
    %v2147 = vsel %vm2144, %v2146, %v2142
    %v2148 = vmul.f32 1.0, %v2147
    %s2149 = scalar_lea.vmem %s10, 136
    %v2150 = vld [vmem:[%s2149] sm:$0x7f]
    %v2151 = vsub.f32 %v2148, %v2150
    %vm2152 = vcmp.gt.f32.partialorder %v2151, 0.0
    %v2153 = vsel %vm2152, 1, 0
    %v2154 = vcvt.s32.f32 %v2153
    %v2156 = vsel %vm79, %v2154, 0
    %2158 = vmatpush.msra.mxu0 0.0
    %2159 = vmatpush.msra.mxu0 0.0
    %2160 = vmatpush.msra.mxu0 0.0
    %2161 = vmatpush.msra.mxu0 0.0
    %2162 = vmatpush.msra.mxu0 0.0
    %2163 = vmatpush.msra.mxu0 0.0
    %2164 = vmatpush.msra.mxu0 0.0
    %2165 = vmatpush.msra.mxu0 0.0
    %2166 = vmatpush.msra.mxu0 0.0
    %2167 = vmatpush.msra.mxu0 0.0
    %2168 = vmatpush.msra.mxu0 0.0
    %2169 = vmatpush.msra.mxu0 0.0
    %2170 = vmatpush.msra.mxu0 %v57
    %2171 = vmatpush.msra.mxu0 %v56
    %2172 = vmatpush.msra.mxu0 %v55
    %2173 = vmatpush.msra.mxu0 %v54
    %2174 = vmatmul.f32.gmra.mxu0 %v2156
    %v2175 = vpop.f32.mrf.mxu0
    %v2176 = vadd.f32 %v464, %v2175
    %2177 = vdwg.mxu0
    %v2178 = vsub.f32 0.0, %v2176
    %v2179 = vmul.f32 %v2178, 1.442695
    %v2180 = vpow.pop %v2179
    %v2181 = vadd.f32 %v2180, 1.0
    %v2182 = vrcp.pop %v2181
    %v2183 = vmul.f32 %v2181, %v2182
    %v2184 = vsub.f32 1.0, %v2183
    %v2185 = vmul.f32 %v2182, %v2184
    %v2186 = vadd.f32 %v2182, %v2185
    %vm2187 = vweird.f32 %v2181
    %vm2188 = vweird.f32 %v2182
    %vm2189 = vmor %vm2187, %vm2188
    %v2190 = vsel %vm2189, %v2182, %v2186
    %v2191 = vand.u32 2147483647, %v2181
    %vm2192 = vcmp.eq.f32.partialorder %v2191, 8.507059e+37
    %v2193 = vand.u32 %v2181, 2147483648
    %v2194 = vor.u32 1.1754944e-38, %v2193
    %v2195 = vsel %vm2192, %v2194, %v2190
    %v2196 = vmul.f32 1.0, %v2195
    %s2197 = scalar_lea.vmem %s11, 136
    %v2198 = vld [vmem:[%s2197] sm:$0x7f]
    %v2199 = vsub.f32 %v2196, %v2198
    %vm2200 = vcmp.gt.f32.partialorder %v2199, 0.0
    %v2201 = vsel %vm2200, 1, 0
    %v2202 = vcvt.s32.f32 %v2201
    %v2204 = vsel %vm117, %v2202, 0
    %2206 = vmatpush.xpose.msra.mxu0 0.0
    %2207 = vmatpush.xpose.msra.mxu0 0.0
    %2208 = vmatpush.xpose.msra.mxu0 0.0
    %2209 = vmatpush.xpose.msra.mxu0 0.0
    %2210 = vmatpush.xpose.msra.mxu0 0.0
    %2211 = vmatpush.xpose.msra.mxu0 0.0
    %2212 = vmatpush.xpose.msra.mxu0 0.0
    %2213 = vmatpush.xpose.msra.mxu0 0.0
    %2214 = vmatpush.xpose.msra.mxu0 0.0
    %2215 = vmatpush.xpose.msra.mxu0 0.0
    %2216 = vmatpush.xpose.msra.mxu0 0.0
    %2217 = vmatpush.xpose.msra.mxu0 0.0
    %2218 = vmatpush.xpose.msra.mxu0 %v478
    %2219 = vmatpush.xpose.msra.mxu0 %v475
    %2220 = vmatpush.xpose.msra.mxu0 %v472
    %2221 = vmatpush.xpose.msra.mxu0 %v469
    %2222 = vmatmul.f32.gmra.mxu0 %v2204
    %v2223 = vpop.f32.mrf.mxu0
    %v2224 = vadd.f32 %v438, %v2223
    %2225 = vdwg.mxu0
    %v2226 = vsub.f32 0.0, %v2224
    %v2227 = vmul.f32 %v2226, 1.442695
    %v2228 = vpow.pop %v2227
    %v2229 = vadd.f32 %v2228, 1.0
    %v2230 = vrcp.pop %v2229
    %v2231 = vmul.f32 %v2229, %v2230
    %v2232 = vsub.f32 1.0, %v2231
    %v2233 = vmul.f32 %v2230, %v2232
    %v2234 = vadd.f32 %v2230, %v2233
    %vm2235 = vweird.f32 %v2229
    %vm2236 = vweird.f32 %v2230
    %vm2237 = vmor %vm2235, %vm2236
    %v2238 = vsel %vm2237, %v2230, %v2234
    %v2239 = vand.u32 2147483647, %v2229
    %vm2240 = vcmp.eq.f32.partialorder %v2239, 8.507059e+37
    %v2241 = vand.u32 %v2229, 2147483648
    %v2242 = vor.u32 1.1754944e-38, %v2241
    %v2243 = vsel %vm2240, %v2242, %v2238
    %v2244 = vmul.f32 1.0, %v2243
    %s2245 = scalar_lea.vmem %s10, 144
    %v2246 = vld [vmem:[%s2245] sm:$0x7f]
    %v2247 = vsub.f32 %v2244, %v2246
    %vm2248 = vcmp.gt.f32.partialorder %v2247, 0.0
    %v2249 = vsel %vm2248, 1, 0
    %v2250 = vcvt.s32.f32 %v2249
    %v2252 = vsel %vm79, %v2250, 0
    %2254 = vmatpush.msra.mxu0 0.0
    %2255 = vmatpush.msra.mxu0 0.0
    %2256 = vmatpush.msra.mxu0 0.0
    %2257 = vmatpush.msra.mxu0 0.0
    %2258 = vmatpush.msra.mxu0 0.0
    %2259 = vmatpush.msra.mxu0 0.0
    %2260 = vmatpush.msra.mxu0 0.0
    %2261 = vmatpush.msra.mxu0 0.0
    %2262 = vmatpush.msra.mxu0 0.0
    %2263 = vmatpush.msra.mxu0 0.0
    %2264 = vmatpush.msra.mxu0 0.0
    %2265 = vmatpush.msra.mxu0 0.0
    %2266 = vmatpush.msra.mxu0 %v57
    %2267 = vmatpush.msra.mxu0 %v56
    %2268 = vmatpush.msra.mxu0 %v55
    %2269 = vmatpush.msra.mxu0 %v54
    %2270 = vmatmul.f32.gmra.mxu0 %v2252
    %v2271 = vpop.f32.mrf.mxu0
    %v2272 = vadd.f32 %v464, %v2271
    %2273 = vdwg.mxu0
    %v2274 = vsub.f32 0.0, %v2272
    %v2275 = vmul.f32 %v2274, 1.442695
    %v2276 = vpow.pop %v2275
    %v2277 = vadd.f32 %v2276, 1.0
    %v2278 = vrcp.pop %v2277
    %v2279 = vmul.f32 %v2277, %v2278
    %v2280 = vsub.f32 1.0, %v2279
    %v2281 = vmul.f32 %v2278, %v2280
    %v2282 = vadd.f32 %v2278, %v2281
    %vm2283 = vweird.f32 %v2277
    %vm2284 = vweird.f32 %v2278
    %vm2285 = vmor %vm2283, %vm2284
    %v2286 = vsel %vm2285, %v2278, %v2282
    %v2287 = vand.u32 2147483647, %v2277
    %vm2288 = vcmp.eq.f32.partialorder %v2287, 8.507059e+37
    %v2289 = vand.u32 %v2277, 2147483648
    %v2290 = vor.u32 1.1754944e-38, %v2289
    %v2291 = vsel %vm2288, %v2290, %v2286
    %v2292 = vmul.f32 1.0, %v2291
    %s2293 = scalar_lea.vmem %s11, 144
    %v2294 = vld [vmem:[%s2293] sm:$0x7f]
    %v2295 = vsub.f32 %v2292, %v2294
    %vm2296 = vcmp.gt.f32.partialorder %v2295, 0.0
    %v2297 = vsel %vm2296, 1, 0
    %v2298 = vcvt.s32.f32 %v2297
    %v2300 = vsel %vm117, %v2298, 0
    %2302 = vmatpush.xpose.msra.mxu0 0.0
    %2303 = vmatpush.xpose.msra.mxu0 0.0
    %2304 = vmatpush.xpose.msra.mxu0 0.0
    %2305 = vmatpush.xpose.msra.mxu0 0.0
    %2306 = vmatpush.xpose.msra.mxu0 0.0
    %2307 = vmatpush.xpose.msra.mxu0 0.0
    %2308 = vmatpush.xpose.msra.mxu0 0.0
    %2309 = vmatpush.xpose.msra.mxu0 0.0
    %2310 = vmatpush.xpose.msra.mxu0 0.0
    %2311 = vmatpush.xpose.msra.mxu0 0.0
    %2312 = vmatpush.xpose.msra.mxu0 0.0
    %2313 = vmatpush.xpose.msra.mxu0 0.0
    %2314 = vmatpush.xpose.msra.mxu0 %v478
    %2315 = vmatpush.xpose.msra.mxu0 %v475
    %2316 = vmatpush.xpose.msra.mxu0 %v472
    %2317 = vmatpush.xpose.msra.mxu0 %v469
    %2318 = vmatmul.f32.gmra.mxu0 %v2300
    %v2319 = vpop.f32.mrf.mxu0
    %v2320 = vadd.f32 %v438, %v2319
    %2321 = vdwg.mxu0
    %v2322 = vsub.f32 0.0, %v2320
    %v2323 = vmul.f32 %v2322, 1.442695
    %v2324 = vpow.pop %v2323
    %v2325 = vadd.f32 %v2324, 1.0
    %v2326 = vrcp.pop %v2325
    %v2327 = vmul.f32 %v2325, %v2326
    %v2328 = vsub.f32 1.0, %v2327
    %v2329 = vmul.f32 %v2326, %v2328
    %v2330 = vadd.f32 %v2326, %v2329
    %vm2331 = vweird.f32 %v2325
    %vm2332 = vweird.f32 %v2326
    %vm2333 = vmor %vm2331, %vm2332
    %v2334 = vsel %vm2333, %v2326, %v2330
    %v2335 = vand.u32 2147483647, %v2325
    %vm2336 = vcmp.eq.f32.partialorder %v2335, 8.507059e+37
    %v2337 = vand.u32 %v2325, 2147483648
    %v2338 = vor.u32 1.1754944e-38, %v2337
    %v2339 = vsel %vm2336, %v2338, %v2334
    %v2340 = vmul.f32 1.0, %v2339
    %s2341 = scalar_lea.vmem %s10, 152
    %v2342 = vld [vmem:[%s2341] sm:$0x7f]
    %v2343 = vsub.f32 %v2340, %v2342
    %vm2344 = vcmp.gt.f32.partialorder %v2343, 0.0
    %v2345 = vsel %vm2344, 1, 0
    %v2346 = vcvt.s32.f32 %v2345
    %v2348 = vsel %vm79, %v2346, 0
    %2350 = vmatpush.msra.mxu0 0.0
    %2351 = vmatpush.msra.mxu0 0.0
    %2352 = vmatpush.msra.mxu0 0.0
    %2353 = vmatpush.msra.mxu0 0.0
    %2354 = vmatpush.msra.mxu0 0.0
    %2355 = vmatpush.msra.mxu0 0.0
    %2356 = vmatpush.msra.mxu0 0.0
    %2357 = vmatpush.msra.mxu0 0.0
    %2358 = vmatpush.msra.mxu0 0.0
    %2359 = vmatpush.msra.mxu0 0.0
    %2360 = vmatpush.msra.mxu0 0.0
    %2361 = vmatpush.msra.mxu0 0.0
    %2362 = vmatpush.msra.mxu0 %v57
    %2363 = vmatpush.msra.mxu0 %v56
    %2364 = vmatpush.msra.mxu0 %v55
    %2365 = vmatpush.msra.mxu0 %v54
    %2366 = vmatmul.f32.gmra.mxu0 %v2348
    %v2367 = vpop.f32.mrf.mxu0
    %v2368 = vadd.f32 %v464, %v2367
    %2369 = vdwg.mxu0
    %v2370 = vsub.f32 0.0, %v2368
    %v2371 = vmul.f32 %v2370, 1.442695
    %v2372 = vpow.pop %v2371
    %v2373 = vadd.f32 %v2372, 1.0
    %v2374 = vrcp.pop %v2373
    %v2375 = vmul.f32 %v2373, %v2374
    %v2376 = vsub.f32 1.0, %v2375
    %v2377 = vmul.f32 %v2374, %v2376
    %v2378 = vadd.f32 %v2374, %v2377
    %vm2379 = vweird.f32 %v2373
    %vm2380 = vweird.f32 %v2374
    %vm2381 = vmor %vm2379, %vm2380
    %v2382 = vsel %vm2381, %v2374, %v2378
    %v2383 = vand.u32 2147483647, %v2373
    %vm2384 = vcmp.eq.f32.partialorder %v2383, 8.507059e+37
    %v2385 = vand.u32 %v2373, 2147483648
    %v2386 = vor.u32 1.1754944e-38, %v2385
    %v2387 = vsel %vm2384, %v2386, %v2382
    %v2388 = vmul.f32 1.0, %v2387
    %s2389 = scalar_lea.vmem %s11, 152
    %v2390 = vld [vmem:[%s2389] sm:$0x7f]
    %v2391 = vsub.f32 %v2388, %v2390
    %vm2392 = vcmp.gt.f32.partialorder %v2391, 0.0
    %v2393 = vsel %vm2392, 1, 0
    %v2394 = vcvt.s32.f32 %v2393
    %v2396 = vsel %vm117, %v2394, 0
    %2398 = vmatpush.xpose.msra.mxu0 0.0
    %2399 = vmatpush.xpose.msra.mxu0 0.0
    %2400 = vmatpush.xpose.msra.mxu0 0.0
    %2401 = vmatpush.xpose.msra.mxu0 0.0
    %2402 = vmatpush.xpose.msra.mxu0 0.0
    %2403 = vmatpush.xpose.msra.mxu0 0.0
    %2404 = vmatpush.xpose.msra.mxu0 0.0
    %2405 = vmatpush.xpose.msra.mxu0 0.0
    %2406 = vmatpush.xpose.msra.mxu0 0.0
    %2407 = vmatpush.xpose.msra.mxu0 0.0
    %2408 = vmatpush.xpose.msra.mxu0 0.0
    %2409 = vmatpush.xpose.msra.mxu0 0.0
    %2410 = vmatpush.xpose.msra.mxu0 %v478
    %2411 = vmatpush.xpose.msra.mxu0 %v475
    %2412 = vmatpush.xpose.msra.mxu0 %v472
    %2413 = vmatpush.xpose.msra.mxu0 %v469
    %2414 = vmatmul.f32.gmra.mxu0 %v2396
    %v2415 = vpop.f32.mrf.mxu0
    %v2416 = vadd.f32 0.0, %v2415
    %2417 = vdwg.mxu0
    %2418 = vmatpush.xpose.msra.mxu0 0.0
    %2419 = vmatpush.xpose.msra.mxu0 0.0
    %2420 = vmatpush.xpose.msra.mxu0 0.0
    %2421 = vmatpush.xpose.msra.mxu0 0.0
    %2422 = vmatpush.xpose.msra.mxu0 0.0
    %2423 = vmatpush.xpose.msra.mxu0 0.0
    %2424 = vmatpush.xpose.msra.mxu0 0.0
    %2425 = vmatpush.xpose.msra.mxu0 0.0
    %2426 = vmatpush.xpose.msra.mxu0 0.0
    %2427 = vmatpush.xpose.msra.mxu0 0.0
    %2428 = vmatpush.xpose.msra.mxu0 0.0
    %2429 = vmatpush.xpose.msra.mxu0 0.0
    %2430 = vmatpush.xpose.msra.mxu0 %v478
    %2431 = vmatpush.xpose.msra.mxu0 %v475
    %2432 = vmatpush.xpose.msra.mxu0 %v472
    %2433 = vmatpush.xpose.msra.mxu0 %v469
    %2434 = vmatmul.f32.gmra.mxu0 %v118
    %v2435 = vpop.f32.mrf.mxu0
    %v2436 = vadd.f32 0.0, %v2435
    %2437 = vdwg.mxu0
    %v2438 = vadd.f32 %v2416, %v402
    %v2439 = vmax.f32 %v2438, 0.0
    %v2440 = vand.u32 2147483647, %v2438
    %v2441 = vsub.f32 0.0, %v2440
    %v2442 = vmul.f32 %v2441, 1.442695
    %v2443 = vpow.pop %v2442
    %v2444 = vadd.f32 %v2443, 1.0
    %v2445 = vlog2.pop %v2444
    %v2446 = vmul.f32 %v2445, 0.6931472
    %v2447 = vadd.f32 %v2439, %v2446
    %vm2448 = vcmask 260096
    %v2449 = vsel %vm2448, %v2447, 0.0
    %2450 = vadd.xlane.f32.xlu0 %v2449
    %v2451 = vpop.xlane.xlu0 %2450
    %v2452 = vsub.f32 0.0, %v2451
    %v2453 = vmul.f32 %v2394, %v441
    %vm2454 = vcmask 63488
    %v2455 = vsel %vm2454, %v2453, 0.0
    %2456 = vadd.xlane.f32.xlu0 %v2455
    %v2457 = vpop.xlane.xlu0 %2456
    %v2458 = vsub.f32 %v2452, %v2457
    %v2459 = vadd.f32 %v2436, %v402
    %v2460 = vmax.f32 %v2459, 0.0
    %v2461 = vand.u32 2147483647, %v2459
    %v2462 = vsub.f32 0.0, %v2461
    %v2463 = vmul.f32 %v2462, 1.442695
    %v2464 = vpow.pop %v2463
    %v2465 = vadd.f32 %v2464, 1.0
    %v2466 = vlog2.pop %v2465
    %v2467 = vmul.f32 %v2466, 0.6931472
    %v2468 = vadd.f32 %v2460, %v2467
    %v2469 = vsel %vm2448, %v2468, 0.0
    %2470 = vadd.xlane.f32.xlu0 %v2469
    %v2471 = vpop.xlane.xlu0 %2470
    %v2472 = vsub.f32 0.0, %v2471
    %v2473 = vmul.f32 %v75, %v441
    %vm2474 = vcmask 64513
    %v2475 = vsel %vm2474, %v2473, 0.0
    %2476 = vadd.xlane.f32.xlu0 %v2475
    %v2477 = vpop.xlane.xlu0 %2476
    %v2479 = vrot.slane %v2477, 1
    %v2481 = vsub.f32 %v2472, %v2479
    %v2482 = vsub.f32 %v2458, %v2481
    %v2483 = vsub.f32 %v2416, %v438
    %v2484 = vsub.f32 0.0, %v2483
    %v2485 = vmul.f32 %v2484, 1.442695
    %v2486 = vpow.pop %v2485
    %v2487 = vadd.f32 %v2486, 1.0
    %v2488 = vrcp.pop %v2487
    %v2489 = vmul.f32 %v2487, %v2488
    %v2490 = vsub.f32 1.0, %v2489
    %v2491 = vmul.f32 %v2488, %v2490
    %v2492 = vadd.f32 %v2488, %v2491
    %vm2493 = vweird.f32 %v2487
    %vm2494 = vweird.f32 %v2488
    %vm2495 = vmor %vm2493, %vm2494
    %v2496 = vsel %vm2495, %v2488, %v2492
    %v2497 = vand.u32 2147483647, %v2487
    %vm2498 = vcmp.eq.f32.partialorder %v2497, 8.507059e+37
    %v2499 = vand.u32 %v2487, 2147483648
    %v2500 = vor.u32 1.1754944e-38, %v2499
    %v2501 = vsel %vm2498, %v2500, %v2496
    %v2502 = vmul.f32 1.0, %v2501
    %v2503 = vsub.f32 %v2436, %v438
    %v2504 = vsub.f32 0.0, %v2503
    %v2505 = vmul.f32 %v2504, 1.442695
    %v2506 = vpow.pop %v2505
    %v2507 = vadd.f32 %v2506, 1.0
    %v2508 = vrcp.pop %v2507
    %v2509 = vmul.f32 %v2507, %v2508
    %v2510 = vsub.f32 1.0, %v2509
    %v2511 = vmul.f32 %v2508, %v2510
    %v2512 = vadd.f32 %v2508, %v2511
    %vm2513 = vweird.f32 %v2507
    %vm2514 = vweird.f32 %v2508
    %vm2515 = vmor %vm2513, %vm2514
    %v2516 = vsel %vm2515, %v2508, %v2512
    %v2517 = vand.u32 2147483647, %v2507
    %vm2518 = vcmp.eq.f32.partialorder %v2517, 8.507059e+37
    %v2519 = vand.u32 %v2507, 2147483648
    %v2520 = vor.u32 1.1754944e-38, %v2519
    %v2521 = vsel %vm2518, %v2520, %v2516
    %v2522 = vmul.f32 1.0, %v2521
    %v2523 = vsub.f32 %v2502, %v2522
    %2524 = vxpose.xlu0.b32.start [1/16] %v2502, 128
    %2525 = vxpose.xlu0.b32.cont [2/16] 0.0, 128
    %2526 = vxpose.xlu0.b32.cont [3/16] 0.0, 128
    %2527 = vxpose.xlu0.b32.cont [4/16] 0.0, 128
    %2528 = vxpose.xlu0.b32.cont [5/16] 0.0, 128
    %2529 = vxpose.xlu0.b32.cont [6/16] 0.0, 128
    %2530 = vxpose.xlu0.b32.cont [7/16] 0.0, 128
    %2531 = vxpose.xlu0.b32.cont [8/16] 0.0, 128
    %2532 = vxpose.xlu0.b32.cont [9/16] 0.0, 128
    %2533 = vxpose.xlu0.b32.cont [10/16] 0.0, 128
    %2534 = vxpose.xlu0.b32.cont [11/16] 0.0, 128
    %2535 = vxpose.xlu0.b32.cont [12/16] 0.0, 128
    %2536 = vxpose.xlu0.b32.cont [13/16] 0.0, 128
    %2537 = vxpose.xlu0.b32.cont [14/16] 0.0, 128
    %2538 = vxpose.xlu0.b32.cont [15/16] 0.0, 128
    %2539 = vxpose.xlu0.b32.end [16/16] 0.0, 128
    %v2540 = vpop.trf.xlu0
    %v2541 = vpop.trf.xlu0
    %v2542 = vpop.trf.xlu0
    %v2543 = vpop.trf.xlu0
    %v2544 = vpop.trf.xlu0
    %v2545 = vpop.trf.xlu0
    %v2546 = vpop.trf.xlu0
    %v2547 = vpop.trf.xlu0
    %v2548 = vpop.trf.xlu0
    %v2549 = vpop.trf.xlu0
    %v2550 = vpop.trf.xlu0
    %v2551 = vpop.trf.xlu0
    %v2552 = vpop.trf.xlu0
    %v2553 = vpop.trf.xlu0
    %v2554 = vpop.trf.xlu0
    %v2555 = vpop.trf.xlu0
    %vm2556 = vcmask 56320
    %v2558 = vsel %vm2556, %v2540, 0
    %v2561 = vsel %vm2556, %v2541, 0
    %v2564 = vsel %vm2556, %v2542, 0
    %v2567 = vsel %vm2556, %v2543, 0
    %vm2569 = vcmask 1046528
    %v2570 = vsel %vm2569, %v2394, 0
    %2572 = vmatpush.msra.mxu0 0.0
    %2573 = vmatpush.msra.mxu0 0.0
    %2574 = vmatpush.msra.mxu0 0.0
    %2575 = vmatpush.msra.mxu0 0.0
    %2576 = vmatpush.msra.mxu0 0.0
    %2577 = vmatpush.msra.mxu0 0.0
    %2578 = vmatpush.msra.mxu0 0.0
    %2579 = vmatpush.msra.mxu0 0.0
    %2580 = vmatpush.msra.mxu0 0.0
    %2581 = vmatpush.msra.mxu0 0.0
    %2582 = vmatpush.msra.mxu0 0.0
    %2583 = vmatpush.msra.mxu0 0.0
    %2584 = vmatpush.msra.mxu0 0.0
    %2585 = vmatpush.msra.mxu0 0.0
    %2586 = vmatpush.msra.mxu0 0.0
    %2587 = vmatpush.msra.mxu0 %v2570
    %2588 = vmatmul.f32.gmra.mxu0 %v2558
    %v2589 = vpop.f32.mrf.mxu0
    %v2590 = vadd.f32 0.0, %v2589
    %2591 = vmatmul.f32.gmra.mxu0 %v2561
    %v2592 = vpop.f32.mrf.mxu0
    %v2593 = vadd.f32 0.0, %v2592
    %2594 = vmatmul.f32.gmra.mxu0 %v2564
    %v2595 = vpop.f32.mrf.mxu0
    %v2596 = vadd.f32 0.0, %v2595
    %2597 = vmatmul.f32.gmra.mxu0 %v2567
    %v2598 = vpop.f32.mrf.mxu0
    %v2599 = vadd.f32 0.0, %v2598
    %2600 = vdwg.mxu0
    %2601 = vxpose.xlu0.b32.start [1/16] %v2522, 128
    %2602 = vxpose.xlu0.b32.cont [2/16] 0.0, 128
    %2603 = vxpose.xlu0.b32.cont [3/16] 0.0, 128
    %2604 = vxpose.xlu0.b32.cont [4/16] 0.0, 128
    %2605 = vxpose.xlu0.b32.cont [5/16] 0.0, 128
    %2606 = vxpose.xlu0.b32.cont [6/16] 0.0, 128
    %2607 = vxpose.xlu0.b32.cont [7/16] 0.0, 128
    %2608 = vxpose.xlu0.b32.cont [8/16] 0.0, 128
    %2609 = vxpose.xlu0.b32.cont [9/16] 0.0, 128
    %2610 = vxpose.xlu0.b32.cont [10/16] 0.0, 128
    %2611 = vxpose.xlu0.b32.cont [11/16] 0.0, 128
    %2612 = vxpose.xlu0.b32.cont [12/16] 0.0, 128
    %2613 = vxpose.xlu0.b32.cont [13/16] 0.0, 128
    %2614 = vxpose.xlu0.b32.cont [14/16] 0.0, 128
    %2615 = vxpose.xlu0.b32.cont [15/16] 0.0, 128
    %2616 = vxpose.xlu0.b32.end [16/16] 0.0, 128
    %v2617 = vpop.trf.xlu0
    %v2618 = vpop.trf.xlu0
    %v2619 = vpop.trf.xlu0
    %v2620 = vpop.trf.xlu0
    %v2621 = vpop.trf.xlu0
    %v2622 = vpop.trf.xlu0
    %v2623 = vpop.trf.xlu0
    %v2624 = vpop.trf.xlu0
    %v2625 = vpop.trf.xlu0
    %v2626 = vpop.trf.xlu0
    %v2627 = vpop.trf.xlu0
    %v2628 = vpop.trf.xlu0
    %v2629 = vpop.trf.xlu0
    %v2630 = vpop.trf.xlu0
    %v2631 = vpop.trf.xlu0
    %v2632 = vpop.trf.xlu0
    %v2634 = vsel %vm2556, %v2617, 0
    %v2637 = vsel %vm2556, %v2618, 0
    %v2640 = vsel %vm2556, %v2619, 0
    %v2643 = vsel %vm2556, %v2620, 0
    %v2645 = vsel %vm2569, %v116, 0
    %2647 = vmatpush.msra.mxu0 0.0
    %2648 = vmatpush.msra.mxu0 0.0
    %2649 = vmatpush.msra.mxu0 0.0
    %2650 = vmatpush.msra.mxu0 0.0
    %2651 = vmatpush.msra.mxu0 0.0
    %2652 = vmatpush.msra.mxu0 0.0
    %2653 = vmatpush.msra.mxu0 0.0
    %2654 = vmatpush.msra.mxu0 0.0
    %2655 = vmatpush.msra.mxu0 0.0
    %2656 = vmatpush.msra.mxu0 0.0
    %2657 = vmatpush.msra.mxu0 0.0
    %2658 = vmatpush.msra.mxu0 0.0
    %2659 = vmatpush.msra.mxu0 0.0
    %2660 = vmatpush.msra.mxu0 0.0
    %2661 = vmatpush.msra.mxu0 0.0
    %2662 = vmatpush.msra.mxu0 %v2645
    %2663 = vmatmul.f32.gmra.mxu0 %v2634
    %v2664 = vpop.f32.mrf.mxu0
    %v2665 = vadd.f32 0.0, %v2664
    %2666 = vmatmul.f32.gmra.mxu0 %v2637
    %v2667 = vpop.f32.mrf.mxu0
    %v2668 = vadd.f32 0.0, %v2667
    %2669 = vmatmul.f32.gmra.mxu0 %v2640
    %v2670 = vpop.f32.mrf.mxu0
    %v2671 = vadd.f32 0.0, %v2670
    %2672 = vmatmul.f32.gmra.mxu0 %v2643
    %v2673 = vpop.f32.mrf.mxu0
    %v2674 = vadd.f32 0.0, %v2673
    %2675 = vdwg.mxu0
    %v2676 = vsub.f32 %v2590, %v2665
    %v2677 = vsub.f32 %v2593, %v2668
    %v2678 = vsub.f32 %v2596, %v2671
    %v2679 = vsub.f32 %v2599, %v2674
    %2680 = vst.msk [vmem:[%s13] sm:$0xff] %vm117, %v2676
    %2681 = vst.msk [vmem:[%s13 + $0x8] sm:$0xff] %vm117, %v2677
    %2682 = vst.msk [vmem:[%s13 + $0x10] sm:$0xff] %vm117, %v2678
    %2683 = vst.msk [vmem:[%s13 + $0x18] sm:$0xff] %vm117, %v2679
    %v2684 = vsel %vm2448, %v2523, 0.0
    %v2685 = vrot.slane %v2684, 4
    %v2686 = vadd.f32 %v2684, %v2685
    %v2687 = vrot.slane %v2686, 2
    %v2688 = vadd.f32 %v2686, %v2687
    %v2689 = vrot.slane %v2688, 1
    %v2690 = vadd.f32 %v2688, %v2689
    %2691 = vst.msk [vmem:[#allocation5] sm:$0x1] %vm76, %v2690
    %vm2692 = vcmask 6144
    %v2693 = vsel %vm2692, %v2482, 0.0
    %v2694 = vrot.slane %v2693, 4
    %v2695 = vadd.f32 %v2693, %v2694
    %v2696 = vrot.slane %v2695, 2
    %v2697 = vadd.f32 %v2695, %v2696
    %v2698 = vrot.slane %v2697, 1
    %v2699 = vadd.f32 %v2697, %v2698
    %2701 = vset.pattern.permute.xlu0 0
    %2702 = vperm.xlu0 %2701, %v2699
    %v2703 = vpop.permute.xlu0 %2702
    %vm2705 = vcmask 57344
    %2706 = vst.msk [vmem:[#allocation3] sm:$0x1] %vm2705, %v2703
    %2707 = vxpose.xlu0.b32.start [1/16] %v2690, 128
    %2708 = vxpose.xlu0.b32.cont [2/16] 0.0, 128
    %2709 = vxpose.xlu0.b32.cont [3/16] 0.0, 128
    %2710 = vxpose.xlu0.b32.cont [4/16] 0.0, 128
    %2711 = vxpose.xlu0.b32.cont [5/16] 0.0, 128
    %2712 = vxpose.xlu0.b32.cont [6/16] 0.0, 128
    %2713 = vxpose.xlu0.b32.cont [7/16] 0.0, 128
    %2714 = vxpose.xlu0.b32.cont [8/16] 0.0, 128
    %2715 = vxpose.xlu0.b32.cont [9/16] 0.0, 128
    %2716 = vxpose.xlu0.b32.cont [10/16] 0.0, 128
    %2717 = vxpose.xlu0.b32.cont [11/16] 0.0, 128
    %2718 = vxpose.xlu0.b32.cont [12/16] 0.0, 128
    %2719 = vxpose.xlu0.b32.cont [13/16] 0.0, 128
    %2720 = vxpose.xlu0.b32.cont [14/16] 0.0, 128
    %2721 = vxpose.xlu0.b32.cont [15/16] 0.0, 128
    %2722 = vxpose.xlu0.b32.end [16/16] 0.0, 128
    %v2723 = vpop.trf.xlu0
    %v2724 = vpop.trf.xlu0
    %v2725 = vpop.trf.xlu0
    %v2726 = vpop.trf.xlu0
    %v2727 = vpop.trf.xlu0
    %v2728 = vpop.trf.xlu0
    %v2729 = vpop.trf.xlu0
    %v2730 = vpop.trf.xlu0
    %v2731 = vpop.trf.xlu0
    %v2732 = vpop.trf.xlu0
    %v2733 = vpop.trf.xlu0
    %v2734 = vpop.trf.xlu0
    %v2735 = vpop.trf.xlu0
    %v2736 = vpop.trf.xlu0
    %v2737 = vpop.trf.xlu0
    %v2738 = vpop.trf.xlu0
    %v2739 = vrot.slane %v400, 7
    %vm2740 = vcmask 7168
    %v2742 = vsel %vm2740, %v2723, 0
    %v2745 = vsel %vm2740, %v2724, 0
    %v2748 = vsel %vm2740, %v2725, 0
    %v2751 = vsel %vm2740, %v2726, 0
    %vm2753 = vcmask 1040384
    %v2754 = vsel %vm2753, %v2739, 0
    %2756 = vmatpush.msra.mxu0 0.0
    %2757 = vmatpush.msra.mxu0 0.0
    %2758 = vmatpush.msra.mxu0 0.0
    %2759 = vmatpush.msra.mxu0 0.0
    %2760 = vmatpush.msra.mxu0 0.0
    %2761 = vmatpush.msra.mxu0 0.0
    %2762 = vmatpush.msra.mxu0 0.0
    %2763 = vmatpush.msra.mxu0 0.0
    %2764 = vmatpush.msra.mxu0 0.0
    %2765 = vmatpush.msra.mxu0 0.0
    %2766 = vmatpush.msra.mxu0 0.0
    %2767 = vmatpush.msra.mxu0 0.0
    %2768 = vmatpush.msra.mxu0 0.0
    %2769 = vmatpush.msra.mxu0 0.0
    %2770 = vmatpush.msra.mxu0 0.0
    %2771 = vmatpush.msra.mxu0 %v2754
    %2772 = vmatmul.f32.gmra.mxu0 %v2742
    %v2773 = vpop.f32.mrf.mxu0
    %v2774 = vadd.f32 0.0, %v2773
    %2775 = vmatmul.f32.gmra.mxu0 %v2745
    %v2776 = vpop.f32.mrf.mxu0
    %v2777 = vadd.f32 0.0, %v2776
    %2778 = vmatmul.f32.gmra.mxu0 %v2748
    %v2779 = vpop.f32.mrf.mxu0
    %v2780 = vadd.f32 0.0, %v2779
    %2781 = vmatmul.f32.gmra.mxu0 %v2751
    %v2782 = vpop.f32.mrf.mxu0
    %v2783 = vadd.f32 0.0, %v2782
    %2784 = vdwg.mxu0
    %2785 = vst.msk [vmem:[#allocation8] sm:$0xff] %vm79, %v2774
    %2786 = vst.msk [vmem:[#allocation8 + $0x8] sm:$0xff] %vm79, %v2777
    %2787 = vst.msk [vmem:[#allocation8 + $0x10] sm:$0xff] %vm79, %v2780
    %2788 = vst.msk [vmem:[#allocation8 + $0x18] sm:$0xff] %vm79, %v2783
    %2789 = vxpose.xlu0.b32.start [1/16] %v2703, 128
    %2790 = vxpose.xlu0.b32.cont [2/16] 0.0, 128
    %2791 = vxpose.xlu0.b32.cont [3/16] 0.0, 128
    %2792 = vxpose.xlu0.b32.cont [4/16] 0.0, 128
    %2793 = vxpose.xlu0.b32.cont [5/16] 0.0, 128
    %2794 = vxpose.xlu0.b32.cont [6/16] 0.0, 128
    %2795 = vxpose.xlu0.b32.cont [7/16] 0.0, 128
    %2796 = vxpose.xlu0.b32.cont [8/16] 0.0, 128
    %2797 = vxpose.xlu0.b32.cont [9/16] 0.0, 128
    %2798 = vxpose.xlu0.b32.cont [10/16] 0.0, 128
    %2799 = vxpose.xlu0.b32.cont [11/16] 0.0, 128
    %2800 = vxpose.xlu0.b32.cont [12/16] 0.0, 128
    %2801 = vxpose.xlu0.b32.cont [13/16] 0.0, 128
    %2802 = vxpose.xlu0.b32.cont [14/16] 0.0, 128
    %2803 = vxpose.xlu0.b32.cont [15/16] 0.0, 128
    %2804 = vxpose.xlu0.b32.end [16/16] 0.0, 128
    %v2805 = vpop.trf.xlu0
    %v2806 = vpop.trf.xlu0
    %v2807 = vpop.trf.xlu0
    %v2808 = vpop.trf.xlu0
    %v2809 = vpop.trf.xlu0
    %v2810 = vpop.trf.xlu0
    %v2811 = vpop.trf.xlu0
    %v2812 = vpop.trf.xlu0
    %v2813 = vpop.trf.xlu0
    %v2814 = vpop.trf.xlu0
    %v2815 = vpop.trf.xlu0
    %v2816 = vpop.trf.xlu0
    %v2817 = vpop.trf.xlu0
    %v2818 = vpop.trf.xlu0
    %v2819 = vpop.trf.xlu0
    %v2820 = vpop.trf.xlu0
    %v2822 = vsel %vm2740, %v2805, 0
    %2824 = vmatpush.msra.mxu0 0.0
    %2825 = vmatpush.msra.mxu0 0.0
    %2826 = vmatpush.msra.mxu0 0.0
    %2827 = vmatpush.msra.mxu0 0.0
    %2828 = vmatpush.msra.mxu0 0.0
    %2829 = vmatpush.msra.mxu0 0.0
    %2830 = vmatpush.msra.mxu0 0.0
    %2831 = vmatpush.msra.mxu0 0.0
    %2832 = vmatpush.msra.mxu0 0.0
    %2833 = vmatpush.msra.mxu0 0.0
    %2834 = vmatpush.msra.mxu0 0.0
    %2835 = vmatpush.msra.mxu0 0.0
    %2836 = vmatpush.msra.mxu0 0.0
    %2837 = vmatpush.msra.mxu0 0.0
    %2838 = vmatpush.msra.mxu0 0.0
    %2839 = vmatpush.msra.mxu0 %v2754
    %2840 = vmatmul.f32.gmra.mxu0 %v2822
    %v2841 = vpop.f32.mrf.mxu0
    %v2842 = vadd.f32 0.0, %v2841
    %2843 = vdwg.mxu0
    %2844 = vst.msk [vmem:[#allocation7] sm:$0xff] %vm79, %v2842
    %v2845 = vrot.slane %v2394, 7
    %v2847 = vsub.f32 %v75, %v2845
    %v2848 = vand.u32 2147483647, %v2847
    %v2849 = vsel %vm2474, %v2848, 0.0
    %2850 = vadd.xlane.f32.xlu0 %v2849
    %v2851 = vpop.xlane.xlu0 %2850
    %v2852 = vrcp.pop 8.0
    %v2853 = vmul.f32 8.0, %v2852
    %v2854 = vsub.f32 1.0, %v2853
    %v2855 = vmul.f32 %v2852, %v2854
    %v2856 = vadd.f32 %v2852, %v2855
    %vm2857 = vweird.f32 %v2852
    %v2858 = vsel %vm2857, %v2852, %v2856
    %v2859 = vmul.f32 %v2851, %v2858
    %vm2860 = vcmask 7169
    %2861 = vst.msk [vmem:[%s12 - $0x1] sm:$0xfe] %vm2860, %v2859
    %v2862 = vsel %vm79, %v62, 0.0
    %v2863 = vrot.slane %v2862, 4
    %v2864 = vadd.f32 %v2862, %v2863
    %v2865 = vrot.slane %v2864, 2
    %v2866 = vadd.f32 %v2864, %v2865
    %v2867 = vrot.slane %v2866, 1
    %v2868 = vadd.f32 %v2866, %v2867
    %2870 = vset.pattern.permute.xlu0 0
    %2871 = vperm.xlu0 %2870, %v2482
    %v2872 = vpop.permute.xlu0 %2871
    %v2874 = vmul.f32 %v2872, %v2868
    %v2876 = vrot.slane %v2523, 1
    %v2878 = vrot.slane %v2874, 1
    %v2880 = vsel %vm79, %v2876, 0
    %2882 = vmatpush.msra.mxu0 0.0
    %2883 = vmatpush.msra.mxu0 0.0
    %2884 = vmatpush.msra.mxu0 0.0
    %2885 = vmatpush.msra.mxu0 0.0
    %2886 = vmatpush.msra.mxu0 0.0
    %2887 = vmatpush.msra.mxu0 0.0
    %2888 = vmatpush.msra.mxu0 0.0
    %2889 = vmatpush.msra.mxu0 0.0
    %2890 = vmatpush.msra.mxu0 0.0
    %2891 = vmatpush.msra.mxu0 0.0
    %2892 = vmatpush.msra.mxu0 0.0
    %2893 = vmatpush.msra.mxu0 0.0
    %2894 = vmatpush.msra.mxu0 %v66
    %2895 = vmatpush.msra.mxu0 %v65
    %2896 = vmatpush.msra.mxu0 %v64
    %2897 = vmatpush.msra.mxu0 %v63
    %2898 = vmatmul.f32.gmra.mxu0 %v2880
    %v2899 = vpop.f32.mrf.mxu0
    %v2900 = vadd.f32 %v2878, %v2899
    %2901 = vdwg.mxu0
    %v2903 = vmul.f32 %v2900, %v405
    %v2904 = vsub.f32 1.0, %v400
    %v2906 = vrot.slane %v2904, 1
    %v2908 = vmul.f32 %v2903, %v2906
    %vm2909 = vcmask 259072
    %v2910 = vsel %vm2909, %v2908, 0.0
    %v2911 = vrot.slane %v2910, 4
    %v2912 = vadd.f32 %v2910, %v2911
    %v2913 = vrot.slane %v2912, 2
    %v2914 = vadd.f32 %v2912, %v2913
    %v2915 = vrot.slane %v2914, 1
    %v2916 = vadd.f32 %v2914, %v2915
    %2917 = vst.msk [vmem:[#allocation10] sm:$0x1] %vm76, %v2916
    %2918 = vxpose.xlu0.b32.start [1/16] %v2908, 128
    %2919 = vxpose.xlu0.b32.cont [2/16] 0.0, 128
    %2920 = vxpose.xlu0.b32.cont [3/16] 0.0, 128
    %2921 = vxpose.xlu0.b32.cont [4/16] 0.0, 128
    %2922 = vxpose.xlu0.b32.cont [5/16] 0.0, 128
    %2923 = vxpose.xlu0.b32.cont [6/16] 0.0, 128
    %2924 = vxpose.xlu0.b32.cont [7/16] 0.0, 128
    %2925 = vxpose.xlu0.b32.cont [8/16] 0.0, 128
    %2926 = vxpose.xlu0.b32.cont [9/16] 0.0, 128
    %2927 = vxpose.xlu0.b32.cont [10/16] 0.0, 128
    %2928 = vxpose.xlu0.b32.cont [11/16] 0.0, 128
    %2929 = vxpose.xlu0.b32.cont [12/16] 0.0, 128
    %2930 = vxpose.xlu0.b32.cont [13/16] 0.0, 128
    %2931 = vxpose.xlu0.b32.cont [14/16] 0.0, 128
    %2932 = vxpose.xlu0.b32.cont [15/16] 0.0, 128
    %2933 = vxpose.xlu0.b32.end [16/16] 0.0, 128
    %v2934 = vpop.trf.xlu0
    %v2935 = vpop.trf.xlu0
    %v2936 = vpop.trf.xlu0
    %v2937 = vpop.trf.xlu0
    %v2938 = vpop.trf.xlu0
    %v2939 = vpop.trf.xlu0
    %v2940 = vpop.trf.xlu0
    %v2941 = vpop.trf.xlu0
    %v2942 = vpop.trf.xlu0
    %v2943 = vpop.trf.xlu0
    %v2944 = vpop.trf.xlu0
    %v2945 = vpop.trf.xlu0
    %v2946 = vpop.trf.xlu0
    %v2947 = vpop.trf.xlu0
    %v2948 = vpop.trf.xlu0
    %v2949 = vpop.trf.xlu0
    %vm2950 = vcmask 48128
    %v2952 = vsel %vm2950, %v2934, 0
    %v2955 = vsel %vm2950, %v2935, 0
    %v2958 = vsel %vm2950, %v2936, 0
    %v2961 = vsel %vm2950, %v2937, 0
    %vm2963 = vcmask 1045504
    %v2964 = vsel %vm2963, %v400, 0
    %2966 = vmatpush.msra.mxu0 0.0
    %2967 = vmatpush.msra.mxu0 0.0
    %2968 = vmatpush.msra.mxu0 0.0
    %2969 = vmatpush.msra.mxu0 0.0
    %2970 = vmatpush.msra.mxu0 0.0
    %2971 = vmatpush.msra.mxu0 0.0
    %2972 = vmatpush.msra.mxu0 0.0
    %2973 = vmatpush.msra.mxu0 0.0
    %2974 = vmatpush.msra.mxu0 0.0
    %2975 = vmatpush.msra.mxu0 0.0
    %2976 = vmatpush.msra.mxu0 0.0
    %2977 = vmatpush.msra.mxu0 0.0
    %2978 = vmatpush.msra.mxu0 0.0
    %2979 = vmatpush.msra.mxu0 0.0
    %2980 = vmatpush.msra.mxu0 0.0
    %2981 = vmatpush.msra.mxu0 %v2964
    %2982 = vmatmul.f32.gmra.mxu0 %v2952
    %v2983 = vpop.f32.mrf.mxu0
    %v2984 = vadd.f32 0.0, %v2983
    %2985 = vmatmul.f32.gmra.mxu0 %v2955
    %v2986 = vpop.f32.mrf.mxu0
    %v2987 = vadd.f32 0.0, %v2986
    %2988 = vmatmul.f32.gmra.mxu0 %v2958
    %v2989 = vpop.f32.mrf.mxu0
    %v2990 = vadd.f32 0.0, %v2989
    %2991 = vmatmul.f32.gmra.mxu0 %v2961
    %v2992 = vpop.f32.mrf.mxu0
    %v2993 = vadd.f32 0.0, %v2992
    %2994 = vdwg.mxu0
    %2995 = vst.msk [vmem:[#allocation11] sm:$0xff] %vm79, %v2984
    %2996 = vst.msk [vmem:[#allocation11 + $0x8] sm:$0xff] %vm79, %v2987
    %2997 = vst.msk [vmem:[#allocation11 + $0x10] sm:$0xff] %vm79, %v2990
    %2998 = vst.msk [vmem:[#allocation11 + $0x18] sm:$0xff] %vm79, %v2993
    %v2999 = vsel %vm2963, %v116, 0
    %3001 = vmatpush.msra.mxu0 0.0
    %3002 = vmatpush.msra.mxu0 0.0
    %3003 = vmatpush.msra.mxu0 0.0
    %3004 = vmatpush.msra.mxu0 0.0
    %3005 = vmatpush.msra.mxu0 0.0
    %3006 = vmatpush.msra.mxu0 0.0
    %3007 = vmatpush.msra.mxu0 0.0
    %3008 = vmatpush.msra.mxu0 0.0
    %3009 = vmatpush.msra.mxu0 0.0
    %3010 = vmatpush.msra.mxu0 0.0
    %3011 = vmatpush.msra.mxu0 0.0
    %3012 = vmatpush.msra.mxu0 0.0
    %3013 = vmatpush.msra.mxu0 0.0
    %3014 = vmatpush.msra.mxu0 0.0
    %3015 = vmatpush.msra.mxu0 0.0
    %3016 = vmatpush.msra.mxu0 %v2999
    %3017 = vmatmul.f32.gmra.mxu0 %v2952
    %v3018 = vpop.f32.mrf.mxu0
    %v3019 = vadd.f32 0.0, %v3018
    %3020 = vmatmul.f32.gmra.mxu0 %v2955
    %v3021 = vpop.f32.mrf.mxu0
    %v3022 = vadd.f32 0.0, %v3021
    %3023 = vmatmul.f32.gmra.mxu0 %v2958
    %v3024 = vpop.f32.mrf.mxu0
    %v3025 = vadd.f32 0.0, %v3024
    %3026 = vmatmul.f32.gmra.mxu0 %v2961
    %v3027 = vpop.f32.mrf.mxu0
    %v3028 = vadd.f32 0.0, %v3027
    %3029 = vdwg.mxu0
    %3030 = vst.msk [vmem:[%s19] sm:$0xff] %vm117, %v3019
    %3031 = vst.msk [vmem:[%s19 + $0x8] sm:$0xff] %vm117, %v3022
    %3032 = vst.msk [vmem:[%s19 + $0x10] sm:$0xff] %vm117, %v3025
    %3033 = vst.msk [vmem:[%s19 + $0x18] sm:$0xff] %vm117, %v3028
    // Predicated region
    $region50: #{tpu_custom_call.1} parent=1 // pred_check
      _
    $region51: #{tpu_custom_call.1} parent=1 // pred_check_branch
      %3035 = sbr.rel (0) target = $region53
    $region52: #{tpu_custom_call.1} parent=1 // pred_region
      _
    $region53: #{tpu_custom_call.1} parent=1 // pred_fallthru
      _
    // Predicated region
    $region54: #{tpu_custom_call.1} parent=1 // pred_check
      _
    $region55: #{tpu_custom_call.1} parent=1 // pred_check_branch
      %3037 = sbr.rel (0) target = $region57
    $region56: #{tpu_custom_call.1} parent=1 // pred_region
      _
    $region57: #{tpu_custom_call.1} parent=1 // pred_fallthru
      _
    // Predicated region
    $region58: #{tpu_custom_call.1} parent=1 // pred_check
      _
    $region59: #{tpu_custom_call.1} parent=1 // pred_check_branch
      %3039 = sbr.rel (0) target = $region61
    $region60: #{tpu_custom_call.1} parent=1 // pred_region
      %3041 = vsyncadd [#allocation4], 0
      %s3043 = sshll.u32 [#allocation3], 4
      %s3044 = int_to_ptr.vmem [resolvable:$true] %s3043
      %s3045 = sshll.u32 %s14, 4
      %s3046 = int_to_ptr.hbm [resolvable:$true] %s3045
      %3048 = dma.vmem_to_hbm [thread:$0]  %s3044, 16, %s3046, [#allocation4]
    $region61: #{tpu_custom_call.1} parent=1 // pred_fallthru
      _
    // Predicated region
    $region62: #{tpu_custom_call.1} parent=1 // pred_check
      _
    $region63: #{tpu_custom_call.1} parent=1 // pred_check_branch
      %3050 = sbr.rel (0) target = $region65
    $region64: #{tpu_custom_call.1} parent=1 // pred_region
      %3052 = vsyncadd [#allocation6], 0
      %s3054 = sshll.u32 [#allocation5], 4
      %s3055 = int_to_ptr.vmem [resolvable:$true] %s3054
      %s3056 = sshll.u32 %s15, 4
      %s3057 = int_to_ptr.hbm [resolvable:$true] %s3056
      %3059 = dma.vmem_to_hbm [thread:$0]  %s3055, 16, %s3057, [#allocation6]
    $region65: #{tpu_custom_call.1} parent=1 // pred_fallthru
      _
    // Predicated region
    $region66: #{tpu_custom_call.1} parent=1 // pred_check
      _
    $region67: #{tpu_custom_call.1} parent=1 // pred_check_branch
      %3061 = sbr.rel (0) target = $region69
    $region68: #{tpu_custom_call.1} parent=1 // pred_region
      %3063 = vsyncadd [#allocation6], 0
      %s3065 = sshll.u32 [#allocation7], 4
      %s3066 = int_to_ptr.vmem [resolvable:$true] %s3065
      %s3067 = sshll.u32 %s16, 4
      %s3068 = int_to_ptr.hbm [resolvable:$true] %s3067
      %3070 = dma.vmem_to_hbm [thread:$0]  %s3066, 128, %s3068, [#allocation6]
    $region69: #{tpu_custom_call.1} parent=1 // pred_fallthru
      _
    // Predicated region
    $region70: #{tpu_custom_call.1} parent=1 // pred_check
      _
    $region71: #{tpu_custom_call.1} parent=1 // pred_check_branch
      %3072 = sbr.rel (0) target = $region73
    $region72: #{tpu_custom_call.1} parent=1 // pred_region
      %3074 = vsyncadd [#allocation9], 0
      %s3075 = sshll.u32 [#allocation8], 4
      %s3076 = int_to_ptr.vmem [resolvable:$true] %s3075
      %s3077 = sshll.u32 %s17, 4
      %s3078 = int_to_ptr.hbm [resolvable:$true] %s3077
      %3083 = dma.vmem_to_hbm [thread:$0]  %s3076, 512, %s3078, [#allocation9], 128, 128, 8
    $region73: #{tpu_custom_call.1} parent=1 // pred_fallthru
      _
    // Predicated region
    $region74: #{tpu_custom_call.1} parent=1 // pred_check
      _
    $region75: #{tpu_custom_call.1} parent=1 // pred_check_branch
      %3085 = sbr.rel (0) target = $region77
    $region76: #{tpu_custom_call.1} parent=1 // pred_region
      %3087 = vsyncadd [#allocation9], 0
      %s3089 = sshll.u32 [#allocation10], 4
      %s3090 = int_to_ptr.vmem [resolvable:$true] %s3089
      %s3091 = sshll.u32 %s18, 4
      %s3092 = int_to_ptr.hbm [resolvable:$true] %s3091
      %3094 = dma.vmem_to_hbm [thread:$0]  %s3090, 16, %s3092, [#allocation9]
    $region77: #{tpu_custom_call.1} parent=1 // pred_fallthru
      _
    // Predicated region
    $region78: #{tpu_custom_call.1} parent=1 // pred_check
      _
    $region79: #{tpu_custom_call.1} parent=1 // pred_check_branch
      %3096 = sbr.rel (0) target = $region81
    $region80: #{tpu_custom_call.1} parent=1 // pred_region
      _
    $region81: #{tpu_custom_call.1} parent=1 // pred_fallthru
      _
    // Predicated region
    $region82: #{tpu_custom_call.1} parent=1 // pred_check
      _
    $region83: #{tpu_custom_call.1} parent=1 // pred_check_branch
      %3098 = sbr.rel (0) target = $region85
    $region84: #{tpu_custom_call.1} parent=1 // pred_region
      %3100 = vsyncadd [#allocation12], 0
      %s3101 = sshll.u32 [#allocation11], 4
      %s3102 = int_to_ptr.vmem [resolvable:$true] %s3101
      %s3103 = sshll.u32 %s20, 4
      %s3104 = int_to_ptr.hbm [resolvable:$true] %s3103
      %3109 = dma.vmem_to_hbm [thread:$0]  %s3102, 512, %s3104, [#allocation12], 128, 128, 8
    $region85: #{tpu_custom_call.1} parent=1 // pred_fallthru
      _
    // Predicated region
    $region86: #{tpu_custom_call.1} parent=1 // pred_check
      _
    $region87: #{tpu_custom_call.1} parent=1 // pred_check_branch
      %3111 = sbr.rel (0) target = $region89
    $region88: #{tpu_custom_call.1} parent=1 // pred_region
      _
    $region89: #{tpu_custom_call.1} parent=1 // pred_fallthru
      _
    // Predicated region
    $region90: #{tpu_custom_call.1} parent=1 // pred_check
      _
    $region91: #{tpu_custom_call.1} parent=1 // pred_check_branch
      %3113 = sbr.rel (0) target = $region93
    $region92: #{tpu_custom_call.1} parent=1 // pred_region
      _
    $region93: #{tpu_custom_call.1} parent=1 // pred_fallthru
      _
    // Predicated region
    $region94: #{tpu_custom_call.1} parent=1 // pred_check
      _
    $region95: #{tpu_custom_call.1} parent=1 // pred_check_branch
      %3115 = sbr.rel (0) target = $region97
    $region96: #{tpu_custom_call.1} parent=1 // pred_region
      %3117 = dma.done [#allocation4], 16
    $region97: #{tpu_custom_call.1} parent=1 // pred_fallthru
      _
    // Predicated region
    $region98: #{tpu_custom_call.1} parent=1 // pred_check
      _
    $region99: #{tpu_custom_call.1} parent=1 // pred_check_branch
      %3119 = sbr.rel (0) target = $region101
    $region100: #{tpu_custom_call.1} parent=1 // pred_region
      %3121 = dma.done [#allocation6], 16
    $region101: #{tpu_custom_call.1} parent=1 // pred_fallthru
      _
    // Predicated region
    $region102: #{tpu_custom_call.1} parent=1 // pred_check
      _
    $region103: #{tpu_custom_call.1} parent=1 // pred_check_branch
      %3123 = sbr.rel (0) target = $region105
    $region104: #{tpu_custom_call.1} parent=1 // pred_region
      %3125 = dma.done [#allocation6], 128
    $region105: #{tpu_custom_call.1} parent=1 // pred_fallthru
      _
    // Predicated region
    $region106: #{tpu_custom_call.1} parent=1 // pred_check
      _
    $region107: #{tpu_custom_call.1} parent=1 // pred_check_branch
      %3127 = sbr.rel (0) target = $region109
    $region108: #{tpu_custom_call.1} parent=1 // pred_region
      %3129 = dma.done [#allocation9], 512
    $region109: #{tpu_custom_call.1} parent=1 // pred_fallthru
      _
    // Predicated region
    $region110: #{tpu_custom_call.1} parent=1 // pred_check
      _
    $region111: #{tpu_custom_call.1} parent=1 // pred_check_branch
      %3131 = sbr.rel (0) target = $region113
    $region112: #{tpu_custom_call.1} parent=1 // pred_region
      %3133 = dma.done [#allocation9], 16
    $region113: #{tpu_custom_call.1} parent=1 // pred_fallthru
      _
    // Predicated region
    $region114: #{tpu_custom_call.1} parent=1 // pred_check
      _
    $region115: #{tpu_custom_call.1} parent=1 // pred_check_branch
      %3135 = sbr.rel (0) target = $region117
    $region116: #{tpu_custom_call.1} parent=1 // pred_region
      _
    $region117: #{tpu_custom_call.1} parent=1 // pred_fallthru
      _
    // Predicated region
    $region118: #{tpu_custom_call.1} parent=1 // pred_check
      _
    $region119: #{tpu_custom_call.1} parent=1 // pred_check_branch
      %3137 = sbr.rel (0) target = $region121
    $region120: #{tpu_custom_call.1} parent=1 // pred_region
      %3139 = dma.done [#allocation12], 512
    $region121: #{tpu_custom_call.1} parent=1 // pred_fallthru
      _
    %3140 = vsyncpa [#allocation4], 1
    %3141 = vsyncpa [#allocation6], 1
    %3142 = vsyncpa [#allocation9], 1
    %3143 = vsyncpa [#allocation12], 1

</llo_original>
